<compile_context>
chip_gen: v7x
topology: tpu7x:2x2x1
jax: 0.10.0
libtpu: 0.0.40
codegen_flags: <defaults>
</compile_context>

<pallas_src>
import functools

import numpy as np
import jax
import jax.numpy as jnp
from jax.experimental import pallas as pl
from jax.experimental.pallas import tpu as pltpu


def _upsampling_bart_kernel(z_ref, zh_ref, w0_ref, w1_ref, wa_ref, wb_ref,
                            bu_ref, bo_ref, sh_ref, se_ref, so_ref, out_ref,
                            *, n_rows):
    """One (batch, H-tile) block of the fused forward, width on lanes.

    z_ref  : (C,    TH,  W)   NCHW slab of z
    zh_ref : (C,    TH, 2W)   NCHW slab of z_horizontal
    out_ref: (Cout, TH, 2W)   NCHW slab of the output
    Resident constants (constant index_map):
      w0, w1 : (C, C)      taps of the (1,2) conv (torch layout [out, in])
      wa, wb : (Cout, C)   1x1 conv split over the channel concat
      bu     : (C, 1), bo : (Cout, 1)
      sh     : (W, W)      (A @ sh)[:, k] == A[:, k+1] (zero fill at k = W-1)
      se     : (W, 2W)     spreads a (.., W) map to the even output columns
      so     : (W, 2W)     spreads to the odd columns; row W-1 is zero, which
                           realises the zero-pad column added by concat().
    """
    w0 = w0_ref[...]
    w1 = w1_ref[...]
    wa = wa_ref[...]
    wb = wb_ref[...]
    bu = bu_ref[...]
    bo = bo_ref[...]
    sh = sh_ref[...]
    se = se_ref[...]
    so = so_ref[...]
    f32 = jnp.float32

    # H rows are fully independent (the conv kernel is (1, 2): width only), so a
    # short static loop over the H-tile is safe and keeps every matmul 2-D.
    for h in range(n_rows):
        a = jnp.maximum(z_ref[:, h, :], 0.0)                       # ReLU, (C, W)
        t0 = jnp.dot(w0, a, preferred_element_type=f32)            # (C, W)
        t1 = jnp.dot(w1, a, preferred_element_type=f32)            # (C, W)
        conv_even = t0 + t1 + bu                       # col 2k  : (w0+w1)@relu(z[k]) + b
        conv_odd = t0 + jnp.dot(t1, sh, preferred_element_type=f32) + bu
        #                                              # col 2k+1: w0@z[k] + w1@z[k+1] + b
        p_even = jnp.maximum(conv_even, 0.0)           # ReLU before the 1x1 conv
        p_odd = jnp.maximum(conv_odd, 0.0)
        # Interleave even/odd columns (and drop the pad column) with 0/1 spread
        # matmuls -> no lane shuffles, gathers or reshapes inside the kernel.
        p = (jnp.dot(p_even, se, preferred_element_type=f32)
             + jnp.dot(p_odd, so, preferred_element_type=f32))     # (C, 2W)
        zh = jnp.maximum(zh_ref[:, h, :], 0.0)                     # (C, 2W)
        out = (jnp.dot(wa, p, preferred_element_type=f32)
               + jnp.dot(wb, zh, preferred_element_type=f32) + bo)  # (Cout, 2W)
        out_ref[:, h, :] = out.astype(out_ref.dtype)


def _round_up(x, m):
    return ((x + m - 1) // m) * m


def _pick_h_tile(B, H, C, Cout, W, itemsize):
    """H rows per block (multiple of 8, or == H when H < 8).

    Budget uses *physical* (lane-padded) VMEM bytes, counts double buffering and
    the resident constant matrices, and stays well inside v7x's 32 MiB scoped
    VMEM (v5e/v6e have more).  The in-kernel unroll is capped at 32 rows.
    """
    if H <= 8:
        return H
    wp = _round_up(W, 128)
    w2p = _round_up(2 * W, 128)

    def padded_bytes(th):
        z_blk = C * th * wp * itemsize
        zh_blk = C * th * w2p * itemsize
        out_blk = Cout * th * w2p * itemsize
        consts = (_round_up(W, 8) * wp + 2 * _round_up(W, 8) * w2p) * 4  # sh+se+so
        return 2 * (z_blk + zh_blk + out_blk) + 2 * consts              # x2 buffers

    budget = 12 * 1024 * 1024
    th = 8
    cand = 8
    while cand <= min(H, 32):
        if padded_bytes(cand) <= budget:
            th = cand
        cand += 8
    # Keep >= 2 grid steps so both v7x TensorCores get work.
    if B * pl.cdiv(H, th) < 2 and th >= 16:
        th //= 2
    return th


def upsampling_bart_forward(z, z_horizontal, params):
    """Pallas TPU implementation of UpsamplingBart.forward (NCHW in / NCHW out).

    No wrapper-side transposes or reshapes: the kernel reads and writes NCHW
    directly with the width axis on the lane dimension.  Activations may be
    bf16 (halves DMA bytes); all matmuls accumulate in f32.
    """
    B, C, H, W = z.shape
    Bh, Ch, H2, W2 = z_horizontal.shape
    if not (Bh == B and Ch == C and H2 == H and W2 == 2 * W):
        # TODO(synk): general concat() crop/pad (diffY != 0, W2 != 2*W) not implemented.
        raise NotImplementedError(
            "fused kernel supports the canonical UNet skip: H2 == H, W2 == 2*W")

    f32 = jnp.float32
    w_up = params["w_up"].astype(f32)              # (C, C, 1, 2), torch (out, in, kh, kw)
    w0 = w_up[:, :, 0, 0]                          # (C, C)
    w1 = w_up[:, :, 0, 1]
    bu = params["b_up"].astype(f32).reshape(C, 1)
    w2 = params["w_1x1"][:, :, 0, 0].astype(f32)   # (Cout, 2C)
    Cout = w2.shape[0]
    wa, wb = w2[:, :C], w2[:, C:]                  # conv half / skip half of the concat
    bo = params["b_1x1"].astype(f32).reshape(Cout, 1)

    # Constant 0/1 matrices: width shift, even/odd interleave, zero-pad column.
    # Built once host-side; tiny for realistic W.
    # TODO(synk): for very large W these (W, 2W) constants grow as W^2; switch to
    # in-kernel lane ops (pltpu.roll + masked interleave) in that regime.
    sh = jnp.eye(W, k=-1, dtype=f32)               # (A @ sh)[:, k] == A[:, k+1]
    k = jnp.arange(W)
    se = jnp.zeros((W, 2 * W), f32).at[k, 2 * k].set(1.0)
    so = jnp.zeros((W, 2 * W), f32).at[k[:-1], 2 * k[:-1] + 1].set(1.0)

    itemsize = jnp.dtype(z.dtype).itemsize
    TH = _pick_h_tile(B, H, C, Cout, W, itemsize)
    nH = pl.cdiv(H, TH)

    def const(shape):
        return pl.BlockSpec(shape, lambda b, t, _r=len(shape): (0,) * _r)

    kernel = functools.partial(_upsampling_bart_kernel, n_rows=TH)
    out = pl.pallas_call(
        kernel,
        out_shape=jax.ShapeDtypeStruct((B, Cout, H, 2 * W), z.dtype),
        grid=(B, nH),
        in_specs=[
            pl.BlockSpec((None, C, TH, W), lambda b, t: (b, 0, t, 0)),
            pl.BlockSpec((None, C, TH, 2 * W), lambda b, t: (b, 0, t, 0)),
            const((C, C)), const((C, C)),
            const((Cout, C)), const((Cout, C)),
            const((C, 1)), const((Cout, 1)),
            const((W, W)), const((W, 2 * W)), const((W, 2 * W)),
        ],
        out_specs=pl.BlockSpec((None, Cout, TH, 2 * W), lambda b, t: (b, 0, t, 0)),
        compiler_params=pltpu.CompilerParams(
            dimension_semantics=("parallel", "parallel"),
            vmem_limit_bytes=32 * 1024 * 1024),   # safe on v5e/v6e/v7x
    )(z, z_horizontal, w0, w1, wa, wb, bu, bo, sh, se, so)
    # NOTE: decoderResidual(out) is skipped: its result is discarded in the torch forward.
    return out


# --- pure-JAX reference (mirrors the PyTorch math in NCHW) --------------------
def reference_forward(z, z_h, params):
    hi = jax.lax.Precision.HIGHEST
    up = jnp.repeat(z, 2, axis=3)                       # UpsamplingNearest2d((1, 2))
    a = jnp.maximum(up, 0.0)                            # LeakyReLU(0.0)
    w = params["w_up"]
    Wo = 2 * z.shape[3] - 1                             # valid conv width, kernel (1, 2)
    out = (jnp.einsum('bchw,dc->bdhw', a[..., :Wo], w[:, :, 0, 0], precision=hi)
           + jnp.einsum('bchw,dc->bdhw', a[..., 1:Wo + 1], w[:, :, 0, 1], precision=hi)
           + params["b_up"][None, :, None, None])
    H2, W2 = z_h.shape[2], z_h.shape[3]
    diffY = H2 - out.shape[2]
    diffX = W2 - out.shape[3]
    out = jnp.pad(out, ((0, 0), (0, 0),
                        (diffY // 2, diffY - diffY // 2),
                        (diffX // 2, diffX - diffX // 2)))
    cat = jnp.concatenate([out, z_h], axis=1)
    a2 = jnp.maximum(cat, 0.0)
    w2 = params["w_1x1"][:, :, 0, 0]
    return (jnp.einsum('bchw,dc->bdhw', a2, w2, precision=hi)
            + params["b_1x1"][None, :, None, None])


if __name__ == "__main__":
    def make_case(key, B, C_in, C_out, H, W):
        k1, k2, k3, k4, k5, k6 = jax.random.split(key, 6)
        z = jax.random.normal(k1, (B, C_in, H, W), jnp.float32)
        z_h = jax.random.normal(k2, (B, C_in, H, 2 * W), jnp.float32)
        params = {
            "w_up": 0.2 * jax.random.normal(k3, (C_in, C_in, 1, 2), jnp.float32),
            "b_up": 0.1 * jax.random.normal(k4, (C_in,), jnp.float32),
            "w_1x1": 0.2 * jax.random.normal(k5, (C_out, 2 * C_in, 1, 1), jnp.float32),
            "b_1x1": 0.1 * jax.random.normal(k6, (C_out,), jnp.float32),
        }
        return z, z_h, params

    def check(z, z_h, params, expect_shape):
        out = jax.block_until_ready(upsampling_bart_forward(z, z_h, params))
        out = np.asarray(out)
        ref = np.asarray(reference_forward(z, z_h, params))
        assert out.shape == expect_shape, out.shape
        assert np.isfinite(out).all(), "non-finite values in kernel output"
        err = float(np.max(np.abs(out - ref)))
        # 1e-2 leaves room for DEFAULT-precision f32 MXU matmuls on real HW;
        # interpret / CPU runs are exact f32 and land around 1e-6.
        assert err < 1e-2, err

    key = jax.random.PRNGKey(0)
    k_small, k_big = jax.random.split(key)

    # Small canonical case: H < 8 -> single full-H block per batch element.
    z, z_h, params = make_case(k_small, B=2, C_in=4, C_out=8, H=4, W=8)
    check(z, z_h, params, (2, 8, 4, 16))

    # Bigger case: lane-dense width (2W = 160) and H not a multiple of the
    # H-tile, exercising the partial last block (rows are independent, so the
    # out-of-bounds rows only ever land in discarded out-of-bounds outputs).
    z, z_h, params = make_case(k_big, B=2, C_in=4, C_out=8, H=20, W=80)
    check(z, z_h, params, (2, 8, 20, 160))

    print("KERNEL_OK")
</pallas_src>

<mosaic_0001>
module attributes {stable_mosaic.version = 11 : i64} {
  func.func @_upsampling_bart_kernel(%arg0: i32, %arg1: i32, %arg2: memref<1x4x4x8xf32, #tpu.memory_space<vmem>>, %arg3: memref<1x4x4x16xf32, #tpu.memory_space<vmem>>, %arg4: memref<4x4xf32, #tpu.memory_space<vmem>>, %arg5: memref<4x4xf32, #tpu.memory_space<vmem>>, %arg6: memref<8x4xf32, #tpu.memory_space<vmem>>, %arg7: memref<8x4xf32, #tpu.memory_space<vmem>>, %arg8: memref<4x1xf32, #tpu.memory_space<vmem>>, %arg9: memref<8x1xf32, #tpu.memory_space<vmem>>, %arg10: memref<8x8xf32, #tpu.memory_space<vmem>>, %arg11: memref<8x16xf32, #tpu.memory_space<vmem>>, %arg12: memref<8x16xf32, #tpu.memory_space<vmem>>, %arg13: memref<1x8x4x16xf32, #tpu.memory_space<vmem>>) attributes {dimension_semantics = [#tpu.dimension_semantics<parallel>, #tpu.dimension_semantics<parallel>], iteration_bounds = array<i64: 2, 1>, scalar_prefetch = 0 : i64, scratch_operands = 0 : i64, tpu.core_type = #tpu.core_type<tc>, window_params = [{transform_indices = @transform_0, window_bounds = array<i64: 1, 4, 4, 8>}, {transform_indices = @transform_1, window_bounds = array<i64: 1, 4, 4, 16>}, {pipeline_mode = #tpu.pipeline_mode<synchronous>, transform_indices = @transform_2, window_bounds = array<i64: 4, 4>}, {pipeline_mode = #tpu.pipeline_mode<synchronous>, transform_indices = @transform_3, window_bounds = array<i64: 4, 4>}, {pipeline_mode = #tpu.pipeline_mode<synchronous>, transform_indices = @transform_4, window_bounds = array<i64: 8, 4>}, {pipeline_mode = #tpu.pipeline_mode<synchronous>, transform_indices = @transform_5, window_bounds = array<i64: 8, 4>}, {pipeline_mode = #tpu.pipeline_mode<synchronous>, transform_indices = @transform_6, window_bounds = array<i64: 4, 1>}, {pipeline_mode = #tpu.pipeline_mode<synchronous>, transform_indices = @transform_7, window_bounds = array<i64: 8, 1>}, {pipeline_mode = #tpu.pipeline_mode<synchronous>, transform_indices = @transform_8, window_bounds = array<i64: 8, 8>}, {pipeline_mode = #tpu.pipeline_mode<synchronous>, transform_indices = @transform_9, window_bounds = array<i64: 8, 16>}, {pipeline_mode = #tpu.pipeline_mode<synchronous>, transform_indices = @transform_10, window_bounds = array<i64: 8, 16>}, {transform_indices = @transform_11, window_bounds = array<i64: 1, 8, 4, 16>}]} {
    %c0 = arith.constant 0 : index
    %c0_0 = arith.constant 0 : index
    %0 = vector.load %arg4[%c0, %c0_0] : memref<4x4xf32, #tpu.memory_space<vmem>>, vector<4x4xf32>
    %c0_1 = arith.constant 0 : index
    %c0_2 = arith.constant 0 : index
    %1 = vector.load %arg5[%c0_1, %c0_2] : memref<4x4xf32, #tpu.memory_space<vmem>>, vector<4x4xf32>
    %c0_3 = arith.constant 0 : index
    %c0_4 = arith.constant 0 : index
    %2 = vector.load %arg6[%c0_3, %c0_4] : memref<8x4xf32, #tpu.memory_space<vmem>>, vector<8x4xf32>
    %c0_5 = arith.constant 0 : index
    %c0_6 = arith.constant 0 : index
    %3 = vector.load %arg7[%c0_5, %c0_6] : memref<8x4xf32, #tpu.memory_space<vmem>>, vector<8x4xf32>
    %c0_7 = arith.constant 0 : index
    %c0_8 = arith.constant 0 : index
    %4 = vector.load %arg8[%c0_7, %c0_8] : memref<4x1xf32, #tpu.memory_space<vmem>>, vector<4x1xf32>
    %c0_9 = arith.constant 0 : index
    %c0_10 = arith.constant 0 : index
    %5 = vector.load %arg9[%c0_9, %c0_10] : memref<8x1xf32, #tpu.memory_space<vmem>>, vector<8x1xf32>
    %c0_11 = arith.constant 0 : index
    %c0_12 = arith.constant 0 : index
    %6 = vector.load %arg10[%c0_11, %c0_12] : memref<8x8xf32, #tpu.memory_space<vmem>>, vector<8x8xf32>
    %c0_13 = arith.constant 0 : index
    %c0_14 = arith.constant 0 : index
    %7 = vector.load %arg11[%c0_13, %c0_14] : memref<8x16xf32, #tpu.memory_space<vmem>>, vector<8x16xf32>
    %c0_15 = arith.constant 0 : index
    %c0_16 = arith.constant 0 : index
    %8 = vector.load %arg12[%c0_15, %c0_16] : memref<8x16xf32, #tpu.memory_space<vmem>>, vector<8x16xf32>
    %c0_17 = arith.constant 0 : index
    %c0_18 = arith.constant 0 : index
    %c0_19 = arith.constant 0 : index
    %c0_20 = arith.constant 0 : index
    %9 = vector.load %arg2[%c0_17, %c0_18, %c0_19, %c0_20] : memref<1x4x4x8xf32, #tpu.memory_space<vmem>>, vector<1x4x1x8xf32>
    %10 = vector.shape_cast %9 : vector<1x4x1x8xf32> to vector<4x8xf32>
    %cst = arith.constant 0.000000e+00 : f32
    %11 = vector.broadcast %cst : f32 to vector<4x8xf32>
    %12 = arith.maximumf %10, %11 : vector<4x8xf32>
    %cst_21 = arith.constant dense<0.000000e+00> : vector<4x8xf32>
    %13 = tpu.matmul %0, %12, %cst_21 {dimension_numbers = #tpu.dot_dimension_numbers<[1], [0], [0], [1], [0, 0, 1, 1], [], []>} : vector<4x4xf32>, vector<4x8xf32>, vector<4x8xf32> -> vector<4x8xf32>
    %cst_22 = arith.constant dense<0.000000e+00> : vector<4x8xf32>
    %14 = tpu.matmul %1, %12, %cst_22 {dimension_numbers = #tpu.dot_dimension_numbers<[1], [0], [0], [1], [0, 0, 1, 1], [], []>} : vector<4x4xf32>, vector<4x8xf32>, vector<4x8xf32> -> vector<4x8xf32>
    %15 = arith.addf %13, %14 : vector<4x8xf32>
    %16 = vector.broadcast %4 : vector<4x1xf32> to vector<4x8xf32>
    %17 = arith.addf %15, %16 : vector<4x8xf32>
    %cst_23 = arith.constant dense<0.000000e+00> : vector<4x8xf32>
    %18 = tpu.matmul %14, %6, %cst_23 {dimension_numbers = #tpu.dot_dimension_numbers<[1], [0], [0], [1], [0, 0, 1, 1], [], []>} : vector<4x8xf32>, vector<8x8xf32>, vector<4x8xf32> -> vector<4x8xf32>
    %19 = arith.addf %13, %18 : vector<4x8xf32>
    %20 = vector.broadcast %4 : vector<4x1xf32> to vector<4x8xf32>
    %21 = arith.addf %19, %20 : vector<4x8xf32>
    %cst_24 = arith.constant 0.000000e+00 : f32
    %22 = vector.broadcast %cst_24 : f32 to vector<4x8xf32>
    %23 = arith.maximumf %17, %22 : vector<4x8xf32>
    %cst_25 = arith.constant 0.000000e+00 : f32
    %24 = vector.broadcast %cst_25 : f32 to vector<4x8xf32>
    %25 = arith.maximumf %21, %24 : vector<4x8xf32>
    %cst_26 = arith.constant dense<0.000000e+00> : vector<4x16xf32>
    %26 = tpu.matmul %23, %7, %cst_26 {dimension_numbers = #tpu.dot_dimension_numbers<[1], [0], [0], [1], [0, 0, 1, 1], [], []>} : vector<4x8xf32>, vector<8x16xf32>, vector<4x16xf32> -> vector<4x16xf32>
    %cst_27 = arith.constant dense<0.000000e+00> : vector<4x16xf32>
    %27 = tpu.matmul %25, %8, %cst_27 {dimension_numbers = #tpu.dot_dimension_numbers<[1], [0], [0], [1], [0, 0, 1, 1], [], []>} : vector<4x8xf32>, vector<8x16xf32>, vector<4x16xf32> -> vector<4x16xf32>
    %28 = arith.addf %26, %27 : vector<4x16xf32>
    %c0_28 = arith.constant 0 : index
    %c0_29 = arith.constant 0 : index
    %c0_30 = arith.constant 0 : index
    %c0_31 = arith.constant 0 : index
    %29 = vector.load %arg3[%c0_28, %c0_29, %c0_30, %c0_31] : memref<1x4x4x16xf32, #tpu.memory_space<vmem>>, vector<1x4x1x16xf32>
    %30 = vector.shape_cast %29 : vector<1x4x1x16xf32> to vector<4x16xf32>
    %cst_32 = arith.constant 0.000000e+00 : f32
    %31 = vector.broadcast %cst_32 : f32 to vector<4x16xf32>
    %32 = arith.maximumf %30, %31 : vector<4x16xf32>
    %cst_33 = arith.constant dense<0.000000e+00> : vector<8x16xf32>
    %33 = tpu.matmul %2, %28, %cst_33 {dimension_numbers = #tpu.dot_dimension_numbers<[1], [0], [0], [1], [0, 0, 1, 1], [], []>} : vector<8x4xf32>, vector<4x16xf32>, vector<8x16xf32> -> vector<8x16xf32>
    %cst_34 = arith.constant dense<0.000000e+00> : vector<8x16xf32>
    %34 = tpu.matmul %3, %32, %cst_34 {dimension_numbers = #tpu.dot_dimension_numbers<[1], [0], [0], [1], [0, 0, 1, 1], [], []>} : vector<8x4xf32>, vector<4x16xf32>, vector<8x16xf32> -> vector<8x16xf32>
    %35 = arith.addf %33, %34 : vector<8x16xf32>
    %36 = vector.broadcast %5 : vector<8x1xf32> to vector<8x16xf32>
    %37 = arith.addf %35, %36 : vector<8x16xf32>
    %c0_35 = arith.constant 0 : index
    %c0_36 = arith.constant 0 : index
    %c0_37 = arith.constant 0 : index
    %c0_38 = arith.constant 0 : index
    %38 = vector.load %arg13[%c0_35, %c0_36, %c0_37, %c0_38] : memref<1x8x4x16xf32, #tpu.memory_space<vmem>>, vector<1x8x1x16xf32>
    %39 = vector.shape_cast %38 : vector<1x8x1x16xf32> to vector<8x16xf32>
    %40 = vector.shape_cast %37 : vector<8x16xf32> to vector<1x8x1x16xf32>
    tpu.vector_store %arg13[%c0_35, %c0_36, %c0_37, %c0_38], %40 {strides = array<i32>} : memref<1x8x4x16xf32, #tpu.memory_space<vmem>>, vector<1x8x1x16xf32>,
    %c0_39 = arith.constant 0 : index
    %c0_40 = arith.constant 0 : index
    %c1 = arith.constant 1 : index
    %c0_41 = arith.constant 0 : index
    %41 = vector.load %arg2[%c0_39, %c0_40, %c1, %c0_41] : memref<1x4x4x8xf32, #tpu.memory_space<vmem>>, vector<1x4x1x8xf32>
    %42 = vector.shape_cast %41 : vector<1x4x1x8xf32> to vector<4x8xf32>
    %cst_42 = arith.constant 0.000000e+00 : f32
    %43 = vector.broadcast %cst_42 : f32 to vector<4x8xf32>
    %44 = arith.maximumf %42, %43 : vector<4x8xf32>
    %cst_43 = arith.constant dense<0.000000e+00> : vector<4x8xf32>
    %45 = tpu.matmul %0, %44, %cst_43 {dimension_numbers = #tpu.dot_dimension_numbers<[1], [0], [0], [1], [0, 0, 1, 1], [], []>} : vector<4x4xf32>, vector<4x8xf32>, vector<4x8xf32> -> vector<4x8xf32>
    %cst_44 = arith.constant dense<0.000000e+00> : vector<4x8xf32>
    %46 = tpu.matmul %1, %44, %cst_44 {dimension_numbers = #tpu.dot_dimension_numbers<[1], [0], [0], [1], [0, 0, 1, 1], [], []>} : vector<4x4xf32>, vector<4x8xf32>, vector<4x8xf32> -> vector<4x8xf32>
    %47 = arith.addf %45, %46 : vector<4x8xf32>
    %48 = vector.broadcast %4 : vector<4x1xf32> to vector<4x8xf32>
    %49 = arith.addf %47, %48 : vector<4x8xf32>
    %cst_45 = arith.constant dense<0.000000e+00> : vector<4x8xf32>
    %50 = tpu.matmul %46, %6, %cst_45 {dimension_numbers = #tpu.dot_dimension_numbers<[1], [0], [0], [1], [0, 0, 1, 1], [], []>} : vector<4x8xf32>, vector<8x8xf32>, vector<4x8xf32> -> vector<4x8xf32>
    %51 = arith.addf %45, %50 : vector<4x8xf32>
    %52 = vector.broadcast %4 : vector<4x1xf32> to vector<4x8xf32>
    %53 = arith.addf %51, %52 : vector<4x8xf32>
    %cst_46 = arith.constant 0.000000e+00 : f32
    %54 = vector.broadcast %cst_46 : f32 to vector<4x8xf32>
    %55 = arith.maximumf %49, %54 : vector<4x8xf32>
    %cst_47 = arith.constant 0.000000e+00 : f32
    %56 = vector.broadcast %cst_47 : f32 to vector<4x8xf32>
    %57 = arith.maximumf %53, %56 : vector<4x8xf32>
    %cst_48 = arith.constant dense<0.000000e+00> : vector<4x16xf32>
    %58 = tpu.matmul %55, %7, %cst_48 {dimension_numbers = #tpu.dot_dimension_numbers<[1], [0], [0], [1], [0, 0, 1, 1], [], []>} : vector<4x8xf32>, vector<8x16xf32>, vector<4x16xf32> -> vector<4x16xf32>
    %cst_49 = arith.constant dense<0.000000e+00> : vector<4x16xf32>
    %59 = tpu.matmul %57, %8, %cst_49 {dimension_numbers = #tpu.dot_dimension_numbers<[1], [0], [0], [1], [0, 0, 1, 1], [], []>} : vector<4x8xf32>, vector<8x16xf32>, vector<4x16xf32> -> vector<4x16xf32>
    %60 = arith.addf %58, %59 : vector<4x16xf32>
    %c0_50 = arith.constant 0 : index
    %c0_51 = arith.constant 0 : index
    %c1_52 = arith.constant 1 : index
    %c0_53 = arith.constant 0 : index
    %61 = vector.load %arg3[%c0_50, %c0_51, %c1_52, %c0_53] : memref<1x4x4x16xf32, #tpu.memory_space<vmem>>, vector<1x4x1x16xf32>
    %62 = vector.shape_cast %61 : vector<1x4x1x16xf32> to vector<4x16xf32>
    %cst_54 = arith.constant 0.000000e+00 : f32
    %63 = vector.broadcast %cst_54 : f32 to vector<4x16xf32>
    %64 = arith.maximumf %62, %63 : vector<4x16xf32>
    %cst_55 = arith.constant dense<0.000000e+00> : vector<8x16xf32>
    %65 = tpu.matmul %2, %60, %cst_55 {dimension_numbers = #tpu.dot_dimension_numbers<[1], [0], [0], [1], [0, 0, 1, 1], [], []>} : vector<8x4xf32>, vector<4x16xf32>, vector<8x16xf32> -> vector<8x16xf32>
    %cst_56 = arith.constant dense<0.000000e+00> : vector<8x16xf32>
    %66 = tpu.matmul %3, %64, %cst_56 {dimension_numbers = #tpu.dot_dimension_numbers<[1], [0], [0], [1], [0, 0, 1, 1], [], []>} : vector<8x4xf32>, vector<4x16xf32>, vector<8x16xf32> -> vector<8x16xf32>
    %67 = arith.addf %65, %66 : vector<8x16xf32>
    %68 = vector.broadcast %5 : vector<8x1xf32> to vector<8x16xf32>
    %69 = arith.addf %67, %68 : vector<8x16xf32>
    %c0_57 = arith.constant 0 : index
    %c0_58 = arith.constant 0 : index
    %c1_59 = arith.constant 1 : index
    %c0_60 = arith.constant 0 : index
    %70 = vector.load %arg13[%c0_57, %c0_58, %c1_59, %c0_60] : memref<1x8x4x16xf32, #tpu.memory_space<vmem>>, vector<1x8x1x16xf32>
    %71 = vector.shape_cast %70 : vector<1x8x1x16xf32> to vector<8x16xf32>
    %72 = vector.shape_cast %69 : vector<8x16xf32> to vector<1x8x1x16xf32>
    tpu.vector_store %arg13[%c0_57, %c0_58, %c1_59, %c0_60], %72 {strides = array<i32>} : memref<1x8x4x16xf32, #tpu.memory_space<vmem>>, vector<1x8x1x16xf32>,
    %c0_61 = arith.constant 0 : index
    %c0_62 = arith.constant 0 : index
    %c2 = arith.constant 2 : index
    %c0_63 = arith.constant 0 : index
    %73 = vector.load %arg2[%c0_61, %c0_62, %c2, %c0_63] : memref<1x4x4x8xf32, #tpu.memory_space<vmem>>, vector<1x4x1x8xf32>
    %74 = vector.shape_cast %73 : vector<1x4x1x8xf32> to vector<4x8xf32>
    %cst_64 = arith.constant 0.000000e+00 : f32
    %75 = vector.broadcast %cst_64 : f32 to vector<4x8xf32>
    %76 = arith.maximumf %74, %75 : vector<4x8xf32>
    %cst_65 = arith.constant dense<0.000000e+00> : vector<4x8xf32>
    %77 = tpu.matmul %0, %76, %cst_65 {dimension_numbers = #tpu.dot_dimension_numbers<[1], [0], [0], [1], [0, 0, 1, 1], [], []>} : vector<4x4xf32>, vector<4x8xf32>, vector<4x8xf32> -> vector<4x8xf32>
    %cst_66 = arith.constant dense<0.000000e+00> : vector<4x8xf32>
    %78 = tpu.matmul %1, %76, %cst_66 {dimension_numbers = #tpu.dot_dimension_numbers<[1], [0], [0], [1], [0, 0, 1, 1], [], []>} : vector<4x4xf32>, vector<4x8xf32>, vector<4x8xf32> -> vector<4x8xf32>
    %79 = arith.addf %77, %78 : vector<4x8xf32>
    %80 = vector.broadcast %4 : vector<4x1xf32> to vector<4x8xf32>
    %81 = arith.addf %79, %80 : vector<4x8xf32>
    %cst_67 = arith.constant dense<0.000000e+00> : vector<4x8xf32>
    %82 = tpu.matmul %78, %6, %cst_67 {dimension_numbers = #tpu.dot_dimension_numbers<[1], [0], [0], [1], [0, 0, 1, 1], [], []>} : vector<4x8xf32>, vector<8x8xf32>, vector<4x8xf32> -> vector<4x8xf32>
    %83 = arith.addf %77, %82 : vector<4x8xf32>
    %84 = vector.broadcast %4 : vector<4x1xf32> to vector<4x8xf32>
    %85 = arith.addf %83, %84 : vector<4x8xf32>
    %cst_68 = arith.constant 0.000000e+00 : f32
    %86 = vector.broadcast %cst_68 : f32 to vector<4x8xf32>
    %87 = arith.maximumf %81, %86 : vector<4x8xf32>
    %cst_69 = arith.constant 0.000000e+00 : f32
    %88 = vector.broadcast %cst_69 : f32 to vector<4x8xf32>
    %89 = arith.maximumf %85, %88 : vector<4x8xf32>
    %cst_70 = arith.constant dense<0.000000e+00> : vector<4x16xf32>
    %90 = tpu.matmul %87, %7, %cst_70 {dimension_numbers = #tpu.dot_dimension_numbers<[1], [0], [0], [1], [0, 0, 1, 1], [], []>} : vector<4x8xf32>, vector<8x16xf32>, vector<4x16xf32> -> vector<4x16xf32>
    %cst_71 = arith.constant dense<0.000000e+00> : vector<4x16xf32>
    %91 = tpu.matmul %89, %8, %cst_71 {dimension_numbers = #tpu.dot_dimension_numbers<[1], [0], [0], [1], [0, 0, 1, 1], [], []>} : vector<4x8xf32>, vector<8x16xf32>, vector<4x16xf32> -> vector<4x16xf32>
    %92 = arith.addf %90, %91 : vector<4x16xf32>
    %c0_72 = arith.constant 0 : index
    %c0_73 = arith.constant 0 : index
    %c2_74 = arith.constant 2 : index
    %c0_75 = arith.constant 0 : index
    %93 = vector.load %arg3[%c0_72, %c0_73, %c2_74, %c0_75] : memref<1x4x4x16xf32, #tpu.memory_space<vmem>>, vector<1x4x1x16xf32>
    %94 = vector.shape_cast %93 : vector<1x4x1x16xf32> to vector<4x16xf32>
    %cst_76 = arith.constant 0.000000e+00 : f32
    %95 = vector.broadcast %cst_76 : f32 to vector<4x16xf32>
    %96 = arith.maximumf %94, %95 : vector<4x16xf32>
    %cst_77 = arith.constant dense<0.000000e+00> : vector<8x16xf32>
    %97 = tpu.matmul %2, %92, %cst_77 {dimension_numbers = #tpu.dot_dimension_numbers<[1], [0], [0], [1], [0, 0, 1, 1], [], []>} : vector<8x4xf32>, vector<4x16xf32>, vector<8x16xf32> -> vector<8x16xf32>
    %cst_78 = arith.constant dense<0.000000e+00> : vector<8x16xf32>
    %98 = tpu.matmul %3, %96, %cst_78 {dimension_numbers = #tpu.dot_dimension_numbers<[1], [0], [0], [1], [0, 0, 1, 1], [], []>} : vector<8x4xf32>, vector<4x16xf32>, vector<8x16xf32> -> vector<8x16xf32>
    %99 = arith.addf %97, %98 : vector<8x16xf32>
    %100 = vector.broadcast %5 : vector<8x1xf32> to vector<8x16xf32>
    %101 = arith.addf %99, %100 : vector<8x16xf32>
    %c0_79 = arith.constant 0 : index
    %c0_80 = arith.constant 0 : index
    %c2_81 = arith.constant 2 : index
    %c0_82 = arith.constant 0 : index
    %102 = vector.load %arg13[%c0_79, %c0_80, %c2_81, %c0_82] : memref<1x8x4x16xf32, #tpu.memory_space<vmem>>, vector<1x8x1x16xf32>
    %103 = vector.shape_cast %102 : vector<1x8x1x16xf32> to vector<8x16xf32>
    %104 = vector.shape_cast %101 : vector<8x16xf32> to vector<1x8x1x16xf32>
    tpu.vector_store %arg13[%c0_79, %c0_80, %c2_81, %c0_82], %104 {strides = array<i32>} : memref<1x8x4x16xf32, #tpu.memory_space<vmem>>, vector<1x8x1x16xf32>,
    %c0_83 = arith.constant 0 : index
    %c0_84 = arith.constant 0 : index
    %c3 = arith.constant 3 : index
    %c0_85 = arith.constant 0 : index
    %105 = vector.load %arg2[%c0_83, %c0_84, %c3, %c0_85] : memref<1x4x4x8xf32, #tpu.memory_space<vmem>>, vector<1x4x1x8xf32>
    %106 = vector.shape_cast %105 : vector<1x4x1x8xf32> to vector<4x8xf32>
    %cst_86 = arith.constant 0.000000e+00 : f32
    %107 = vector.broadcast %cst_86 : f32 to vector<4x8xf32>
    %108 = arith.maximumf %106, %107 : vector<4x8xf32>
    %cst_87 = arith.constant dense<0.000000e+00> : vector<4x8xf32>
    %109 = tpu.matmul %0, %108, %cst_87 {dimension_numbers = #tpu.dot_dimension_numbers<[1], [0], [0], [1], [0, 0, 1, 1], [], []>} : vector<4x4xf32>, vector<4x8xf32>, vector<4x8xf32> -> vector<4x8xf32>
    %cst_88 = arith.constant dense<0.000000e+00> : vector<4x8xf32>
    %110 = tpu.matmul %1, %108, %cst_88 {dimension_numbers = #tpu.dot_dimension_numbers<[1], [0], [0], [1], [0, 0, 1, 1], [], []>} : vector<4x4xf32>, vector<4x8xf32>, vector<4x8xf32> -> vector<4x8xf32>
    %111 = arith.addf %109, %110 : vector<4x8xf32>
    %112 = vector.broadcast %4 : vector<4x1xf32> to vector<4x8xf32>
    %113 = arith.addf %111, %112 : vector<4x8xf32>
    %cst_89 = arith.constant dense<0.000000e+00> : vector<4x8xf32>
    %114 = tpu.matmul %110, %6, %cst_89 {dimension_numbers = #tpu.dot_dimension_numbers<[1], [0], [0], [1], [0, 0, 1, 1], [], []>} : vector<4x8xf32>, vector<8x8xf32>, vector<4x8xf32> -> vector<4x8xf32>
    %115 = arith.addf %109, %114 : vector<4x8xf32>
    %116 = vector.broadcast %4 : vector<4x1xf32> to vector<4x8xf32>
    %117 = arith.addf %115, %116 : vector<4x8xf32>
    %cst_90 = arith.constant 0.000000e+00 : f32
    %118 = vector.broadcast %cst_90 : f32 to vector<4x8xf32>
    %119 = arith.maximumf %113, %118 : vector<4x8xf32>
    %cst_91 = arith.constant 0.000000e+00 : f32
    %120 = vector.broadcast %cst_91 : f32 to vector<4x8xf32>
    %121 = arith.maximumf %117, %120 : vector<4x8xf32>
    %cst_92 = arith.constant dense<0.000000e+00> : vector<4x16xf32>
    %122 = tpu.matmul %119, %7, %cst_92 {dimension_numbers = #tpu.dot_dimension_numbers<[1], [0], [0], [1], [0, 0, 1, 1], [], []>} : vector<4x8xf32>, vector<8x16xf32>, vector<4x16xf32> -> vector<4x16xf32>
    %cst_93 = arith.constant dense<0.000000e+00> : vector<4x16xf32>
    %123 = tpu.matmul %121, %8, %cst_93 {dimension_numbers = #tpu.dot_dimension_numbers<[1], [0], [0], [1], [0, 0, 1, 1], [], []>} : vector<4x8xf32>, vector<8x16xf32>, vector<4x16xf32> -> vector<4x16xf32>
    %124 = arith.addf %122, %123 : vector<4x16xf32>
    %c0_94 = arith.constant 0 : index
    %c0_95 = arith.constant 0 : index
    %c3_96 = arith.constant 3 : index
    %c0_97 = arith.constant 0 : index
    %125 = vector.load %arg3[%c0_94, %c0_95, %c3_96, %c0_97] : memref<1x4x4x16xf32, #tpu.memory_space<vmem>>, vector<1x4x1x16xf32>
    %126 = vector.shape_cast %125 : vector<1x4x1x16xf32> to vector<4x16xf32>
    %cst_98 = arith.constant 0.000000e+00 : f32
    %127 = vector.broadcast %cst_98 : f32 to vector<4x16xf32>
    %128 = arith.maximumf %126, %127 : vector<4x16xf32>
    %cst_99 = arith.constant dense<0.000000e+00> : vector<8x16xf32>
    %129 = tpu.matmul %2, %124, %cst_99 {dimension_numbers = #tpu.dot_dimension_numbers<[1], [0], [0], [1], [0, 0, 1, 1], [], []>} : vector<8x4xf32>, vector<4x16xf32>, vector<8x16xf32> -> vector<8x16xf32>
    %cst_100 = arith.constant dense<0.000000e+00> : vector<8x16xf32>
    %130 = tpu.matmul %3, %128, %cst_100 {dimension_numbers = #tpu.dot_dimension_numbers<[1], [0], [0], [1], [0, 0, 1, 1], [], []>} : vector<8x4xf32>, vector<4x16xf32>, vector<8x16xf32> -> vector<8x16xf32>
    %131 = arith.addf %129, %130 : vector<8x16xf32>
    %132 = vector.broadcast %5 : vector<8x1xf32> to vector<8x16xf32>
    %133 = arith.addf %131, %132 : vector<8x16xf32>
    %c0_101 = arith.constant 0 : index
    %c0_102 = arith.constant 0 : index
    %c3_103 = arith.constant 3 : index
    %c0_104 = arith.constant 0 : index
    %134 = vector.load %arg13[%c0_101, %c0_102, %c3_103, %c0_104] : memref<1x8x4x16xf32, #tpu.memory_space<vmem>>, vector<1x8x1x16xf32>
    %135 = vector.shape_cast %134 : vector<1x8x1x16xf32> to vector<8x16xf32>
    %136 = vector.shape_cast %133 : vector<8x16xf32> to vector<1x8x1x16xf32>
    tpu.vector_store %arg13[%c0_101, %c0_102, %c3_103, %c0_104], %136 {strides = array<i32>} : memref<1x8x4x16xf32, #tpu.memory_space<vmem>>, vector<1x8x1x16xf32>,
    return
  }
  func.func @transform_0(%arg0: i32, %arg1: i32) -> (i32, i32, i32, i32) {
    %c0_i32 = arith.constant 0 : i32
    %c0_i32_0 = arith.constant 0 : i32
    %c0_i32_1 = arith.constant 0 : i32
    return %arg0, %c0_i32, %arg1, %c0_i32_0 : i32, i32, i32, i32
  }
  func.func @transform_1(%arg0: i32, %arg1: i32) -> (i32, i32, i32, i32) {
    %c0_i32 = arith.constant 0 : i32
    %c0_i32_0 = arith.constant 0 : i32
    %c0_i32_1 = arith.constant 0 : i32
    return %arg0, %c0_i32, %arg1, %c0_i32_0 : i32, i32, i32, i32
  }
  func.func @transform_2(%arg0: i32, %arg1: i32) -> (i32, i32) {
    %c0_i32 = arith.constant 0 : i32
    %c0_i32_0 = arith.constant 0 : i32
    %c0_i32_1 = arith.constant 0 : i32
    return %c0_i32, %c0_i32_0 : i32, i32
  }
  func.func @transform_3(%arg0: i32, %arg1: i32) -> (i32, i32) {
    %c0_i32 = arith.constant 0 : i32
    %c0_i32_0 = arith.constant 0 : i32
    %c0_i32_1 = arith.constant 0 : i32
    return %c0_i32, %c0_i32_0 : i32, i32
  }
  func.func @transform_4(%arg0: i32, %arg1: i32) -> (i32, i32) {
    %c0_i32 = arith.constant 0 : i32
    %c0_i32_0 = arith.constant 0 : i32
    %c0_i32_1 = arith.constant 0 : i32
    return %c0_i32, %c0_i32_0 : i32, i32
  }
  func.func @transform_5(%arg0: i32, %arg1: i32) -> (i32, i32) {
    %c0_i32 = arith.constant 0 : i32
    %c0_i32_0 = arith.constant 0 : i32
    %c0_i32_1 = arith.constant 0 : i32
    return %c0_i32, %c0_i32_0 : i32, i32
  }
  func.func @transform_6(%arg0: i32, %arg1: i32) -> (i32, i32) {
    %c0_i32 = arith.constant 0 : i32
    %c0_i32_0 = arith.constant 0 : i32
    %c0_i32_1 = arith.constant 0 : i32
    return %c0_i32, %c0_i32_0 : i32, i32
  }
  func.func @transform_7(%arg0: i32, %arg1: i32) -> (i32, i32) {
    %c0_i32 = arith.constant 0 : i32
    %c0_i32_0 = arith.constant 0 : i32
    %c0_i32_1 = arith.constant 0 : i32
    return %c0_i32, %c0_i32_0 : i32, i32
  }
  func.func @transform_8(%arg0: i32, %arg1: i32) -> (i32, i32) {
    %c0_i32 = arith.constant 0 : i32
    %c0_i32_0 = arith.constant 0 : i32
    %c0_i32_1 = arith.constant 0 : i32
    return %c0_i32, %c0_i32_0 : i32, i32
  }
  func.func @transform_9(%arg0: i32, %arg1: i32) -> (i32, i32) {
    %c0_i32 = arith.constant 0 : i32
    %c0_i32_0 = arith.constant 0 : i32
    %c0_i32_1 = arith.constant 0 : i32
    return %c0_i32, %c0_i32_0 : i32, i32
  }
  func.func @transform_10(%arg0: i32, %arg1: i32) -> (i32, i32) {
    %c0_i32 = arith.constant 0 : i32
    %c0_i32_0 = arith.constant 0 : i32
    %c0_i32_1 = arith.constant 0 : i32
    return %c0_i32, %c0_i32_0 : i32, i32
  }
  func.func @transform_11(%arg0: i32, %arg1: i32) -> (i32, i32, i32, i32) {
    %c0_i32 = arith.constant 0 : i32
    %c0_i32_0 = arith.constant 0 : i32
    %c0_i32_1 = arith.constant 0 : i32
    return %arg0, %c0_i32, %arg1, %c0_i32_0 : i32, i32, i32, i32
  }
}

</mosaic_0001>

<llo_original>
// kernel: tpu_custom_call.1
$region0: #{tpu_custom_call.1}
  #allocation0 [shape = 'u32[]', space=smem, size = 0x4, offset = 0x4, fixed_abs, tag = 'smem constant byte address 0x4 - core index']
  #allocation1 [shape = 'u32[144,128]{1,0:T(1,128)}', space=vmem, size = 0x12000, scoped, tag = 'internal scratch']
  %s0 = inlined_call_operand.vmem [shape: f32[2,4,4,8], index: 0, kind: input, shape index: {}]
  %s1 = inlined_call_operand.hbm [shape: f32[2,4,4,16], index: 1, kind: input, shape index: {}]
  %s2 = inlined_call_operand.hbm [shape: f32[4,4], index: 2, kind: input, shape index: {}]
  %s3 = inlined_call_operand.hbm [shape: f32[4,4], index: 3, kind: input, shape index: {}]
  %s4 = inlined_call_operand.vmem [shape: f32[8,4], index: 4, kind: input, shape index: {}]
  %s5 = inlined_call_operand.vmem [shape: f32[8,4], index: 5, kind: input, shape index: {}]
  %s6 = inlined_call_operand.vmem [shape: f32[4,1], index: 6, kind: input, shape index: {}]
  %s7 = inlined_call_operand.vmem [shape: f32[8,1], index: 7, kind: input, shape index: {}]
  %s8 = inlined_call_operand.vmem [shape: f32[8,8], index: 8, kind: input, shape index: {}]
  %s9 = inlined_call_operand.vmem [shape: f32[8,16], index: 9, kind: input, shape index: {}]
  %s10 = inlined_call_operand.vmem [shape: f32[8,16], index: 10, kind: input, shape index: {}]
  %s11 = inlined_call_operand.hbm [shape: f32[2,8,4,16], index: 11, kind: output, shape index: {}]
  %s12 = sld [smem:[#allocation0]]
  $region89: #{tpu_custom_call.1} parent=0
    _
  %s14 = ssub.s32 1, %s12
  %s15 = scalar_select 0, %s14, %s12
  $region1: #{tpu_custom_call.1} parent=0
    #allocation2 [shape = 'u8[16384]{0}', space=vmem, size = 0x4000, scoped, tag = 'input window, operand 1']
    #allocation3 [shape = 's32[2]{0}', space=sflag, size = 0x8, scoped, tag = 'scoped memory for tpu_custom_call.1']
    #allocation4 [shape = 's32[2]{0}', space=sflag, size = 0x8, scoped, tag = 'scoped memory for tpu_custom_call.1']
    #allocation5 [shape = 'u8[2048]{0}', space=vmem, size = 0x800, scoped, tag = 'input window, operand 2, single buffered']
    #allocation6 [shape = 's32[1]{0}', space=sflag, size = 0x4, scoped, tag = 'scoped memory for tpu_custom_call.1']
    #allocation7 [shape = 'u8[2048]{0}', space=vmem, size = 0x800, scoped, tag = 'input window, operand 3, single buffered']
    #allocation8 [shape = 'u8[32768]{0}', space=vmem, size = 0x8000, scoped, tag = 'output window, operand 0']
    %16 = vsyncpa [#allocation3], 0
    %s17 = scalar_lea.sflag [#allocation3], 1
    %18 = vsyncpa %s17, 0
    %19 = vsyncpa [#allocation6], 0
    %20 = vsyncpa [#allocation4], 0
    %s21 = scalar_lea.sflag [#allocation4], 1
    %22 = vsyncpa %s21, 0
    loop: start=0, step=1, limit=4
    $region2: #{tpu_custom_call.1} parent=1 // loop_pre_header
      _
    $region3: #{tpu_custom_call.1} parent=1 // loop_header
      %s24 = sphi 0, %s28
      %p25 = scmp.ge.s32.totalorder %s24, 4
      %s31 = sphi 0, %s43
      %s32 = sphi 0, %s39
      %s33 = sphi 0, %s31
      %s34 = sphi 0, %s32
      %s35 = sphi 0, %s33
      %s36 = sphi 0, %s34
      %s48 = sphi 0, %s50
      %s51 = sphi 0, %s48
      %s52 = sphi 0, %s51
      %s68 = sphi 0, %s52
      %s76 = sphi 0, %s78
      %s79 = sphi 0, %s76
      %s80 = sphi 0, %s79
      %s96 = sphi 0, %s80
      %s100 = sphi 0, %s100
      %s102 = sphi 0, %s100
      %s103 = sphi 0, %s102
      %s117 = sphi 0, %s103
      %s121 = sphi 0, %s121
      %s123 = sphi 0, %s121
      %s124 = sphi 0, %s123
      %s138 = sphi 0, %s124
      %s142 = sphi 0, %s142
      %s144 = sphi 0, %s142
      %s145 = sphi 0, %s144
      %s159 = sphi 0, %s145
      %s163 = sphi 0, %s163
      %s165 = sphi 0, %s163
      %s166 = sphi 0, %s165
      %s180 = sphi 0, %s166
      %s184 = sphi 0, %s184
      %s186 = sphi 0, %s184
      %s187 = sphi 0, %s186
      %s201 = sphi 0, %s187
      %s205 = sphi 0, %s205
      %s207 = sphi 0, %s205
      %s208 = sphi 0, %s207
      %s222 = sphi 0, %s208
      %s226 = sphi 0, %s226
      %s228 = sphi 0, %s226
      %s229 = sphi 0, %s228
      %s243 = sphi 0, %s229
      %s247 = sphi 0, %s247
      %s249 = sphi 0, %s247
      %s250 = sphi 0, %s249
      %s264 = sphi 0, %s250
      %s268 = sphi 0, %s268
      %s270 = sphi 0, %s268
      %s271 = sphi 0, %s270
      %s285 = sphi 0, %s271
      %s293 = sphi 0, %s295
      %s296 = sphi 0, %s293
      %s297 = sphi 0, %s296
      %s313 = sphi 0, %s297
    $region4: #{tpu_custom_call.1} parent=1 // loop_header_branch
      %27 = sbr.rel (%p25) target = $region8
    $region5: #{tpu_custom_call.1} parent=1 // loop_body
      %s29 = ssub.s32 %s24, 1
      %s30 = ssub.s32 %s24, 2
      %s37 = sadd.s32 1, %s32
      %p38 = scmp.ge.s32.totalorder %s37, 1
      %s39 = scalar_select %p38, 0, %s37
      %s40 = sadd.s32 1, %s31
      %s41 = scalar_select %p38, %s40, %s31
      %p42 = scmp.ge.s32.totalorder %s41, 2
      %s43 = scalar_select %p42, 0, %s41
      %s44 = ssub.s32 %s31, %s43
      %s45 = ssub.s32 %s32, %s39
      %s46 = sor.u32 %s44, %s45
      %p47 = scmp.eq.s32.totalorder %s46, 0
      %s49 = sadd.s32 %s48, 1
      %s50 = scalar_select %p47, %s48, %s49
      %p53 = pneg %p47
      %p54 = scmp.eq.s32.totalorder %s24, 1
      %p55 = por %p53, %p54
      %p56 = scmp.ne.s32.totalorder %s48, %s51
      %p57 = scmp.eq.s32.totalorder %s24, 0
      %p58 = por %p56, %p57
      %p59 = scmp.ne.s32.totalorder %s48, %s51
      %p60 = scmp.eq.s32.totalorder %s29, 1
      %p61 = por %p59, %p60
      %p62 = scmp.ne.s32.totalorder %s51, %s52
      %p63 = scmp.eq.s32.totalorder %s29, 0
      %p64 = por %p62, %p63
      %p65 = scmp.ne.s32.totalorder %s51, %s52
      %p66 = scmp.eq.s32.totalorder %s30, 1
      %p67 = por %p65, %p66
      %p69 = scmp.ne.s32.totalorder %s52, %s68
      %p70 = scmp.eq.s32.totalorder %s30, 0
      %p71 = por %p69, %p70
      %s72 = ssub.s32 %s31, %s43
      %s73 = ssub.s32 %s32, %s39
      %s74 = sor.u32 %s72, %s73
      %p75 = scmp.eq.s32.totalorder %s74, 0
      %s77 = sadd.s32 %s76, 1
      %s78 = scalar_select %p75, %s76, %s77
      %p81 = pneg %p75
      %p82 = scmp.eq.s32.totalorder %s24, 1
      %p83 = por %p81, %p82
      %p84 = scmp.ne.s32.totalorder %s76, %s79
      %p85 = scmp.eq.s32.totalorder %s24, 0
      %p86 = por %p84, %p85
      %p87 = scmp.ne.s32.totalorder %s76, %s79
      %p88 = scmp.eq.s32.totalorder %s29, 1
      %p89 = por %p87, %p88
      %p90 = scmp.ne.s32.totalorder %s79, %s80
      %p91 = scmp.eq.s32.totalorder %s29, 0
      %p92 = por %p90, %p91
      %p93 = scmp.ne.s32.totalorder %s79, %s80
      %p94 = scmp.eq.s32.totalorder %s30, 1
      %p95 = por %p93, %p94
      %p97 = scmp.ne.s32.totalorder %s80, %s96
      %p98 = scmp.eq.s32.totalorder %s30, 0
      %p99 = por %p97, %p98
      %s101 = sadd.s32 %s100, 1
      %p104 = scmp.eq.s32.totalorder %s24, 1
      %p105 = scmp.ne.s32.totalorder %s100, %s102
      %p106 = scmp.eq.s32.totalorder %s24, 0
      %p107 = por %p105, %p106
      %p108 = scmp.ne.s32.totalorder %s100, %s102
      %p109 = scmp.eq.s32.totalorder %s29, 1
      %p110 = por %p108, %p109
      %p111 = scmp.ne.s32.totalorder %s102, %s103
      %p112 = scmp.eq.s32.totalorder %s29, 0
      %p113 = por %p111, %p112
      %p114 = scmp.ne.s32.totalorder %s102, %s103
      %p115 = scmp.eq.s32.totalorder %s30, 1
      %p116 = por %p114, %p115
      %p118 = scmp.ne.s32.totalorder %s103, %s117
      %p119 = scmp.eq.s32.totalorder %s30, 0
      %p120 = por %p118, %p119
      %s122 = sadd.s32 %s121, 1
      %p125 = scmp.eq.s32.totalorder %s24, 1
      %p126 = scmp.ne.s32.totalorder %s121, %s123
      %p127 = scmp.eq.s32.totalorder %s24, 0
      %p128 = por %p126, %p127
      %p129 = scmp.ne.s32.totalorder %s121, %s123
      %p130 = scmp.eq.s32.totalorder %s29, 1
      %p131 = por %p129, %p130
      %p132 = scmp.ne.s32.totalorder %s123, %s124
      %p133 = scmp.eq.s32.totalorder %s29, 0
      %p134 = por %p132, %p133
      %p135 = scmp.ne.s32.totalorder %s123, %s124
      %p136 = scmp.eq.s32.totalorder %s30, 1
      %p137 = por %p135, %p136
      %p139 = scmp.ne.s32.totalorder %s124, %s138
      %p140 = scmp.eq.s32.totalorder %s30, 0
      %p141 = por %p139, %p140
      %s143 = sadd.s32 %s142, 1
      %p146 = scmp.eq.s32.totalorder %s24, 1
      %p147 = scmp.ne.s32.totalorder %s142, %s144
      %p148 = scmp.eq.s32.totalorder %s24, 0
      %p149 = por %p147, %p148
      %p150 = scmp.ne.s32.totalorder %s142, %s144
      %p151 = scmp.eq.s32.totalorder %s29, 1
      %p152 = por %p150, %p151
      %p153 = scmp.ne.s32.totalorder %s144, %s145
      %p154 = scmp.eq.s32.totalorder %s29, 0
      %p155 = por %p153, %p154
      %p156 = scmp.ne.s32.totalorder %s144, %s145
      %p157 = scmp.eq.s32.totalorder %s30, 1
      %p158 = por %p156, %p157
      %p160 = scmp.ne.s32.totalorder %s145, %s159
      %p161 = scmp.eq.s32.totalorder %s30, 0
      %p162 = por %p160, %p161
      %s164 = sadd.s32 %s163, 1
      %p167 = scmp.eq.s32.totalorder %s24, 1
      %p168 = scmp.ne.s32.totalorder %s163, %s165
      %p169 = scmp.eq.s32.totalorder %s24, 0
      %p170 = por %p168, %p169
      %p171 = scmp.ne.s32.totalorder %s163, %s165
      %p172 = scmp.eq.s32.totalorder %s29, 1
      %p173 = por %p171, %p172
      %p174 = scmp.ne.s32.totalorder %s165, %s166
      %p175 = scmp.eq.s32.totalorder %s29, 0
      %p176 = por %p174, %p175
      %p177 = scmp.ne.s32.totalorder %s165, %s166
      %p178 = scmp.eq.s32.totalorder %s30, 1
      %p179 = por %p177, %p178
      %p181 = scmp.ne.s32.totalorder %s166, %s180
      %p182 = scmp.eq.s32.totalorder %s30, 0
      %p183 = por %p181, %p182
      %s185 = sadd.s32 %s184, 1
      %p188 = scmp.eq.s32.totalorder %s24, 1
      %p189 = scmp.ne.s32.totalorder %s184, %s186
      %p190 = scmp.eq.s32.totalorder %s24, 0
      %p191 = por %p189, %p190
      %p192 = scmp.ne.s32.totalorder %s184, %s186
      %p193 = scmp.eq.s32.totalorder %s29, 1
      %p194 = por %p192, %p193
      %p195 = scmp.ne.s32.totalorder %s186, %s187
      %p196 = scmp.eq.s32.totalorder %s29, 0
      %p197 = por %p195, %p196
      %p198 = scmp.ne.s32.totalorder %s186, %s187
      %p199 = scmp.eq.s32.totalorder %s30, 1
      %p200 = por %p198, %p199
      %p202 = scmp.ne.s32.totalorder %s187, %s201
      %p203 = scmp.eq.s32.totalorder %s30, 0
      %p204 = por %p202, %p203
      %s206 = sadd.s32 %s205, 1
      %p209 = scmp.eq.s32.totalorder %s24, 1
      %p210 = scmp.ne.s32.totalorder %s205, %s207
      %p211 = scmp.eq.s32.totalorder %s24, 0
      %p212 = por %p210, %p211
      %p213 = scmp.ne.s32.totalorder %s205, %s207
      %p214 = scmp.eq.s32.totalorder %s29, 1
      %p215 = por %p213, %p214
      %p216 = scmp.ne.s32.totalorder %s207, %s208
      %p217 = scmp.eq.s32.totalorder %s29, 0
      %p218 = por %p216, %p217
      %p219 = scmp.ne.s32.totalorder %s207, %s208
      %p220 = scmp.eq.s32.totalorder %s30, 1
      %p221 = por %p219, %p220
      %p223 = scmp.ne.s32.totalorder %s208, %s222
      %p224 = scmp.eq.s32.totalorder %s30, 0
      %p225 = por %p223, %p224
      %s227 = sadd.s32 %s226, 1
      %p230 = scmp.eq.s32.totalorder %s24, 1
      %p231 = scmp.ne.s32.totalorder %s226, %s228
      %p232 = scmp.eq.s32.totalorder %s24, 0
      %p233 = por %p231, %p232
      %p234 = scmp.ne.s32.totalorder %s226, %s228
      %p235 = scmp.eq.s32.totalorder %s29, 1
      %p236 = por %p234, %p235
      %p237 = scmp.ne.s32.totalorder %s228, %s229
      %p238 = scmp.eq.s32.totalorder %s29, 0
      %p239 = por %p237, %p238
      %p240 = scmp.ne.s32.totalorder %s228, %s229
      %p241 = scmp.eq.s32.totalorder %s30, 1
      %p242 = por %p240, %p241
      %p244 = scmp.ne.s32.totalorder %s229, %s243
      %p245 = scmp.eq.s32.totalorder %s30, 0
      %p246 = por %p244, %p245
      %s248 = sadd.s32 %s247, 1
      %p251 = scmp.eq.s32.totalorder %s24, 1
      %p252 = scmp.ne.s32.totalorder %s247, %s249
      %p253 = scmp.eq.s32.totalorder %s24, 0
      %p254 = por %p252, %p253
      %p255 = scmp.ne.s32.totalorder %s247, %s249
      %p256 = scmp.eq.s32.totalorder %s29, 1
      %p257 = por %p255, %p256
      %p258 = scmp.ne.s32.totalorder %s249, %s250
      %p259 = scmp.eq.s32.totalorder %s29, 0
      %p260 = por %p258, %p259
      %p261 = scmp.ne.s32.totalorder %s249, %s250
      %p262 = scmp.eq.s32.totalorder %s30, 1
      %p263 = por %p261, %p262
      %p265 = scmp.ne.s32.totalorder %s250, %s264
      %p266 = scmp.eq.s32.totalorder %s30, 0
      %p267 = por %p265, %p266
      %s269 = sadd.s32 %s268, 1
      %p272 = scmp.eq.s32.totalorder %s24, 1
      %p273 = scmp.ne.s32.totalorder %s268, %s270
      %p274 = scmp.eq.s32.totalorder %s24, 0
      %p275 = por %p273, %p274
      %p276 = scmp.ne.s32.totalorder %s268, %s270
      %p277 = scmp.eq.s32.totalorder %s29, 1
      %p278 = por %p276, %p277
      %p279 = scmp.ne.s32.totalorder %s270, %s271
      %p280 = scmp.eq.s32.totalorder %s29, 0
      %p281 = por %p279, %p280
      %p282 = scmp.ne.s32.totalorder %s270, %s271
      %p283 = scmp.eq.s32.totalorder %s30, 1
      %p284 = por %p282, %p283
      %p286 = scmp.ne.s32.totalorder %s271, %s285
      %p287 = scmp.eq.s32.totalorder %s30, 0
      %p288 = por %p286, %p287
      %s289 = ssub.s32 %s31, %s43
      %s290 = ssub.s32 %s32, %s39
      %s291 = sor.u32 %s289, %s290
      %p292 = scmp.eq.s32.totalorder %s291, 0
      %s294 = sadd.s32 %s293, 1
      %s295 = scalar_select %p292, %s293, %s294
      %p298 = pneg %p292
      %p299 = scmp.eq.s32.totalorder %s24, 1
      %p300 = por %p298, %p299
      %p301 = scmp.ne.s32.totalorder %s293, %s296
      %p302 = scmp.eq.s32.totalorder %s24, 0
      %p303 = por %p301, %p302
      %p304 = scmp.ne.s32.totalorder %s293, %s296
      %p305 = scmp.eq.s32.totalorder %s29, 1
      %p306 = por %p304, %p305
      %p307 = scmp.ne.s32.totalorder %s296, %s297
      %p308 = scmp.eq.s32.totalorder %s29, 0
      %p309 = por %p307, %p308
      %p310 = scmp.ne.s32.totalorder %s296, %s297
      %p311 = scmp.eq.s32.totalorder %s30, 1
      %p312 = por %p310, %p311
      %p314 = scmp.ne.s32.totalorder %s297, %s313
      %p315 = scmp.eq.s32.totalorder %s30, 0
      %p316 = por %p314, %p315
      %p317 = scmp.le.s32.totalorder 1, %s24
      %p318 = scmp.lt.s32.totalorder %s24, 3
      %p319 = pnand %p317, %p318
      %p320 = pneg %p319
      // Predicated region
      $region9: #{tpu_custom_call.1} parent=5 // pred_check
        _
      $region10: #{tpu_custom_call.1} parent=5 // pred_check_branch
        %322 = sbr.rel (%p319) target = $region12
      $region11: #{tpu_custom_call.1} parent=5 // pred_region
        %s323 = ssub.s32 %s24, 1
        // Predicated region
        $region13: #{tpu_custom_call.1} parent=11 // pred_check
          %p324 = pneg %p113
        $region14: #{tpu_custom_call.1} parent=11 // pred_check_branch
          %326 = sbr.rel (%p324) target = $region16
        $region15: #{tpu_custom_call.1} parent=11 // pred_region
          %s328 = ssub.s32 64, 64
          %329 = vsyncadd [#allocation6], %s328
          %s331 = sshll.u32 [#allocation5], 4
          %s332 = int_to_ptr.vmem [resolvable:$true] %s331
          %334 = dma.hbm_to_vmem [thread:$0]  %s2, 64, %s332, [#allocation6]
        $region16: #{tpu_custom_call.1} parent=11 // pred_fallthru
          _
        // Predicated region
        $region17: #{tpu_custom_call.1} parent=11 // pred_check
          %p335 = pneg %p134
        $region18: #{tpu_custom_call.1} parent=11 // pred_check_branch
          %337 = sbr.rel (%p335) target = $region20
        $region19: #{tpu_custom_call.1} parent=11 // pred_region
          %s339 = ssub.s32 64, 64
          %340 = vsyncadd [#allocation6], %s339
          %s342 = sshll.u32 [#allocation7], 4
          %s343 = int_to_ptr.vmem [resolvable:$true] %s342
          %345 = dma.hbm_to_vmem [thread:$0]  %s3, 64, %s343, [#allocation6]
        $region20: #{tpu_custom_call.1} parent=11 // pred_fallthru
          _
        // Predicated region
        $region21: #{tpu_custom_call.1} parent=11 // pred_check
          %p346 = pneg %p155
        $region22: #{tpu_custom_call.1} parent=11 // pred_check_branch
          %348 = sbr.rel (%p346) target = $region24
        $region23: #{tpu_custom_call.1} parent=11 // pred_region
          _
        $region24: #{tpu_custom_call.1} parent=11 // pred_fallthru
          _
        // Predicated region
        $region25: #{tpu_custom_call.1} parent=11 // pred_check
          %p349 = pneg %p176
        $region26: #{tpu_custom_call.1} parent=11 // pred_check_branch
          %351 = sbr.rel (%p349) target = $region28
        $region27: #{tpu_custom_call.1} parent=11 // pred_region
          _
        $region28: #{tpu_custom_call.1} parent=11 // pred_fallthru
          _
        // Predicated region
        $region29: #{tpu_custom_call.1} parent=11 // pred_check
          %p352 = pneg %p197
        $region30: #{tpu_custom_call.1} parent=11 // pred_check_branch
          %354 = sbr.rel (%p352) target = $region32
        $region31: #{tpu_custom_call.1} parent=11 // pred_region
          _
        $region32: #{tpu_custom_call.1} parent=11 // pred_fallthru
          _
        // Predicated region
        $region33: #{tpu_custom_call.1} parent=11 // pred_check
          %p355 = pneg %p218
        $region34: #{tpu_custom_call.1} parent=11 // pred_check_branch
          %357 = sbr.rel (%p355) target = $region36
        $region35: #{tpu_custom_call.1} parent=11 // pred_region
          _
        $region36: #{tpu_custom_call.1} parent=11 // pred_fallthru
          _
        // Predicated region
        $region37: #{tpu_custom_call.1} parent=11 // pred_check
          %p358 = pneg %p239
        $region38: #{tpu_custom_call.1} parent=11 // pred_check_branch
          %360 = sbr.rel (%p358) target = $region40
        $region39: #{tpu_custom_call.1} parent=11 // pred_region
          _
        $region40: #{tpu_custom_call.1} parent=11 // pred_fallthru
          _
        // Predicated region
        $region41: #{tpu_custom_call.1} parent=11 // pred_check
          %p361 = pneg %p260
        $region42: #{tpu_custom_call.1} parent=11 // pred_check_branch
          %363 = sbr.rel (%p361) target = $region44
        $region43: #{tpu_custom_call.1} parent=11 // pred_region
          _
        $region44: #{tpu_custom_call.1} parent=11 // pred_fallthru
          _
        // Predicated region
        $region45: #{tpu_custom_call.1} parent=11 // pred_check
          %p364 = pneg %p281
        $region46: #{tpu_custom_call.1} parent=11 // pred_check_branch
          %366 = sbr.rel (%p364) target = $region48
        $region47: #{tpu_custom_call.1} parent=11 // pred_region
          _
        $region48: #{tpu_custom_call.1} parent=11 // pred_fallthru
          _
      $region12: #{tpu_custom_call.1} parent=5 // pred_fallthru
        _
      %p367 = scmp.lt.s32.totalorder %s24, 2
      // Predicated region
      $region49: #{tpu_custom_call.1} parent=5 // pred_check
        %p368 = pneg %p367
      $region50: #{tpu_custom_call.1} parent=5 // pred_check_branch
        %370 = sbr.rel (%p368) target = $region52
      $region51: #{tpu_custom_call.1} parent=5 // pred_region
        // Predicated region
        $region53: #{tpu_custom_call.1} parent=51 // pred_check
          %p371 = pneg %p58
        $region54: #{tpu_custom_call.1} parent=51 // pred_check_branch
          %373 = sbr.rel (%p371) target = $region56
        $region55: #{tpu_custom_call.1} parent=51 // pred_region
          %p374 = scmp.lt.s32.totalorder %s31, 1
          %s375 = scalar_select %p374, %s31, 1
          %p376 = scmp.lt.s32.totalorder %s32, 0
          %s377 = scalar_select %p376, %s32, 0
          %s378 = smul.addr %s375, 4
          %s379 = sadd.s32 %s377, %s378
          %s380 = smul.addr %s379, 4
          %s381 = scalar_lea.vmem %s0, %s380
        $region56: #{tpu_custom_call.1} parent=51 // pred_fallthru
          _
        // Predicated region
        $region57: #{tpu_custom_call.1} parent=51 // pred_check
          %p382 = pneg %p86
        $region58: #{tpu_custom_call.1} parent=51 // pred_check_branch
          %384 = sbr.rel (%p382) target = $region60
        $region59: #{tpu_custom_call.1} parent=51 // pred_region
          %s385 = sand.u32 %s76, 1
          %s386 = scalar_lea.sflag [#allocation3], %s385
          %s387 = sand.u32 %s76, 1
          %s388 = smul.addr %s387, 16
          %s389 = scalar_lea.vmem [#allocation2], %s388
          %s391 = ssub.s32 256, 256
          %392 = vsyncadd %s386, %s391
          %s393 = smul.addr %s31, 4
          %s394 = sadd.s32 %s32, %s393
          %s395 = smul.addr %s394, 64
          %s396 = scalar_lea.hbm %s1, %s395
          %s397 = sshll.u32 %s389, 4
          %s398 = int_to_ptr.vmem [resolvable:$true] %s397
          %403 = dma.hbm_to_vmem [thread:$0]  %s396, 256, %s398, %s386, 64, 64, 4
        $region60: #{tpu_custom_call.1} parent=51 // pred_fallthru
          _
      $region52: #{tpu_custom_call.1} parent=5 // pred_fallthru
        _
      %p404 = scmp.le.s32.totalorder 1, %s24
      %p405 = scmp.lt.s32.totalorder %s24, 3
      %p406 = pnand %p404, %p405
      %p407 = pneg %p406
      // Predicated region
      $region61: #{tpu_custom_call.1} parent=5 // pred_check
        _
      $region62: #{tpu_custom_call.1} parent=5 // pred_check_branch
        %409 = sbr.rel (%p406) target = $region64
      $region63: #{tpu_custom_call.1} parent=5 // pred_region
        %s410 = ssub.s32 %s24, 1
        %s411 = sand.u32 %s79, 1
        %s412 = scalar_lea.sflag [#allocation3], %s411
        %s413 = sand.u32 %s79, 1
        %s414 = smul.addr %s413, 16
        %s415 = scalar_lea.vmem [#allocation2], %s414
        // Predicated region
        $region65: #{tpu_custom_call.1} parent=63 // pred_check
          %p416 = pneg %p92
        $region66: #{tpu_custom_call.1} parent=63 // pred_check_branch
          %418 = sbr.rel (%p416) target = $region68
        $region67: #{tpu_custom_call.1} parent=63 // pred_region
          %419 = dma.done %s412, 256
        $region68: #{tpu_custom_call.1} parent=63 // pred_fallthru
          _
        // Predicated region
        $region69: #{tpu_custom_call.1} parent=63 // pred_check
          %p420 = pneg %p113
        $region70: #{tpu_custom_call.1} parent=63 // pred_check_branch
          %422 = sbr.rel (%p420) target = $region72
        $region71: #{tpu_custom_call.1} parent=63 // pred_region
          %423 = dma.done [#allocation6], 64
        $region72: #{tpu_custom_call.1} parent=63 // pred_fallthru
          _
        // Predicated region
        $region73: #{tpu_custom_call.1} parent=63 // pred_check
          %p424 = pneg %p134
        $region74: #{tpu_custom_call.1} parent=63 // pred_check_branch
          %426 = sbr.rel (%p424) target = $region76
        $region75: #{tpu_custom_call.1} parent=63 // pred_region
          %427 = dma.done [#allocation6], 64
        $region76: #{tpu_custom_call.1} parent=63 // pred_fallthru
          _
        %p428 = scmp.lt.s32.totalorder %s33, 1
        %s429 = scalar_select %p428, %s33, 1
        %p430 = scmp.lt.s32.totalorder %s34, 0
        %s431 = scalar_select %p430, %s34, 0
        %s432 = smul.addr %s429, 4
        %s433 = sadd.s32 %s431, %s432
        %s434 = smul.addr %s433, 4
        %s435 = scalar_lea.vmem %s0, %s434
        %p436 = pneg %p64
        %p437 = pneg %p61
        %s438 = sand.u32 %s79, 1
        %s439 = scalar_lea.sflag [#allocation3], %s438
        %s440 = sand.u32 %s79, 1
        %s441 = smul.addr %s440, 16
        %s442 = scalar_lea.vmem [#allocation2], %s441
        %p443 = pneg %p92
        %p444 = pneg %p89
        %p445 = pneg %p113
        %p446 = pneg %p110
        %p447 = pneg %p134
        %p448 = pneg %p131
        %p449 = pneg %p155
        %p450 = pneg %p152
        %p451 = pneg %p176
        %p452 = pneg %p173
        %p453 = pneg %p197
        %p454 = pneg %p194
        %p455 = pneg %p218
        %p456 = pneg %p215
        %p457 = pneg %p239
        %p458 = pneg %p236
        %p459 = pneg %p260
        %p460 = pneg %p257
        %p461 = pneg %p281
        %p462 = pneg %p278
        %p463 = pneg %p309
        %p464 = pneg %p306
        %s465 = sand.u32 %s296, 1
        %s466 = scalar_lea.sflag [#allocation4], %s465
        %s467 = sand.u32 %s296, 1
        %s468 = smul.addr %s467, 32
        %s469 = scalar_lea.vmem [#allocation8], %s468
        %p470 = scmp.lt.s32.totalorder %s33, 1
        %s471 = scalar_select %p470, %s33, 1
        %p472 = scmp.lt.s32.totalorder %s34, 0
        %s473 = scalar_select %p472, %s34, 0
        %s474 = smul.addr %s471, 4
        %s475 = sadd.s32 %s473, %s474
        %s476 = smul.addr %s475, 4
        %s477 = scalar_lea.vmem %s0, %s476
        %v478 = vld [vmem:[#allocation5] sm:$0xf]
        %v479 = vld [vmem:[#allocation7] sm:$0xf]
        %v480 = vld [vmem:[%s4] sm:$0xff]
        %v481 = vld [vmem:[%s5] sm:$0xff]
        %v482 = vld [vmem:[%s6] sm:$0xf]
        %v483 = vld [vmem:[%s7] sm:$0xff]
        %v484 = vld [vmem:[%s8] sm:$0xff]
        %v485 = vld [vmem:[%s9] sm:$0xff]
        %v486 = vld [vmem:[%s10] sm:$0xff]
        %v487 = vld [vmem:[%s477] sm:$0x1]
        %v488 = vld [vmem:[%s477 + $0x4] sm:$0x1]
        %v489 = vld [vmem:[%s477 + $0x8] sm:$0x1]
        %v490 = vld [vmem:[%s477 + $0xc] sm:$0x1]
        %v491 = vmax.f32 %v487, 0.0
        %v492 = vmax.f32 %v488, 0.0
        %v493 = vmax.f32 %v489, 0.0
        %v494 = vmax.f32 %v490, 0.0
        %v499 = vrot.slane %v492, 7
        %vm500 = vcmask 1041409
        %v501 = vsel %vm500, %v499, %v491
        %v502 = vrot.slane %v493, 6
        %vm503 = vcmask 1042434
        %v504 = vsel %vm503, %v502, %v501
        %v505 = vrot.slane %v494, 5
        %vm506 = vcmask 1043459
        %v507 = vsel %vm506, %v505, %v504
        %vm508 = vcmask 31744
        %v510 = vsel %vm508, %v478, 0
        %vm512 = vcmask 1043456
        %v513 = vsel %vm512, %v507, 0
        %515 = vmatprep.subr.mxu0 0.0
        %516 = vmatpush1.msra.mxu0 %v513
        %517 = vmatprep.subr.mxu0 0.0
        %518 = vmatpush1.msra.mxu0 0.0
        %519 = vmatprep.subr.mxu0 0.0
        %520 = vmatpush1.msra.mxu0 0.0
        %521 = vmatprep.subr.mxu0 0.0
        %522 = vmatpush1.msra.mxu0 0.0
        %523 = vmatprep.subr.mxu0 0.0
        %524 = vmatpush1.msra.mxu0 0.0
        %525 = vmatprep.subr.mxu0 0.0
        %526 = vmatpush1.msra.mxu0 0.0
        %527 = vmatprep.subr.mxu0 0.0
        %528 = vmatpush1.msra.mxu0 0.0
        %529 = vmatprep.subr.mxu0 0.0
        %530 = vmatpush1.msra.mxu0 0.0
        %531 = vmatprep.subr.mxu0 0.0
        %532 = vmatpush1.msra.mxu0 0.0
        %533 = vmatprep.subr.mxu0 0.0
        %534 = vmatpush1.msra.mxu0 0.0
        %535 = vmatprep.subr.mxu0 0.0
        %536 = vmatpush1.msra.mxu0 0.0
        %537 = vmatprep.subr.mxu0 0.0
        %538 = vmatpush1.msra.mxu0 0.0
        %539 = vmatprep.subr.mxu0 0.0
        %540 = vmatpush1.msra.mxu0 0.0
        %541 = vmatprep.subr.mxu0 0.0
        %542 = vmatpush1.msra.mxu0 0.0
        %543 = vmatprep.subr.mxu0 0.0
        %544 = vmatpush1.msra.mxu0 0.0
        %545 = vmatprep.subr.mxu0 0.0
        %546 = vmatpush1.msra.mxu0 0.0
        %547 = vmatprep.subr.mxu0 0.0
        %548 = vmatpush1.msra.mxu0 0.0
        %549 = vmatprep.subr.mxu0 0.0
        %550 = vmatpush1.msra.mxu0 0.0
        %551 = vmatprep.subr.mxu0 0.0
        %552 = vmatpush1.msra.mxu0 0.0
        %553 = vmatprep.subr.mxu0 0.0
        %554 = vmatpush1.msra.mxu0 0.0
        %555 = vmatprep.subr.mxu0 0.0
        %556 = vmatpush1.msra.mxu0 0.0
        %557 = vmatprep.subr.mxu0 0.0
        %558 = vmatpush1.msra.mxu0 0.0
        %559 = vmatprep.subr.mxu0 0.0
        %560 = vmatpush1.msra.mxu0 0.0
        %561 = vmatprep.subr.mxu0 0.0
        %562 = vmatpush1.msra.mxu0 0.0
        %563 = vmatprep.subr.mxu0 0.0
        %564 = vmatpush1.msra.mxu0 0.0
        %565 = vmatprep.subr.mxu0 0.0
        %566 = vmatpush1.msra.mxu0 0.0
        %567 = vmatprep.subr.mxu0 0.0
        %568 = vmatpush1.msra.mxu0 0.0
        %569 = vmatprep.subr.mxu0 0.0
        %570 = vmatpush1.msra.mxu0 0.0
        %571 = vmatprep.subr.mxu0 0.0
        %572 = vmatpush1.msra.mxu0 0.0
        %573 = vmatprep.subr.mxu0 0.0
        %574 = vmatpush1.msra.mxu0 0.0
        %575 = vmatprep.subr.mxu0 0.0
        %576 = vmatpush1.msra.mxu0 0.0
        %577 = vmatprep.subr.mxu0 0.0
        %578 = vmatpush1.msra.mxu0 0.0
        %579 = vmatprep.mubr.f32.mxu0 0.0
        %580 = vmatmul.mubr.f32.gmra.mrb[0].mxu0 %v510
        %v581 = vpop.f32.mrb[0].mxu0
        %v582 = vadd.f32 0.0, %v581
        %v583 = vpop.f32.mrb[0].mxu0
        %584 = vdwg.mxu0
        %v586 = vsel %vm508, %v479, 0
        %588 = vmatprep.subr.mxu0 0.0
        %589 = vmatpush1.msra.mxu0 %v513
        %590 = vmatprep.subr.mxu0 0.0
        %591 = vmatpush1.msra.mxu0 0.0
        %592 = vmatprep.subr.mxu0 0.0
        %593 = vmatpush1.msra.mxu0 0.0
        %594 = vmatprep.subr.mxu0 0.0
        %595 = vmatpush1.msra.mxu0 0.0
        %596 = vmatprep.subr.mxu0 0.0
        %597 = vmatpush1.msra.mxu0 0.0
        %598 = vmatprep.subr.mxu0 0.0
        %599 = vmatpush1.msra.mxu0 0.0
        %600 = vmatprep.subr.mxu0 0.0
        %601 = vmatpush1.msra.mxu0 0.0
        %602 = vmatprep.subr.mxu0 0.0
        %603 = vmatpush1.msra.mxu0 0.0
        %604 = vmatprep.subr.mxu0 0.0
        %605 = vmatpush1.msra.mxu0 0.0
        %606 = vmatprep.subr.mxu0 0.0
        %607 = vmatpush1.msra.mxu0 0.0
        %608 = vmatprep.subr.mxu0 0.0
        %609 = vmatpush1.msra.mxu0 0.0
        %610 = vmatprep.subr.mxu0 0.0
        %611 = vmatpush1.msra.mxu0 0.0
        %612 = vmatprep.subr.mxu0 0.0
        %613 = vmatpush1.msra.mxu0 0.0
        %614 = vmatprep.subr.mxu0 0.0
        %615 = vmatpush1.msra.mxu0 0.0
        %616 = vmatprep.subr.mxu0 0.0
        %617 = vmatpush1.msra.mxu0 0.0
        %618 = vmatprep.subr.mxu0 0.0
        %619 = vmatpush1.msra.mxu0 0.0
        %620 = vmatprep.subr.mxu0 0.0
        %621 = vmatpush1.msra.mxu0 0.0
        %622 = vmatprep.subr.mxu0 0.0
        %623 = vmatpush1.msra.mxu0 0.0
        %624 = vmatprep.subr.mxu0 0.0
        %625 = vmatpush1.msra.mxu0 0.0
        %626 = vmatprep.subr.mxu0 0.0
        %627 = vmatpush1.msra.mxu0 0.0
        %628 = vmatprep.subr.mxu0 0.0
        %629 = vmatpush1.msra.mxu0 0.0
        %630 = vmatprep.subr.mxu0 0.0
        %631 = vmatpush1.msra.mxu0 0.0
        %632 = vmatprep.subr.mxu0 0.0
        %633 = vmatpush1.msra.mxu0 0.0
        %634 = vmatprep.subr.mxu0 0.0
        %635 = vmatpush1.msra.mxu0 0.0
        %636 = vmatprep.subr.mxu0 0.0
        %637 = vmatpush1.msra.mxu0 0.0
        %638 = vmatprep.subr.mxu0 0.0
        %639 = vmatpush1.msra.mxu0 0.0
        %640 = vmatprep.subr.mxu0 0.0
        %641 = vmatpush1.msra.mxu0 0.0
        %642 = vmatprep.subr.mxu0 0.0
        %643 = vmatpush1.msra.mxu0 0.0
        %644 = vmatprep.subr.mxu0 0.0
        %645 = vmatpush1.msra.mxu0 0.0
        %646 = vmatprep.subr.mxu0 0.0
        %647 = vmatpush1.msra.mxu0 0.0
        %648 = vmatprep.subr.mxu0 0.0
        %649 = vmatpush1.msra.mxu0 0.0
        %650 = vmatprep.subr.mxu0 0.0
        %651 = vmatpush1.msra.mxu0 0.0
        %652 = vmatprep.mubr.f32.mxu0 0.0
        %653 = vmatmul.mubr.f32.gmra.mrb[0].mxu0 %v586
        %v654 = vpop.f32.mrb[0].mxu0
        %v655 = vadd.f32 0.0, %v654
        %v656 = vpop.f32.mrb[0].mxu0
        %657 = vdwg.mxu0
        %v658 = vadd.f32 %v582, %v655
        %660 = vset.pattern.permute.xlu0 0
        %661 = vperm.xlu0 %660, %v482
        %v662 = vpop.permute.xlu0 %661
        %v664 = vadd.f32 %v658, %v662
        %vm665 = vcmask 64512
        %v667 = vsel %vm665, %v655, 0
        %669 = vmatprep.subr.mxu0 0.0
        %670 = vmatpush1.msra.mxu0 %v484
        %671 = vmatprep.subr.mxu0 0.0
        %672 = vmatpush1.msra.mxu0 0.0
        %673 = vmatprep.subr.mxu0 0.0
        %674 = vmatpush1.msra.mxu0 0.0
        %675 = vmatprep.subr.mxu0 0.0
        %676 = vmatpush1.msra.mxu0 0.0
        %677 = vmatprep.subr.mxu0 0.0
        %678 = vmatpush1.msra.mxu0 0.0
        %679 = vmatprep.subr.mxu0 0.0
        %680 = vmatpush1.msra.mxu0 0.0
        %681 = vmatprep.subr.mxu0 0.0
        %682 = vmatpush1.msra.mxu0 0.0
        %683 = vmatprep.subr.mxu0 0.0
        %684 = vmatpush1.msra.mxu0 0.0
        %685 = vmatprep.subr.mxu0 0.0
        %686 = vmatpush1.msra.mxu0 0.0
        %687 = vmatprep.subr.mxu0 0.0
        %688 = vmatpush1.msra.mxu0 0.0
        %689 = vmatprep.subr.mxu0 0.0
        %690 = vmatpush1.msra.mxu0 0.0
        %691 = vmatprep.subr.mxu0 0.0
        %692 = vmatpush1.msra.mxu0 0.0
        %693 = vmatprep.subr.mxu0 0.0
        %694 = vmatpush1.msra.mxu0 0.0
        %695 = vmatprep.subr.mxu0 0.0
        %696 = vmatpush1.msra.mxu0 0.0
        %697 = vmatprep.subr.mxu0 0.0
        %698 = vmatpush1.msra.mxu0 0.0
        %699 = vmatprep.subr.mxu0 0.0
        %700 = vmatpush1.msra.mxu0 0.0
        %701 = vmatprep.subr.mxu0 0.0
        %702 = vmatpush1.msra.mxu0 0.0
        %703 = vmatprep.subr.mxu0 0.0
        %704 = vmatpush1.msra.mxu0 0.0
        %705 = vmatprep.subr.mxu0 0.0
        %706 = vmatpush1.msra.mxu0 0.0
        %707 = vmatprep.subr.mxu0 0.0
        %708 = vmatpush1.msra.mxu0 0.0
        %709 = vmatprep.subr.mxu0 0.0
        %710 = vmatpush1.msra.mxu0 0.0
        %711 = vmatprep.subr.mxu0 0.0
        %712 = vmatpush1.msra.mxu0 0.0
        %713 = vmatprep.subr.mxu0 0.0
        %714 = vmatpush1.msra.mxu0 0.0
        %715 = vmatprep.subr.mxu0 0.0
        %716 = vmatpush1.msra.mxu0 0.0
        %717 = vmatprep.subr.mxu0 0.0
        %718 = vmatpush1.msra.mxu0 0.0
        %719 = vmatprep.subr.mxu0 0.0
        %720 = vmatpush1.msra.mxu0 0.0
        %721 = vmatprep.subr.mxu0 0.0
        %722 = vmatpush1.msra.mxu0 0.0
        %723 = vmatprep.subr.mxu0 0.0
        %724 = vmatpush1.msra.mxu0 0.0
        %725 = vmatprep.subr.mxu0 0.0
        %726 = vmatpush1.msra.mxu0 0.0
        %727 = vmatprep.subr.mxu0 0.0
        %728 = vmatpush1.msra.mxu0 0.0
        %729 = vmatprep.subr.mxu0 0.0
        %730 = vmatpush1.msra.mxu0 0.0
        %731 = vmatprep.subr.mxu0 0.0
        %732 = vmatpush1.msra.mxu0 0.0
        %733 = vmatprep.mubr.f32.mxu0 0.0
        %734 = vmatmul.mubr.f32.gmra.mrb[0].mxu0 %v667
        %v735 = vpop.f32.mrb[0].mxu0
        %v736 = vadd.f32 0.0, %v735
        %v737 = vpop.f32.mrb[0].mxu0
        %738 = vdwg.mxu0
        %v739 = vadd.f32 %v582, %v736
        %v740 = vadd.f32 %v739, %v662
        %v741 = vmax.f32 %v664, 0.0
        %v742 = vmax.f32 %v740, 0.0
        %v744 = vsel %vm665, %v742, 0
        %746 = vmatprep.subr.mxu0 0.0
        %747 = vmatpush1.msra.mxu0 %v486
        %748 = vmatprep.subr.mxu0 0.0
        %749 = vmatpush1.msra.mxu0 0.0
        %750 = vmatprep.subr.mxu0 0.0
        %751 = vmatpush1.msra.mxu0 0.0
        %752 = vmatprep.subr.mxu0 0.0
        %753 = vmatpush1.msra.mxu0 0.0
        %754 = vmatprep.subr.mxu0 0.0
        %755 = vmatpush1.msra.mxu0 0.0
        %756 = vmatprep.subr.mxu0 0.0
        %757 = vmatpush1.msra.mxu0 0.0
        %758 = vmatprep.subr.mxu0 0.0
        %759 = vmatpush1.msra.mxu0 0.0
        %760 = vmatprep.subr.mxu0 0.0
        %761 = vmatpush1.msra.mxu0 0.0
        %762 = vmatprep.subr.mxu0 0.0
        %763 = vmatpush1.msra.mxu0 0.0
        %764 = vmatprep.subr.mxu0 0.0
        %765 = vmatpush1.msra.mxu0 0.0
        %766 = vmatprep.subr.mxu0 0.0
        %767 = vmatpush1.msra.mxu0 0.0
        %768 = vmatprep.subr.mxu0 0.0
        %769 = vmatpush1.msra.mxu0 0.0
        %770 = vmatprep.subr.mxu0 0.0
        %771 = vmatpush1.msra.mxu0 0.0
        %772 = vmatprep.subr.mxu0 0.0
        %773 = vmatpush1.msra.mxu0 0.0
        %774 = vmatprep.subr.mxu0 0.0
        %775 = vmatpush1.msra.mxu0 0.0
        %776 = vmatprep.subr.mxu0 0.0
        %777 = vmatpush1.msra.mxu0 0.0
        %778 = vmatprep.subr.mxu0 0.0
        %779 = vmatpush1.msra.mxu0 0.0
        %780 = vmatprep.subr.mxu0 0.0
        %781 = vmatpush1.msra.mxu0 0.0
        %782 = vmatprep.subr.mxu0 0.0
        %783 = vmatpush1.msra.mxu0 0.0
        %784 = vmatprep.subr.mxu0 0.0
        %785 = vmatpush1.msra.mxu0 0.0
        %786 = vmatprep.subr.mxu0 0.0
        %787 = vmatpush1.msra.mxu0 0.0
        %788 = vmatprep.subr.mxu0 0.0
        %789 = vmatpush1.msra.mxu0 0.0
        %790 = vmatprep.subr.mxu0 0.0
        %791 = vmatpush1.msra.mxu0 0.0
        %792 = vmatprep.subr.mxu0 0.0
        %793 = vmatpush1.msra.mxu0 0.0
        %794 = vmatprep.subr.mxu0 0.0
        %795 = vmatpush1.msra.mxu0 0.0
        %796 = vmatprep.subr.mxu0 0.0
        %797 = vmatpush1.msra.mxu0 0.0
        %798 = vmatprep.subr.mxu0 0.0
        %799 = vmatpush1.msra.mxu0 0.0
        %800 = vmatprep.subr.mxu0 0.0
        %801 = vmatpush1.msra.mxu0 0.0
        %802 = vmatprep.subr.mxu0 0.0
        %803 = vmatpush1.msra.mxu0 0.0
        %804 = vmatprep.subr.mxu0 0.0
        %805 = vmatpush1.msra.mxu0 0.0
        %806 = vmatprep.subr.mxu0 0.0
        %807 = vmatpush1.msra.mxu0 0.0
        %808 = vmatprep.subr.mxu0 0.0
        %809 = vmatpush1.msra.mxu0 0.0
        %810 = vmatprep.mubr.f32.mxu0 0.0
        %811 = vmatmul.mubr.f32.gmra.mrb[0].mxu0 %v744
        %v812 = vpop.f32.mrb[0].mxu0
        %v813 = vadd.f32 0.0, %v812
        %v814 = vpop.f32.mrb[0].mxu0
        %815 = vdwg.mxu0
        %v817 = vsel %vm665, %v741, 0
        %819 = vmatprep.subr.mxu0 0.0
        %820 = vmatpush1.msra.mxu0 %v485
        %821 = vmatprep.subr.mxu0 0.0
        %822 = vmatpush1.msra.mxu0 0.0
        %823 = vmatprep.subr.mxu0 0.0
        %824 = vmatpush1.msra.mxu0 0.0
        %825 = vmatprep.subr.mxu0 0.0
        %826 = vmatpush1.msra.mxu0 0.0
        %827 = vmatprep.subr.mxu0 0.0
        %828 = vmatpush1.msra.mxu0 0.0
        %829 = vmatprep.subr.mxu0 0.0
        %830 = vmatpush1.msra.mxu0 0.0
        %831 = vmatprep.subr.mxu0 0.0
        %832 = vmatpush1.msra.mxu0 0.0
        %833 = vmatprep.subr.mxu0 0.0
        %834 = vmatpush1.msra.mxu0 0.0
        %835 = vmatprep.subr.mxu0 0.0
        %836 = vmatpush1.msra.mxu0 0.0
        %837 = vmatprep.subr.mxu0 0.0
        %838 = vmatpush1.msra.mxu0 0.0
        %839 = vmatprep.subr.mxu0 0.0
        %840 = vmatpush1.msra.mxu0 0.0
        %841 = vmatprep.subr.mxu0 0.0
        %842 = vmatpush1.msra.mxu0 0.0
        %843 = vmatprep.subr.mxu0 0.0
        %844 = vmatpush1.msra.mxu0 0.0
        %845 = vmatprep.subr.mxu0 0.0
        %846 = vmatpush1.msra.mxu0 0.0
        %847 = vmatprep.subr.mxu0 0.0
        %848 = vmatpush1.msra.mxu0 0.0
        %849 = vmatprep.subr.mxu0 0.0
        %850 = vmatpush1.msra.mxu0 0.0
        %851 = vmatprep.subr.mxu0 0.0
        %852 = vmatpush1.msra.mxu0 0.0
        %853 = vmatprep.subr.mxu0 0.0
        %854 = vmatpush1.msra.mxu0 0.0
        %855 = vmatprep.subr.mxu0 0.0
        %856 = vmatpush1.msra.mxu0 0.0
        %857 = vmatprep.subr.mxu0 0.0
        %858 = vmatpush1.msra.mxu0 0.0
        %859 = vmatprep.subr.mxu0 0.0
        %860 = vmatpush1.msra.mxu0 0.0
        %861 = vmatprep.subr.mxu0 0.0
        %862 = vmatpush1.msra.mxu0 0.0
        %863 = vmatprep.subr.mxu0 0.0
        %864 = vmatpush1.msra.mxu0 0.0
        %865 = vmatprep.subr.mxu0 0.0
        %866 = vmatpush1.msra.mxu0 0.0
        %867 = vmatprep.subr.mxu0 0.0
        %868 = vmatpush1.msra.mxu0 0.0
        %869 = vmatprep.subr.mxu0 0.0
        %870 = vmatpush1.msra.mxu0 0.0
        %871 = vmatprep.subr.mxu0 0.0
        %872 = vmatpush1.msra.mxu0 0.0
        %873 = vmatprep.subr.mxu0 0.0
        %874 = vmatpush1.msra.mxu0 0.0
        %875 = vmatprep.subr.mxu0 0.0
        %876 = vmatpush1.msra.mxu0 0.0
        %877 = vmatprep.subr.mxu0 0.0
        %878 = vmatpush1.msra.mxu0 0.0
        %879 = vmatprep.subr.mxu0 0.0
        %880 = vmatpush1.msra.mxu0 0.0
        %881 = vmatprep.subr.mxu0 0.0
        %882 = vmatpush1.msra.mxu0 0.0
        %883 = vmatprep.mubr.f32.mxu0 0.0
        %884 = vmatmul.mubr.f32.gmra.mrb[0].mxu0 %v817
        %v885 = vpop.f32.mrb[0].mxu0
        %v886 = vadd.f32 %v813, %v885
        %v887 = vpop.f32.mrb[0].mxu0
        %888 = vdwg.mxu0
        %v889 = vld [vmem:[%s415] sm:$0x1]
        %v890 = vld [vmem:[%s415 + $0x4] sm:$0x1]
        %v891 = vld [vmem:[%s415 + $0x8] sm:$0x1]
        %v892 = vld [vmem:[%s415 + $0xc] sm:$0x1]
        %v893 = vmax.f32 %v889, 0.0
        %v894 = vmax.f32 %v890, 0.0
        %v895 = vmax.f32 %v891, 0.0
        %v896 = vmax.f32 %v892, 0.0
        %v901 = vrot.slane %v894, 7
        %v902 = vsel %vm500, %v901, %v893
        %v903 = vrot.slane %v895, 6
        %v904 = vsel %vm503, %v903, %v902
        %v905 = vrot.slane %v896, 5
        %v906 = vsel %vm506, %v905, %v904
        %v908 = vsel %vm508, %v481, 0
        %v910 = vsel %vm512, %v906, 0
        %912 = vmatprep.subr.mxu0 0.0
        %913 = vmatpush1.msra.mxu0 %v910
        %914 = vmatprep.subr.mxu0 0.0
        %915 = vmatpush1.msra.mxu0 0.0
        %916 = vmatprep.subr.mxu0 0.0
        %917 = vmatpush1.msra.mxu0 0.0
        %918 = vmatprep.subr.mxu0 0.0
        %919 = vmatpush1.msra.mxu0 0.0
        %920 = vmatprep.subr.mxu0 0.0
        %921 = vmatpush1.msra.mxu0 0.0
        %922 = vmatprep.subr.mxu0 0.0
        %923 = vmatpush1.msra.mxu0 0.0
        %924 = vmatprep.subr.mxu0 0.0
        %925 = vmatpush1.msra.mxu0 0.0
        %926 = vmatprep.subr.mxu0 0.0
        %927 = vmatpush1.msra.mxu0 0.0
        %928 = vmatprep.subr.mxu0 0.0
        %929 = vmatpush1.msra.mxu0 0.0
        %930 = vmatprep.subr.mxu0 0.0
        %931 = vmatpush1.msra.mxu0 0.0
        %932 = vmatprep.subr.mxu0 0.0
        %933 = vmatpush1.msra.mxu0 0.0
        %934 = vmatprep.subr.mxu0 0.0
        %935 = vmatpush1.msra.mxu0 0.0
        %936 = vmatprep.subr.mxu0 0.0
        %937 = vmatpush1.msra.mxu0 0.0
        %938 = vmatprep.subr.mxu0 0.0
        %939 = vmatpush1.msra.mxu0 0.0
        %940 = vmatprep.subr.mxu0 0.0
        %941 = vmatpush1.msra.mxu0 0.0
        %942 = vmatprep.subr.mxu0 0.0
        %943 = vmatpush1.msra.mxu0 0.0
        %944 = vmatprep.subr.mxu0 0.0
        %945 = vmatpush1.msra.mxu0 0.0
        %946 = vmatprep.subr.mxu0 0.0
        %947 = vmatpush1.msra.mxu0 0.0
        %948 = vmatprep.subr.mxu0 0.0
        %949 = vmatpush1.msra.mxu0 0.0
        %950 = vmatprep.subr.mxu0 0.0
        %951 = vmatpush1.msra.mxu0 0.0
        %952 = vmatprep.subr.mxu0 0.0
        %953 = vmatpush1.msra.mxu0 0.0
        %954 = vmatprep.subr.mxu0 0.0
        %955 = vmatpush1.msra.mxu0 0.0
        %956 = vmatprep.subr.mxu0 0.0
        %957 = vmatpush1.msra.mxu0 0.0
        %958 = vmatprep.subr.mxu0 0.0
        %959 = vmatpush1.msra.mxu0 0.0
        %960 = vmatprep.subr.mxu0 0.0
        %961 = vmatpush1.msra.mxu0 0.0
        %962 = vmatprep.subr.mxu0 0.0
        %963 = vmatpush1.msra.mxu0 0.0
        %964 = vmatprep.subr.mxu0 0.0
        %965 = vmatpush1.msra.mxu0 0.0
        %966 = vmatprep.subr.mxu0 0.0
        %967 = vmatpush1.msra.mxu0 0.0
        %968 = vmatprep.subr.mxu0 0.0
        %969 = vmatpush1.msra.mxu0 0.0
        %970 = vmatprep.subr.mxu0 0.0
        %971 = vmatpush1.msra.mxu0 0.0
        %972 = vmatprep.subr.mxu0 0.0
        %973 = vmatpush1.msra.mxu0 0.0
        %974 = vmatprep.subr.mxu0 0.0
        %975 = vmatpush1.msra.mxu0 0.0
        %976 = vmatprep.mubr.f32.mxu0 0.0
        %977 = vmatmul.mubr.f32.gmra.mrb[0].mxu0 %v908
        %v978 = vpop.f32.mrb[0].mxu0
        %v979 = vadd.f32 0.0, %v978
        %v980 = vpop.f32.mrb[0].mxu0
        %981 = vdwg.mxu0
        %v983 = vsel %vm508, %v480, 0
        %v986 = vsel %vm512, %v886, 0
        %988 = vmatprep.subr.mxu0 0.0
        %989 = vmatpush1.msra.mxu0 %v986
        %990 = vmatprep.subr.mxu0 0.0
        %991 = vmatpush1.msra.mxu0 0.0
        %992 = vmatprep.subr.mxu0 0.0
        %993 = vmatpush1.msra.mxu0 0.0
        %994 = vmatprep.subr.mxu0 0.0
        %995 = vmatpush1.msra.mxu0 0.0
        %996 = vmatprep.subr.mxu0 0.0
        %997 = vmatpush1.msra.mxu0 0.0
        %998 = vmatprep.subr.mxu0 0.0
        %999 = vmatpush1.msra.mxu0 0.0
        %1000 = vmatprep.subr.mxu0 0.0
        %1001 = vmatpush1.msra.mxu0 0.0
        %1002 = vmatprep.subr.mxu0 0.0
        %1003 = vmatpush1.msra.mxu0 0.0
        %1004 = vmatprep.subr.mxu0 0.0
        %1005 = vmatpush1.msra.mxu0 0.0
        %1006 = vmatprep.subr.mxu0 0.0
        %1007 = vmatpush1.msra.mxu0 0.0
        %1008 = vmatprep.subr.mxu0 0.0
        %1009 = vmatpush1.msra.mxu0 0.0
        %1010 = vmatprep.subr.mxu0 0.0
        %1011 = vmatpush1.msra.mxu0 0.0
        %1012 = vmatprep.subr.mxu0 0.0
        %1013 = vmatpush1.msra.mxu0 0.0
        %1014 = vmatprep.subr.mxu0 0.0
        %1015 = vmatpush1.msra.mxu0 0.0
        %1016 = vmatprep.subr.mxu0 0.0
        %1017 = vmatpush1.msra.mxu0 0.0
        %1018 = vmatprep.subr.mxu0 0.0
        %1019 = vmatpush1.msra.mxu0 0.0
        %1020 = vmatprep.subr.mxu0 0.0
        %1021 = vmatpush1.msra.mxu0 0.0
        %1022 = vmatprep.subr.mxu0 0.0
        %1023 = vmatpush1.msra.mxu0 0.0
        %1024 = vmatprep.subr.mxu0 0.0
        %1025 = vmatpush1.msra.mxu0 0.0
        %1026 = vmatprep.subr.mxu0 0.0
        %1027 = vmatpush1.msra.mxu0 0.0
        %1028 = vmatprep.subr.mxu0 0.0
        %1029 = vmatpush1.msra.mxu0 0.0
        %1030 = vmatprep.subr.mxu0 0.0
        %1031 = vmatpush1.msra.mxu0 0.0
        %1032 = vmatprep.subr.mxu0 0.0
        %1033 = vmatpush1.msra.mxu0 0.0
        %1034 = vmatprep.subr.mxu0 0.0
        %1035 = vmatpush1.msra.mxu0 0.0
        %1036 = vmatprep.subr.mxu0 0.0
        %1037 = vmatpush1.msra.mxu0 0.0
        %1038 = vmatprep.subr.mxu0 0.0
        %1039 = vmatpush1.msra.mxu0 0.0
        %1040 = vmatprep.subr.mxu0 0.0
        %1041 = vmatpush1.msra.mxu0 0.0
        %1042 = vmatprep.subr.mxu0 0.0
        %1043 = vmatpush1.msra.mxu0 0.0
        %1044 = vmatprep.subr.mxu0 0.0
        %1045 = vmatpush1.msra.mxu0 0.0
        %1046 = vmatprep.subr.mxu0 0.0
        %1047 = vmatpush1.msra.mxu0 0.0
        %1048 = vmatprep.subr.mxu0 0.0
        %1049 = vmatpush1.msra.mxu0 0.0
        %1050 = vmatprep.subr.mxu0 0.0
        %1051 = vmatpush1.msra.mxu0 0.0
        %1052 = vmatprep.mubr.f32.mxu0 0.0
        %1053 = vmatmul.mubr.f32.gmra.mrb[0].mxu0 %v983
        %v1054 = vpop.f32.mrb[0].mxu0
        %v1055 = vadd.f32 %v979, %v1054
        %v1056 = vpop.f32.mrb[0].mxu0
        %1057 = vdwg.mxu0
        %1059 = vset.pattern.permute.xlu0 0
        %1060 = vperm.xlu0 %1059, %v483
        %v1061 = vpop.permute.xlu0 %1060
        %v1063 = vadd.f32 %v1055, %v1061
        %v1065 = vcombine.high %v1063, %v1063
        %v1067 = vunpack.c.l.s4 1966171168
        %v1068 = vunpack.c.0.s8 %v1067
        %v1069 = vlaneseq
        %v1070 = vshrl.u32 %v1069, 7
        %v1071 = vsub.s32 %v1068, %v1070
        %v1072 = vrot.slane %v1063, %v1071
        %v1074 = vunpack.c.l.s4 1966171168
        %v1075 = vunpack.c.0.s8 %v1074
        %v1076 = vlaneseq
        %v1077 = vshrl.u32 %v1076, 7
        %v1078 = vsub.s32 %v1075, %v1077
        %v1079 = vrot.slane %v1065, %v1078
        %v1080 = vcombine.high %v1072, %v1072
        %v1081 = vcombine.high %v1079, %v1079
        %v1083 = vunpack.c.l.s4 1966171168
        %v1084 = vunpack.c.0.s8 %v1083
        %v1085 = vlaneseq
        %v1086 = vshrl.u32 %v1085, 7
        %v1087 = vsub.s32 %v1084, %v1086
        %v1088 = vrot.slane %v1072, %v1087
        %v1090 = vunpack.c.l.s4 1966171168
        %v1091 = vunpack.c.0.s8 %v1090
        %v1092 = vlaneseq
        %v1093 = vshrl.u32 %v1092, 7
        %v1094 = vsub.s32 %v1091, %v1093
        %v1095 = vrot.slane %v1079, %v1094
        %v1097 = vunpack.c.l.s4 1966171168
        %v1098 = vunpack.c.0.s8 %v1097
        %v1099 = vlaneseq
        %v1100 = vshrl.u32 %v1099, 7
        %v1101 = vsub.s32 %v1098, %v1100
        %v1102 = vrot.slane %v1080, %v1101
        %v1104 = vunpack.c.l.s4 1966171168
        %v1105 = vunpack.c.0.s8 %v1104
        %v1106 = vlaneseq
        %v1107 = vshrl.u32 %v1106, 7
        %v1108 = vsub.s32 %v1105, %v1107
        %v1109 = vrot.slane %v1081, %v1108
        %v1110 = vcombine.high %v1088, %v1088
        %v1111 = vcombine.high %v1095, %v1095
        %v1112 = vcombine.high %v1102, %v1102
        %v1113 = vcombine.high %v1109, %v1109
        %vm1122 = vcmask 122880
        %1123 = vst.msk [vmem:[%s469] sm:$0x1] %vm1122, %v1088
        %1124 = vst.msk [vmem:[%s469 + $0x4] sm:$0x1] %vm1122, %v1102
        %1125 = vst.msk [vmem:[%s469 + $0x8] sm:$0x1] %vm1122, %v1110
        %1126 = vst.msk [vmem:[%s469 + $0xc] sm:$0x1] %vm1122, %v1112
        %1127 = vst.msk [vmem:[%s469 + $0x10] sm:$0x1] %vm1122, %v1095
        %1128 = vst.msk [vmem:[%s469 + $0x14] sm:$0x1] %vm1122, %v1109
        %1129 = vst.msk [vmem:[%s469 + $0x18] sm:$0x1] %vm1122, %v1111
        %1130 = vst.msk [vmem:[%s469 + $0x1c] sm:$0x1] %vm1122, %v1113
        %v1131 = vld [vmem:[%s477 + $0x1] sm:$0x1]
        %v1132 = vld [vmem:[%s477 + $0x5] sm:$0x1]
        %v1133 = vld [vmem:[%s477 + $0x9] sm:$0x1]
        %v1134 = vld [vmem:[%s477 + $0xd] sm:$0x1]
        %v1135 = vmax.f32 %v1131, 0.0
        %v1136 = vmax.f32 %v1132, 0.0
        %v1137 = vmax.f32 %v1133, 0.0
        %v1138 = vmax.f32 %v1134, 0.0
        %v1143 = vrot.slane %v1136, 7
        %v1144 = vsel %vm500, %v1143, %v1135
        %v1145 = vrot.slane %v1137, 6
        %v1146 = vsel %vm503, %v1145, %v1144
        %v1147 = vrot.slane %v1138, 5
        %v1148 = vsel %vm506, %v1147, %v1146
        %v1149 = vsel %vm512, %v1148, 0
        %1151 = vmatprep.subr.mxu0 0.0
        %1152 = vmatpush1.msra.mxu0 %v1149
        %1153 = vmatprep.subr.mxu0 0.0
        %1154 = vmatpush1.msra.mxu0 0.0
        %1155 = vmatprep.subr.mxu0 0.0
        %1156 = vmatpush1.msra.mxu0 0.0
        %1157 = vmatprep.subr.mxu0 0.0
        %1158 = vmatpush1.msra.mxu0 0.0
        %1159 = vmatprep.subr.mxu0 0.0
        %1160 = vmatpush1.msra.mxu0 0.0
        %1161 = vmatprep.subr.mxu0 0.0
        %1162 = vmatpush1.msra.mxu0 0.0
        %1163 = vmatprep.subr.mxu0 0.0
        %1164 = vmatpush1.msra.mxu0 0.0
        %1165 = vmatprep.subr.mxu0 0.0
        %1166 = vmatpush1.msra.mxu0 0.0
        %1167 = vmatprep.subr.mxu0 0.0
        %1168 = vmatpush1.msra.mxu0 0.0
        %1169 = vmatprep.subr.mxu0 0.0
        %1170 = vmatpush1.msra.mxu0 0.0
        %1171 = vmatprep.subr.mxu0 0.0
        %1172 = vmatpush1.msra.mxu0 0.0
        %1173 = vmatprep.subr.mxu0 0.0
        %1174 = vmatpush1.msra.mxu0 0.0
        %1175 = vmatprep.subr.mxu0 0.0
        %1176 = vmatpush1.msra.mxu0 0.0
        %1177 = vmatprep.subr.mxu0 0.0
        %1178 = vmatpush1.msra.mxu0 0.0
        %1179 = vmatprep.subr.mxu0 0.0
        %1180 = vmatpush1.msra.mxu0 0.0
        %1181 = vmatprep.subr.mxu0 0.0
        %1182 = vmatpush1.msra.mxu0 0.0
        %1183 = vmatprep.subr.mxu0 0.0
        %1184 = vmatpush1.msra.mxu0 0.0
        %1185 = vmatprep.subr.mxu0 0.0
        %1186 = vmatpush1.msra.mxu0 0.0
        %1187 = vmatprep.subr.mxu0 0.0
        %1188 = vmatpush1.msra.mxu0 0.0
        %1189 = vmatprep.subr.mxu0 0.0
        %1190 = vmatpush1.msra.mxu0 0.0
        %1191 = vmatprep.subr.mxu0 0.0
        %1192 = vmatpush1.msra.mxu0 0.0
        %1193 = vmatprep.subr.mxu0 0.0
        %1194 = vmatpush1.msra.mxu0 0.0
        %1195 = vmatprep.subr.mxu0 0.0
        %1196 = vmatpush1.msra.mxu0 0.0
        %1197 = vmatprep.subr.mxu0 0.0
        %1198 = vmatpush1.msra.mxu0 0.0
        %1199 = vmatprep.subr.mxu0 0.0
        %1200 = vmatpush1.msra.mxu0 0.0
        %1201 = vmatprep.subr.mxu0 0.0
        %1202 = vmatpush1.msra.mxu0 0.0
        %1203 = vmatprep.subr.mxu0 0.0
        %1204 = vmatpush1.msra.mxu0 0.0
        %1205 = vmatprep.subr.mxu0 0.0
        %1206 = vmatpush1.msra.mxu0 0.0
        %1207 = vmatprep.subr.mxu0 0.0
        %1208 = vmatpush1.msra.mxu0 0.0
        %1209 = vmatprep.subr.mxu0 0.0
        %1210 = vmatpush1.msra.mxu0 0.0
        %1211 = vmatprep.subr.mxu0 0.0
        %1212 = vmatpush1.msra.mxu0 0.0
        %1213 = vmatprep.subr.mxu0 0.0
        %1214 = vmatpush1.msra.mxu0 0.0
        %1215 = vmatprep.mubr.f32.mxu0 0.0
        %1216 = vmatmul.mubr.f32.gmra.mrb[0].mxu0 %v510
        %v1217 = vpop.f32.mrb[0].mxu0
        %v1218 = vadd.f32 0.0, %v1217
        %v1219 = vpop.f32.mrb[0].mxu0
        %1220 = vdwg.mxu0
        %1221 = vmatprep.subr.mxu0 0.0
        %1222 = vmatpush1.msra.mxu0 %v1149
        %1223 = vmatprep.subr.mxu0 0.0
        %1224 = vmatpush1.msra.mxu0 0.0
        %1225 = vmatprep.subr.mxu0 0.0
        %1226 = vmatpush1.msra.mxu0 0.0
        %1227 = vmatprep.subr.mxu0 0.0
        %1228 = vmatpush1.msra.mxu0 0.0
        %1229 = vmatprep.subr.mxu0 0.0
        %1230 = vmatpush1.msra.mxu0 0.0
        %1231 = vmatprep.subr.mxu0 0.0
        %1232 = vmatpush1.msra.mxu0 0.0
        %1233 = vmatprep.subr.mxu0 0.0
        %1234 = vmatpush1.msra.mxu0 0.0
        %1235 = vmatprep.subr.mxu0 0.0
        %1236 = vmatpush1.msra.mxu0 0.0
        %1237 = vmatprep.subr.mxu0 0.0
        %1238 = vmatpush1.msra.mxu0 0.0
        %1239 = vmatprep.subr.mxu0 0.0
        %1240 = vmatpush1.msra.mxu0 0.0
        %1241 = vmatprep.subr.mxu0 0.0
        %1242 = vmatpush1.msra.mxu0 0.0
        %1243 = vmatprep.subr.mxu0 0.0
        %1244 = vmatpush1.msra.mxu0 0.0
        %1245 = vmatprep.subr.mxu0 0.0
        %1246 = vmatpush1.msra.mxu0 0.0
        %1247 = vmatprep.subr.mxu0 0.0
        %1248 = vmatpush1.msra.mxu0 0.0
        %1249 = vmatprep.subr.mxu0 0.0
        %1250 = vmatpush1.msra.mxu0 0.0
        %1251 = vmatprep.subr.mxu0 0.0
        %1252 = vmatpush1.msra.mxu0 0.0
        %1253 = vmatprep.subr.mxu0 0.0
        %1254 = vmatpush1.msra.mxu0 0.0
        %1255 = vmatprep.subr.mxu0 0.0
        %1256 = vmatpush1.msra.mxu0 0.0
        %1257 = vmatprep.subr.mxu0 0.0
        %1258 = vmatpush1.msra.mxu0 0.0
        %1259 = vmatprep.subr.mxu0 0.0
        %1260 = vmatpush1.msra.mxu0 0.0
        %1261 = vmatprep.subr.mxu0 0.0
        %1262 = vmatpush1.msra.mxu0 0.0
        %1263 = vmatprep.subr.mxu0 0.0
        %1264 = vmatpush1.msra.mxu0 0.0
        %1265 = vmatprep.subr.mxu0 0.0
        %1266 = vmatpush1.msra.mxu0 0.0
        %1267 = vmatprep.subr.mxu0 0.0
        %1268 = vmatpush1.msra.mxu0 0.0
        %1269 = vmatprep.subr.mxu0 0.0
        %1270 = vmatpush1.msra.mxu0 0.0
        %1271 = vmatprep.subr.mxu0 0.0
        %1272 = vmatpush1.msra.mxu0 0.0
        %1273 = vmatprep.subr.mxu0 0.0
        %1274 = vmatpush1.msra.mxu0 0.0
        %1275 = vmatprep.subr.mxu0 0.0
        %1276 = vmatpush1.msra.mxu0 0.0
        %1277 = vmatprep.subr.mxu0 0.0
        %1278 = vmatpush1.msra.mxu0 0.0
        %1279 = vmatprep.subr.mxu0 0.0
        %1280 = vmatpush1.msra.mxu0 0.0
        %1281 = vmatprep.subr.mxu0 0.0
        %1282 = vmatpush1.msra.mxu0 0.0
        %1283 = vmatprep.subr.mxu0 0.0
        %1284 = vmatpush1.msra.mxu0 0.0
        %1285 = vmatprep.mubr.f32.mxu0 0.0
        %1286 = vmatmul.mubr.f32.gmra.mrb[0].mxu0 %v586
        %v1287 = vpop.f32.mrb[0].mxu0
        %v1288 = vadd.f32 0.0, %v1287
        %v1289 = vpop.f32.mrb[0].mxu0
        %1290 = vdwg.mxu0
        %v1291 = vadd.f32 %v1218, %v1288
        %v1292 = vadd.f32 %v1291, %v662
        %v1294 = vsel %vm665, %v1288, 0
        %1296 = vmatprep.subr.mxu0 0.0
        %1297 = vmatpush1.msra.mxu0 %v484
        %1298 = vmatprep.subr.mxu0 0.0
        %1299 = vmatpush1.msra.mxu0 0.0
        %1300 = vmatprep.subr.mxu0 0.0
        %1301 = vmatpush1.msra.mxu0 0.0
        %1302 = vmatprep.subr.mxu0 0.0
        %1303 = vmatpush1.msra.mxu0 0.0
        %1304 = vmatprep.subr.mxu0 0.0
        %1305 = vmatpush1.msra.mxu0 0.0
        %1306 = vmatprep.subr.mxu0 0.0
        %1307 = vmatpush1.msra.mxu0 0.0
        %1308 = vmatprep.subr.mxu0 0.0
        %1309 = vmatpush1.msra.mxu0 0.0
        %1310 = vmatprep.subr.mxu0 0.0
        %1311 = vmatpush1.msra.mxu0 0.0
        %1312 = vmatprep.subr.mxu0 0.0
        %1313 = vmatpush1.msra.mxu0 0.0
        %1314 = vmatprep.subr.mxu0 0.0
        %1315 = vmatpush1.msra.mxu0 0.0
        %1316 = vmatprep.subr.mxu0 0.0
        %1317 = vmatpush1.msra.mxu0 0.0
        %1318 = vmatprep.subr.mxu0 0.0
        %1319 = vmatpush1.msra.mxu0 0.0
        %1320 = vmatprep.subr.mxu0 0.0
        %1321 = vmatpush1.msra.mxu0 0.0
        %1322 = vmatprep.subr.mxu0 0.0
        %1323 = vmatpush1.msra.mxu0 0.0
        %1324 = vmatprep.subr.mxu0 0.0
        %1325 = vmatpush1.msra.mxu0 0.0
        %1326 = vmatprep.subr.mxu0 0.0
        %1327 = vmatpush1.msra.mxu0 0.0
        %1328 = vmatprep.subr.mxu0 0.0
        %1329 = vmatpush1.msra.mxu0 0.0
        %1330 = vmatprep.subr.mxu0 0.0
        %1331 = vmatpush1.msra.mxu0 0.0
        %1332 = vmatprep.subr.mxu0 0.0
        %1333 = vmatpush1.msra.mxu0 0.0
        %1334 = vmatprep.subr.mxu0 0.0
        %1335 = vmatpush1.msra.mxu0 0.0
        %1336 = vmatprep.subr.mxu0 0.0
        %1337 = vmatpush1.msra.mxu0 0.0
        %1338 = vmatprep.subr.mxu0 0.0
        %1339 = vmatpush1.msra.mxu0 0.0
        %1340 = vmatprep.subr.mxu0 0.0
        %1341 = vmatpush1.msra.mxu0 0.0
        %1342 = vmatprep.subr.mxu0 0.0
        %1343 = vmatpush1.msra.mxu0 0.0
        %1344 = vmatprep.subr.mxu0 0.0
        %1345 = vmatpush1.msra.mxu0 0.0
        %1346 = vmatprep.subr.mxu0 0.0
        %1347 = vmatpush1.msra.mxu0 0.0
        %1348 = vmatprep.subr.mxu0 0.0
        %1349 = vmatpush1.msra.mxu0 0.0
        %1350 = vmatprep.subr.mxu0 0.0
        %1351 = vmatpush1.msra.mxu0 0.0
        %1352 = vmatprep.subr.mxu0 0.0
        %1353 = vmatpush1.msra.mxu0 0.0
        %1354 = vmatprep.subr.mxu0 0.0
        %1355 = vmatpush1.msra.mxu0 0.0
        %1356 = vmatprep.subr.mxu0 0.0
        %1357 = vmatpush1.msra.mxu0 0.0
        %1358 = vmatprep.subr.mxu0 0.0
        %1359 = vmatpush1.msra.mxu0 0.0
        %1360 = vmatprep.mubr.f32.mxu0 0.0
        %1361 = vmatmul.mubr.f32.gmra.mrb[0].mxu0 %v1294
        %v1362 = vpop.f32.mrb[0].mxu0
        %v1363 = vadd.f32 0.0, %v1362
        %v1364 = vpop.f32.mrb[0].mxu0
        %1365 = vdwg.mxu0
        %v1366 = vadd.f32 %v1218, %v1363
        %v1367 = vadd.f32 %v1366, %v662
        %v1368 = vmax.f32 %v1292, 0.0
        %v1369 = vmax.f32 %v1367, 0.0
        %v1371 = vsel %vm665, %v1369, 0
        %1373 = vmatprep.subr.mxu0 0.0
        %1374 = vmatpush1.msra.mxu0 %v486
        %1375 = vmatprep.subr.mxu0 0.0
        %1376 = vmatpush1.msra.mxu0 0.0
        %1377 = vmatprep.subr.mxu0 0.0
        %1378 = vmatpush1.msra.mxu0 0.0
        %1379 = vmatprep.subr.mxu0 0.0
        %1380 = vmatpush1.msra.mxu0 0.0
        %1381 = vmatprep.subr.mxu0 0.0
        %1382 = vmatpush1.msra.mxu0 0.0
        %1383 = vmatprep.subr.mxu0 0.0
        %1384 = vmatpush1.msra.mxu0 0.0
        %1385 = vmatprep.subr.mxu0 0.0
        %1386 = vmatpush1.msra.mxu0 0.0
        %1387 = vmatprep.subr.mxu0 0.0
        %1388 = vmatpush1.msra.mxu0 0.0
        %1389 = vmatprep.subr.mxu0 0.0
        %1390 = vmatpush1.msra.mxu0 0.0
        %1391 = vmatprep.subr.mxu0 0.0
        %1392 = vmatpush1.msra.mxu0 0.0
        %1393 = vmatprep.subr.mxu0 0.0
        %1394 = vmatpush1.msra.mxu0 0.0
        %1395 = vmatprep.subr.mxu0 0.0
        %1396 = vmatpush1.msra.mxu0 0.0
        %1397 = vmatprep.subr.mxu0 0.0
        %1398 = vmatpush1.msra.mxu0 0.0
        %1399 = vmatprep.subr.mxu0 0.0
        %1400 = vmatpush1.msra.mxu0 0.0
        %1401 = vmatprep.subr.mxu0 0.0
        %1402 = vmatpush1.msra.mxu0 0.0
        %1403 = vmatprep.subr.mxu0 0.0
        %1404 = vmatpush1.msra.mxu0 0.0
        %1405 = vmatprep.subr.mxu0 0.0
        %1406 = vmatpush1.msra.mxu0 0.0
        %1407 = vmatprep.subr.mxu0 0.0
        %1408 = vmatpush1.msra.mxu0 0.0
        %1409 = vmatprep.subr.mxu0 0.0
        %1410 = vmatpush1.msra.mxu0 0.0
        %1411 = vmatprep.subr.mxu0 0.0
        %1412 = vmatpush1.msra.mxu0 0.0
        %1413 = vmatprep.subr.mxu0 0.0
        %1414 = vmatpush1.msra.mxu0 0.0
        %1415 = vmatprep.subr.mxu0 0.0
        %1416 = vmatpush1.msra.mxu0 0.0
        %1417 = vmatprep.subr.mxu0 0.0
        %1418 = vmatpush1.msra.mxu0 0.0
        %1419 = vmatprep.subr.mxu0 0.0
        %1420 = vmatpush1.msra.mxu0 0.0
        %1421 = vmatprep.subr.mxu0 0.0
        %1422 = vmatpush1.msra.mxu0 0.0
        %1423 = vmatprep.subr.mxu0 0.0
        %1424 = vmatpush1.msra.mxu0 0.0
        %1425 = vmatprep.subr.mxu0 0.0
        %1426 = vmatpush1.msra.mxu0 0.0
        %1427 = vmatprep.subr.mxu0 0.0
        %1428 = vmatpush1.msra.mxu0 0.0
        %1429 = vmatprep.subr.mxu0 0.0
        %1430 = vmatpush1.msra.mxu0 0.0
        %1431 = vmatprep.subr.mxu0 0.0
        %1432 = vmatpush1.msra.mxu0 0.0
        %1433 = vmatprep.subr.mxu0 0.0
        %1434 = vmatpush1.msra.mxu0 0.0
        %1435 = vmatprep.subr.mxu0 0.0
        %1436 = vmatpush1.msra.mxu0 0.0
        %1437 = vmatprep.mubr.f32.mxu0 0.0
        %1438 = vmatmul.mubr.f32.gmra.mrb[0].mxu0 %v1371
        %v1439 = vpop.f32.mrb[0].mxu0
        %v1440 = vadd.f32 0.0, %v1439
        %v1441 = vpop.f32.mrb[0].mxu0
        %1442 = vdwg.mxu0
        %v1444 = vsel %vm665, %v1368, 0
        %1446 = vmatprep.subr.mxu0 0.0
        %1447 = vmatpush1.msra.mxu0 %v485
        %1448 = vmatprep.subr.mxu0 0.0
        %1449 = vmatpush1.msra.mxu0 0.0
        %1450 = vmatprep.subr.mxu0 0.0
        %1451 = vmatpush1.msra.mxu0 0.0
        %1452 = vmatprep.subr.mxu0 0.0
        %1453 = vmatpush1.msra.mxu0 0.0
        %1454 = vmatprep.subr.mxu0 0.0
        %1455 = vmatpush1.msra.mxu0 0.0
        %1456 = vmatprep.subr.mxu0 0.0
        %1457 = vmatpush1.msra.mxu0 0.0
        %1458 = vmatprep.subr.mxu0 0.0
        %1459 = vmatpush1.msra.mxu0 0.0
        %1460 = vmatprep.subr.mxu0 0.0
        %1461 = vmatpush1.msra.mxu0 0.0
        %1462 = vmatprep.subr.mxu0 0.0
        %1463 = vmatpush1.msra.mxu0 0.0
        %1464 = vmatprep.subr.mxu0 0.0
        %1465 = vmatpush1.msra.mxu0 0.0
        %1466 = vmatprep.subr.mxu0 0.0
        %1467 = vmatpush1.msra.mxu0 0.0
        %1468 = vmatprep.subr.mxu0 0.0
        %1469 = vmatpush1.msra.mxu0 0.0
        %1470 = vmatprep.subr.mxu0 0.0
        %1471 = vmatpush1.msra.mxu0 0.0
        %1472 = vmatprep.subr.mxu0 0.0
        %1473 = vmatpush1.msra.mxu0 0.0
        %1474 = vmatprep.subr.mxu0 0.0
        %1475 = vmatpush1.msra.mxu0 0.0
        %1476 = vmatprep.subr.mxu0 0.0
        %1477 = vmatpush1.msra.mxu0 0.0
        %1478 = vmatprep.subr.mxu0 0.0
        %1479 = vmatpush1.msra.mxu0 0.0
        %1480 = vmatprep.subr.mxu0 0.0
        %1481 = vmatpush1.msra.mxu0 0.0
        %1482 = vmatprep.subr.mxu0 0.0
        %1483 = vmatpush1.msra.mxu0 0.0
        %1484 = vmatprep.subr.mxu0 0.0
        %1485 = vmatpush1.msra.mxu0 0.0
        %1486 = vmatprep.subr.mxu0 0.0
        %1487 = vmatpush1.msra.mxu0 0.0
        %1488 = vmatprep.subr.mxu0 0.0
        %1489 = vmatpush1.msra.mxu0 0.0
        %1490 = vmatprep.subr.mxu0 0.0
        %1491 = vmatpush1.msra.mxu0 0.0
        %1492 = vmatprep.subr.mxu0 0.0
        %1493 = vmatpush1.msra.mxu0 0.0
        %1494 = vmatprep.subr.mxu0 0.0
        %1495 = vmatpush1.msra.mxu0 0.0
        %1496 = vmatprep.subr.mxu0 0.0
        %1497 = vmatpush1.msra.mxu0 0.0
        %1498 = vmatprep.subr.mxu0 0.0
        %1499 = vmatpush1.msra.mxu0 0.0
        %1500 = vmatprep.subr.mxu0 0.0
        %1501 = vmatpush1.msra.mxu0 0.0
        %1502 = vmatprep.subr.mxu0 0.0
        %1503 = vmatpush1.msra.mxu0 0.0
        %1504 = vmatprep.subr.mxu0 0.0
        %1505 = vmatpush1.msra.mxu0 0.0
        %1506 = vmatprep.subr.mxu0 0.0
        %1507 = vmatpush1.msra.mxu0 0.0
        %1508 = vmatprep.subr.mxu0 0.0
        %1509 = vmatpush1.msra.mxu0 0.0
        %1510 = vmatprep.mubr.f32.mxu0 0.0
        %1511 = vmatmul.mubr.f32.gmra.mrb[0].mxu0 %v1444
        %v1512 = vpop.f32.mrb[0].mxu0
        %v1513 = vadd.f32 %v1440, %v1512
        %v1514 = vpop.f32.mrb[0].mxu0
        %1515 = vdwg.mxu0
        %v1516 = vld [vmem:[%s415 + $0x1] sm:$0x1]
        %v1517 = vld [vmem:[%s415 + $0x5] sm:$0x1]
        %v1518 = vld [vmem:[%s415 + $0x9] sm:$0x1]
        %v1519 = vld [vmem:[%s415 + $0xd] sm:$0x1]
        %v1520 = vmax.f32 %v1516, 0.0
        %v1521 = vmax.f32 %v1517, 0.0
        %v1522 = vmax.f32 %v1518, 0.0
        %v1523 = vmax.f32 %v1519, 0.0
        %v1528 = vrot.slane %v1521, 7
        %v1529 = vsel %vm500, %v1528, %v1520
        %v1530 = vrot.slane %v1522, 6
        %v1531 = vsel %vm503, %v1530, %v1529
        %v1532 = vrot.slane %v1523, 5
        %v1533 = vsel %vm506, %v1532, %v1531
        %v1534 = vsel %vm512, %v1533, 0
        %1536 = vmatprep.subr.mxu0 0.0
        %1537 = vmatpush1.msra.mxu0 %v1534
        %1538 = vmatprep.subr.mxu0 0.0
        %1539 = vmatpush1.msra.mxu0 0.0
        %1540 = vmatprep.subr.mxu0 0.0
        %1541 = vmatpush1.msra.mxu0 0.0
        %1542 = vmatprep.subr.mxu0 0.0
        %1543 = vmatpush1.msra.mxu0 0.0
        %1544 = vmatprep.subr.mxu0 0.0
        %1545 = vmatpush1.msra.mxu0 0.0
        %1546 = vmatprep.subr.mxu0 0.0
        %1547 = vmatpush1.msra.mxu0 0.0
        %1548 = vmatprep.subr.mxu0 0.0
        %1549 = vmatpush1.msra.mxu0 0.0
        %1550 = vmatprep.subr.mxu0 0.0
        %1551 = vmatpush1.msra.mxu0 0.0
        %1552 = vmatprep.subr.mxu0 0.0
        %1553 = vmatpush1.msra.mxu0 0.0
        %1554 = vmatprep.subr.mxu0 0.0
        %1555 = vmatpush1.msra.mxu0 0.0
        %1556 = vmatprep.subr.mxu0 0.0
        %1557 = vmatpush1.msra.mxu0 0.0
        %1558 = vmatprep.subr.mxu0 0.0
        %1559 = vmatpush1.msra.mxu0 0.0
        %1560 = vmatprep.subr.mxu0 0.0
        %1561 = vmatpush1.msra.mxu0 0.0
        %1562 = vmatprep.subr.mxu0 0.0
        %1563 = vmatpush1.msra.mxu0 0.0
        %1564 = vmatprep.subr.mxu0 0.0
        %1565 = vmatpush1.msra.mxu0 0.0
        %1566 = vmatprep.subr.mxu0 0.0
        %1567 = vmatpush1.msra.mxu0 0.0
        %1568 = vmatprep.subr.mxu0 0.0
        %1569 = vmatpush1.msra.mxu0 0.0
        %1570 = vmatprep.subr.mxu0 0.0
        %1571 = vmatpush1.msra.mxu0 0.0
        %1572 = vmatprep.subr.mxu0 0.0
        %1573 = vmatpush1.msra.mxu0 0.0
        %1574 = vmatprep.subr.mxu0 0.0
        %1575 = vmatpush1.msra.mxu0 0.0
        %1576 = vmatprep.subr.mxu0 0.0
        %1577 = vmatpush1.msra.mxu0 0.0
        %1578 = vmatprep.subr.mxu0 0.0
        %1579 = vmatpush1.msra.mxu0 0.0
        %1580 = vmatprep.subr.mxu0 0.0
        %1581 = vmatpush1.msra.mxu0 0.0
        %1582 = vmatprep.subr.mxu0 0.0
        %1583 = vmatpush1.msra.mxu0 0.0
        %1584 = vmatprep.subr.mxu0 0.0
        %1585 = vmatpush1.msra.mxu0 0.0
        %1586 = vmatprep.subr.mxu0 0.0
        %1587 = vmatpush1.msra.mxu0 0.0
        %1588 = vmatprep.subr.mxu0 0.0
        %1589 = vmatpush1.msra.mxu0 0.0
        %1590 = vmatprep.subr.mxu0 0.0
        %1591 = vmatpush1.msra.mxu0 0.0
        %1592 = vmatprep.subr.mxu0 0.0
        %1593 = vmatpush1.msra.mxu0 0.0
        %1594 = vmatprep.subr.mxu0 0.0
        %1595 = vmatpush1.msra.mxu0 0.0
        %1596 = vmatprep.subr.mxu0 0.0
        %1597 = vmatpush1.msra.mxu0 0.0
        %1598 = vmatprep.subr.mxu0 0.0
        %1599 = vmatpush1.msra.mxu0 0.0
        %1600 = vmatprep.mubr.f32.mxu0 0.0
        %1601 = vmatmul.mubr.f32.gmra.mrb[0].mxu0 %v908
        %v1602 = vpop.f32.mrb[0].mxu0
        %v1603 = vadd.f32 0.0, %v1602
        %v1604 = vpop.f32.mrb[0].mxu0
        %1605 = vdwg.mxu0
        %v1607 = vsel %vm512, %v1513, 0
        %1609 = vmatprep.subr.mxu0 0.0
        %1610 = vmatpush1.msra.mxu0 %v1607
        %1611 = vmatprep.subr.mxu0 0.0
        %1612 = vmatpush1.msra.mxu0 0.0
        %1613 = vmatprep.subr.mxu0 0.0
        %1614 = vmatpush1.msra.mxu0 0.0
        %1615 = vmatprep.subr.mxu0 0.0
        %1616 = vmatpush1.msra.mxu0 0.0
        %1617 = vmatprep.subr.mxu0 0.0
        %1618 = vmatpush1.msra.mxu0 0.0
        %1619 = vmatprep.subr.mxu0 0.0
        %1620 = vmatpush1.msra.mxu0 0.0
        %1621 = vmatprep.subr.mxu0 0.0
        %1622 = vmatpush1.msra.mxu0 0.0
        %1623 = vmatprep.subr.mxu0 0.0
        %1624 = vmatpush1.msra.mxu0 0.0
        %1625 = vmatprep.subr.mxu0 0.0
        %1626 = vmatpush1.msra.mxu0 0.0
        %1627 = vmatprep.subr.mxu0 0.0
        %1628 = vmatpush1.msra.mxu0 0.0
        %1629 = vmatprep.subr.mxu0 0.0
        %1630 = vmatpush1.msra.mxu0 0.0
        %1631 = vmatprep.subr.mxu0 0.0
        %1632 = vmatpush1.msra.mxu0 0.0
        %1633 = vmatprep.subr.mxu0 0.0
        %1634 = vmatpush1.msra.mxu0 0.0
        %1635 = vmatprep.subr.mxu0 0.0
        %1636 = vmatpush1.msra.mxu0 0.0
        %1637 = vmatprep.subr.mxu0 0.0
        %1638 = vmatpush1.msra.mxu0 0.0
        %1639 = vmatprep.subr.mxu0 0.0
        %1640 = vmatpush1.msra.mxu0 0.0
        %1641 = vmatprep.subr.mxu0 0.0
        %1642 = vmatpush1.msra.mxu0 0.0
        %1643 = vmatprep.subr.mxu0 0.0
        %1644 = vmatpush1.msra.mxu0 0.0
        %1645 = vmatprep.subr.mxu0 0.0
        %1646 = vmatpush1.msra.mxu0 0.0
        %1647 = vmatprep.subr.mxu0 0.0
        %1648 = vmatpush1.msra.mxu0 0.0
        %1649 = vmatprep.subr.mxu0 0.0
        %1650 = vmatpush1.msra.mxu0 0.0
        %1651 = vmatprep.subr.mxu0 0.0
        %1652 = vmatpush1.msra.mxu0 0.0
        %1653 = vmatprep.subr.mxu0 0.0
        %1654 = vmatpush1.msra.mxu0 0.0
        %1655 = vmatprep.subr.mxu0 0.0
        %1656 = vmatpush1.msra.mxu0 0.0
        %1657 = vmatprep.subr.mxu0 0.0
        %1658 = vmatpush1.msra.mxu0 0.0
        %1659 = vmatprep.subr.mxu0 0.0
        %1660 = vmatpush1.msra.mxu0 0.0
        %1661 = vmatprep.subr.mxu0 0.0
        %1662 = vmatpush1.msra.mxu0 0.0
        %1663 = vmatprep.subr.mxu0 0.0
        %1664 = vmatpush1.msra.mxu0 0.0
        %1665 = vmatprep.subr.mxu0 0.0
        %1666 = vmatpush1.msra.mxu0 0.0
        %1667 = vmatprep.subr.mxu0 0.0
        %1668 = vmatpush1.msra.mxu0 0.0
        %1669 = vmatprep.subr.mxu0 0.0
        %1670 = vmatpush1.msra.mxu0 0.0
        %1671 = vmatprep.subr.mxu0 0.0
        %1672 = vmatpush1.msra.mxu0 0.0
        %1673 = vmatprep.mubr.f32.mxu0 0.0
        %1674 = vmatmul.mubr.f32.gmra.mrb[0].mxu0 %v983
        %v1675 = vpop.f32.mrb[0].mxu0
        %v1676 = vadd.f32 %v1603, %v1675
        %v1677 = vpop.f32.mrb[0].mxu0
        %1678 = vdwg.mxu0
        %v1679 = vadd.f32 %v1676, %v1061
        %v1681 = vcombine.high %v1679, %v1679
        %v1683 = vunpack.c.l.s4 1966171168
        %v1684 = vunpack.c.0.s8 %v1683
        %v1685 = vlaneseq
        %v1686 = vshrl.u32 %v1685, 7
        %v1687 = vsub.s32 %v1684, %v1686
        %v1688 = vrot.slane %v1679, %v1687
        %v1690 = vunpack.c.l.s4 1966171168
        %v1691 = vunpack.c.0.s8 %v1690
        %v1692 = vlaneseq
        %v1693 = vshrl.u32 %v1692, 7
        %v1694 = vsub.s32 %v1691, %v1693
        %v1695 = vrot.slane %v1681, %v1694
        %v1696 = vcombine.high %v1688, %v1688
        %v1697 = vcombine.high %v1695, %v1695
        %v1699 = vunpack.c.l.s4 1966171168
        %v1700 = vunpack.c.0.s8 %v1699
        %v1701 = vlaneseq
        %v1702 = vshrl.u32 %v1701, 7
        %v1703 = vsub.s32 %v1700, %v1702
        %v1704 = vrot.slane %v1688, %v1703
        %v1706 = vunpack.c.l.s4 1966171168
        %v1707 = vunpack.c.0.s8 %v1706
        %v1708 = vlaneseq
        %v1709 = vshrl.u32 %v1708, 7
        %v1710 = vsub.s32 %v1707, %v1709
        %v1711 = vrot.slane %v1695, %v1710
        %v1713 = vunpack.c.l.s4 1966171168
        %v1714 = vunpack.c.0.s8 %v1713
        %v1715 = vlaneseq
        %v1716 = vshrl.u32 %v1715, 7
        %v1717 = vsub.s32 %v1714, %v1716
        %v1718 = vrot.slane %v1696, %v1717
        %v1720 = vunpack.c.l.s4 1966171168
        %v1721 = vunpack.c.0.s8 %v1720
        %v1722 = vlaneseq
        %v1723 = vshrl.u32 %v1722, 7
        %v1724 = vsub.s32 %v1721, %v1723
        %v1725 = vrot.slane %v1697, %v1724
        %v1726 = vcombine.high %v1704, %v1704
        %v1727 = vcombine.high %v1711, %v1711
        %v1728 = vcombine.high %v1718, %v1718
        %v1729 = vcombine.high %v1725, %v1725
        %1738 = vst.msk [vmem:[%s469 + $0x1] sm:$0x1] %vm1122, %v1704
        %1739 = vst.msk [vmem:[%s469 + $0x5] sm:$0x1] %vm1122, %v1718
        %1740 = vst.msk [vmem:[%s469 + $0x9] sm:$0x1] %vm1122, %v1726
        %1741 = vst.msk [vmem:[%s469 + $0xd] sm:$0x1] %vm1122, %v1728
        %1742 = vst.msk [vmem:[%s469 + $0x11] sm:$0x1] %vm1122, %v1711
        %1743 = vst.msk [vmem:[%s469 + $0x15] sm:$0x1] %vm1122, %v1725
        %1744 = vst.msk [vmem:[%s469 + $0x19] sm:$0x1] %vm1122, %v1727
        %1745 = vst.msk [vmem:[%s469 + $0x1d] sm:$0x1] %vm1122, %v1729
        %v1746 = vld [vmem:[%s477 + $0x2] sm:$0x1]
        %v1747 = vld [vmem:[%s477 + $0x6] sm:$0x1]
        %v1748 = vld [vmem:[%s477 + $0xa] sm:$0x1]
        %v1749 = vld [vmem:[%s477 + $0xe] sm:$0x1]
        %v1750 = vmax.f32 %v1746, 0.0
        %v1751 = vmax.f32 %v1747, 0.0
        %v1752 = vmax.f32 %v1748, 0.0
        %v1753 = vmax.f32 %v1749, 0.0
        %v1758 = vrot.slane %v1751, 7
        %v1759 = vsel %vm500, %v1758, %v1750
        %v1760 = vrot.slane %v1752, 6
        %v1761 = vsel %vm503, %v1760, %v1759
        %v1762 = vrot.slane %v1753, 5
        %v1763 = vsel %vm506, %v1762, %v1761
        %v1764 = vsel %vm512, %v1763, 0
        %1766 = vmatprep.subr.mxu0 0.0
        %1767 = vmatpush1.msra.mxu0 %v1764
        %1768 = vmatprep.subr.mxu0 0.0
        %1769 = vmatpush1.msra.mxu0 0.0
        %1770 = vmatprep.subr.mxu0 0.0
        %1771 = vmatpush1.msra.mxu0 0.0
        %1772 = vmatprep.subr.mxu0 0.0
        %1773 = vmatpush1.msra.mxu0 0.0
        %1774 = vmatprep.subr.mxu0 0.0
        %1775 = vmatpush1.msra.mxu0 0.0
        %1776 = vmatprep.subr.mxu0 0.0
        %1777 = vmatpush1.msra.mxu0 0.0
        %1778 = vmatprep.subr.mxu0 0.0
        %1779 = vmatpush1.msra.mxu0 0.0
        %1780 = vmatprep.subr.mxu0 0.0
        %1781 = vmatpush1.msra.mxu0 0.0
        %1782 = vmatprep.subr.mxu0 0.0
        %1783 = vmatpush1.msra.mxu0 0.0
        %1784 = vmatprep.subr.mxu0 0.0
        %1785 = vmatpush1.msra.mxu0 0.0
        %1786 = vmatprep.subr.mxu0 0.0
        %1787 = vmatpush1.msra.mxu0 0.0
        %1788 = vmatprep.subr.mxu0 0.0
        %1789 = vmatpush1.msra.mxu0 0.0
        %1790 = vmatprep.subr.mxu0 0.0
        %1791 = vmatpush1.msra.mxu0 0.0
        %1792 = vmatprep.subr.mxu0 0.0
        %1793 = vmatpush1.msra.mxu0 0.0
        %1794 = vmatprep.subr.mxu0 0.0
        %1795 = vmatpush1.msra.mxu0 0.0
        %1796 = vmatprep.subr.mxu0 0.0
        %1797 = vmatpush1.msra.mxu0 0.0
        %1798 = vmatprep.subr.mxu0 0.0
        %1799 = vmatpush1.msra.mxu0 0.0
        %1800 = vmatprep.subr.mxu0 0.0
        %1801 = vmatpush1.msra.mxu0 0.0
        %1802 = vmatprep.subr.mxu0 0.0
        %1803 = vmatpush1.msra.mxu0 0.0
        %1804 = vmatprep.subr.mxu0 0.0
        %1805 = vmatpush1.msra.mxu0 0.0
        %1806 = vmatprep.subr.mxu0 0.0
        %1807 = vmatpush1.msra.mxu0 0.0
        %1808 = vmatprep.subr.mxu0 0.0
        %1809 = vmatpush1.msra.mxu0 0.0
        %1810 = vmatprep.subr.mxu0 0.0
        %1811 = vmatpush1.msra.mxu0 0.0
        %1812 = vmatprep.subr.mxu0 0.0
        %1813 = vmatpush1.msra.mxu0 0.0
        %1814 = vmatprep.subr.mxu0 0.0
        %1815 = vmatpush1.msra.mxu0 0.0
        %1816 = vmatprep.subr.mxu0 0.0
        %1817 = vmatpush1.msra.mxu0 0.0
        %1818 = vmatprep.subr.mxu0 0.0
        %1819 = vmatpush1.msra.mxu0 0.0
        %1820 = vmatprep.subr.mxu0 0.0
        %1821 = vmatpush1.msra.mxu0 0.0
        %1822 = vmatprep.subr.mxu0 0.0
        %1823 = vmatpush1.msra.mxu0 0.0
        %1824 = vmatprep.subr.mxu0 0.0
        %1825 = vmatpush1.msra.mxu0 0.0
        %1826 = vmatprep.subr.mxu0 0.0
        %1827 = vmatpush1.msra.mxu0 0.0
        %1828 = vmatprep.subr.mxu0 0.0
        %1829 = vmatpush1.msra.mxu0 0.0
        %1830 = vmatprep.mubr.f32.mxu0 0.0
        %1831 = vmatmul.mubr.f32.gmra.mrb[0].mxu0 %v510
        %v1832 = vpop.f32.mrb[0].mxu0
        %v1833 = vadd.f32 0.0, %v1832
        %v1834 = vpop.f32.mrb[0].mxu0
        %1835 = vdwg.mxu0
        %1836 = vmatprep.subr.mxu0 0.0
        %1837 = vmatpush1.msra.mxu0 %v1764
        %1838 = vmatprep.subr.mxu0 0.0
        %1839 = vmatpush1.msra.mxu0 0.0
        %1840 = vmatprep.subr.mxu0 0.0
        %1841 = vmatpush1.msra.mxu0 0.0
        %1842 = vmatprep.subr.mxu0 0.0
        %1843 = vmatpush1.msra.mxu0 0.0
        %1844 = vmatprep.subr.mxu0 0.0
        %1845 = vmatpush1.msra.mxu0 0.0
        %1846 = vmatprep.subr.mxu0 0.0
        %1847 = vmatpush1.msra.mxu0 0.0
        %1848 = vmatprep.subr.mxu0 0.0
        %1849 = vmatpush1.msra.mxu0 0.0
        %1850 = vmatprep.subr.mxu0 0.0
        %1851 = vmatpush1.msra.mxu0 0.0
        %1852 = vmatprep.subr.mxu0 0.0
        %1853 = vmatpush1.msra.mxu0 0.0
        %1854 = vmatprep.subr.mxu0 0.0
        %1855 = vmatpush1.msra.mxu0 0.0
        %1856 = vmatprep.subr.mxu0 0.0
        %1857 = vmatpush1.msra.mxu0 0.0
        %1858 = vmatprep.subr.mxu0 0.0
        %1859 = vmatpush1.msra.mxu0 0.0
        %1860 = vmatprep.subr.mxu0 0.0
        %1861 = vmatpush1.msra.mxu0 0.0
        %1862 = vmatprep.subr.mxu0 0.0
        %1863 = vmatpush1.msra.mxu0 0.0
        %1864 = vmatprep.subr.mxu0 0.0
        %1865 = vmatpush1.msra.mxu0 0.0
        %1866 = vmatprep.subr.mxu0 0.0
        %1867 = vmatpush1.msra.mxu0 0.0
        %1868 = vmatprep.subr.mxu0 0.0
        %1869 = vmatpush1.msra.mxu0 0.0
        %1870 = vmatprep.subr.mxu0 0.0
        %1871 = vmatpush1.msra.mxu0 0.0
        %1872 = vmatprep.subr.mxu0 0.0
        %1873 = vmatpush1.msra.mxu0 0.0
        %1874 = vmatprep.subr.mxu0 0.0
        %1875 = vmatpush1.msra.mxu0 0.0
        %1876 = vmatprep.subr.mxu0 0.0
        %1877 = vmatpush1.msra.mxu0 0.0
        %1878 = vmatprep.subr.mxu0 0.0
        %1879 = vmatpush1.msra.mxu0 0.0
        %1880 = vmatprep.subr.mxu0 0.0
        %1881 = vmatpush1.msra.mxu0 0.0
        %1882 = vmatprep.subr.mxu0 0.0
        %1883 = vmatpush1.msra.mxu0 0.0
        %1884 = vmatprep.subr.mxu0 0.0
        %1885 = vmatpush1.msra.mxu0 0.0
        %1886 = vmatprep.subr.mxu0 0.0
        %1887 = vmatpush1.msra.mxu0 0.0
        %1888 = vmatprep.subr.mxu0 0.0
        %1889 = vmatpush1.msra.mxu0 0.0
        %1890 = vmatprep.subr.mxu0 0.0
        %1891 = vmatpush1.msra.mxu0 0.0
        %1892 = vmatprep.subr.mxu0 0.0
        %1893 = vmatpush1.msra.mxu0 0.0
        %1894 = vmatprep.subr.mxu0 0.0
        %1895 = vmatpush1.msra.mxu0 0.0
        %1896 = vmatprep.subr.mxu0 0.0
        %1897 = vmatpush1.msra.mxu0 0.0
        %1898 = vmatprep.subr.mxu0 0.0
        %1899 = vmatpush1.msra.mxu0 0.0
        %1900 = vmatprep.mubr.f32.mxu0 0.0
        %1901 = vmatmul.mubr.f32.gmra.mrb[0].mxu0 %v586
        %v1902 = vpop.f32.mrb[0].mxu0
        %v1903 = vadd.f32 0.0, %v1902
        %v1904 = vpop.f32.mrb[0].mxu0
        %1905 = vdwg.mxu0
        %v1906 = vadd.f32 %v1833, %v1903
        %v1907 = vadd.f32 %v1906, %v662
        %v1909 = vsel %vm665, %v1903, 0
        %1911 = vmatprep.subr.mxu0 0.0
        %1912 = vmatpush1.msra.mxu0 %v484
        %1913 = vmatprep.subr.mxu0 0.0
        %1914 = vmatpush1.msra.mxu0 0.0
        %1915 = vmatprep.subr.mxu0 0.0
        %1916 = vmatpush1.msra.mxu0 0.0
        %1917 = vmatprep.subr.mxu0 0.0
        %1918 = vmatpush1.msra.mxu0 0.0
        %1919 = vmatprep.subr.mxu0 0.0
        %1920 = vmatpush1.msra.mxu0 0.0
        %1921 = vmatprep.subr.mxu0 0.0
        %1922 = vmatpush1.msra.mxu0 0.0
        %1923 = vmatprep.subr.mxu0 0.0
        %1924 = vmatpush1.msra.mxu0 0.0
        %1925 = vmatprep.subr.mxu0 0.0
        %1926 = vmatpush1.msra.mxu0 0.0
        %1927 = vmatprep.subr.mxu0 0.0
        %1928 = vmatpush1.msra.mxu0 0.0
        %1929 = vmatprep.subr.mxu0 0.0
        %1930 = vmatpush1.msra.mxu0 0.0
        %1931 = vmatprep.subr.mxu0 0.0
        %1932 = vmatpush1.msra.mxu0 0.0
        %1933 = vmatprep.subr.mxu0 0.0
        %1934 = vmatpush1.msra.mxu0 0.0
        %1935 = vmatprep.subr.mxu0 0.0
        %1936 = vmatpush1.msra.mxu0 0.0
        %1937 = vmatprep.subr.mxu0 0.0
        %1938 = vmatpush1.msra.mxu0 0.0
        %1939 = vmatprep.subr.mxu0 0.0
        %1940 = vmatpush1.msra.mxu0 0.0
        %1941 = vmatprep.subr.mxu0 0.0
        %1942 = vmatpush1.msra.mxu0 0.0
        %1943 = vmatprep.subr.mxu0 0.0
        %1944 = vmatpush1.msra.mxu0 0.0
        %1945 = vmatprep.subr.mxu0 0.0
        %1946 = vmatpush1.msra.mxu0 0.0
        %1947 = vmatprep.subr.mxu0 0.0
        %1948 = vmatpush1.msra.mxu0 0.0
        %1949 = vmatprep.subr.mxu0 0.0
        %1950 = vmatpush1.msra.mxu0 0.0
        %1951 = vmatprep.subr.mxu0 0.0
        %1952 = vmatpush1.msra.mxu0 0.0
        %1953 = vmatprep.subr.mxu0 0.0
        %1954 = vmatpush1.msra.mxu0 0.0
        %1955 = vmatprep.subr.mxu0 0.0
        %1956 = vmatpush1.msra.mxu0 0.0
        %1957 = vmatprep.subr.mxu0 0.0
        %1958 = vmatpush1.msra.mxu0 0.0
        %1959 = vmatprep.subr.mxu0 0.0
        %1960 = vmatpush1.msra.mxu0 0.0
        %1961 = vmatprep.subr.mxu0 0.0
        %1962 = vmatpush1.msra.mxu0 0.0
        %1963 = vmatprep.subr.mxu0 0.0
        %1964 = vmatpush1.msra.mxu0 0.0
        %1965 = vmatprep.subr.mxu0 0.0
        %1966 = vmatpush1.msra.mxu0 0.0
        %1967 = vmatprep.subr.mxu0 0.0
        %1968 = vmatpush1.msra.mxu0 0.0
        %1969 = vmatprep.subr.mxu0 0.0
        %1970 = vmatpush1.msra.mxu0 0.0
        %1971 = vmatprep.subr.mxu0 0.0
        %1972 = vmatpush1.msra.mxu0 0.0
        %1973 = vmatprep.subr.mxu0 0.0
        %1974 = vmatpush1.msra.mxu0 0.0
        %1975 = vmatprep.mubr.f32.mxu0 0.0
        %1976 = vmatmul.mubr.f32.gmra.mrb[0].mxu0 %v1909
        %v1977 = vpop.f32.mrb[0].mxu0
        %v1978 = vadd.f32 0.0, %v1977
        %v1979 = vpop.f32.mrb[0].mxu0
        %1980 = vdwg.mxu0
        %v1981 = vadd.f32 %v1833, %v1978
        %v1982 = vadd.f32 %v1981, %v662
        %v1983 = vmax.f32 %v1907, 0.0
        %v1984 = vmax.f32 %v1982, 0.0
        %v1986 = vsel %vm665, %v1984, 0
        %1988 = vmatprep.subr.mxu0 0.0
        %1989 = vmatpush1.msra.mxu0 %v486
        %1990 = vmatprep.subr.mxu0 0.0
        %1991 = vmatpush1.msra.mxu0 0.0
        %1992 = vmatprep.subr.mxu0 0.0
        %1993 = vmatpush1.msra.mxu0 0.0
        %1994 = vmatprep.subr.mxu0 0.0
        %1995 = vmatpush1.msra.mxu0 0.0
        %1996 = vmatprep.subr.mxu0 0.0
        %1997 = vmatpush1.msra.mxu0 0.0
        %1998 = vmatprep.subr.mxu0 0.0
        %1999 = vmatpush1.msra.mxu0 0.0
        %2000 = vmatprep.subr.mxu0 0.0
        %2001 = vmatpush1.msra.mxu0 0.0
        %2002 = vmatprep.subr.mxu0 0.0
        %2003 = vmatpush1.msra.mxu0 0.0
        %2004 = vmatprep.subr.mxu0 0.0
        %2005 = vmatpush1.msra.mxu0 0.0
        %2006 = vmatprep.subr.mxu0 0.0
        %2007 = vmatpush1.msra.mxu0 0.0
        %2008 = vmatprep.subr.mxu0 0.0
        %2009 = vmatpush1.msra.mxu0 0.0
        %2010 = vmatprep.subr.mxu0 0.0
        %2011 = vmatpush1.msra.mxu0 0.0
        %2012 = vmatprep.subr.mxu0 0.0
        %2013 = vmatpush1.msra.mxu0 0.0
        %2014 = vmatprep.subr.mxu0 0.0
        %2015 = vmatpush1.msra.mxu0 0.0
        %2016 = vmatprep.subr.mxu0 0.0
        %2017 = vmatpush1.msra.mxu0 0.0
        %2018 = vmatprep.subr.mxu0 0.0
        %2019 = vmatpush1.msra.mxu0 0.0
        %2020 = vmatprep.subr.mxu0 0.0
        %2021 = vmatpush1.msra.mxu0 0.0
        %2022 = vmatprep.subr.mxu0 0.0
        %2023 = vmatpush1.msra.mxu0 0.0
        %2024 = vmatprep.subr.mxu0 0.0
        %2025 = vmatpush1.msra.mxu0 0.0
        %2026 = vmatprep.subr.mxu0 0.0
        %2027 = vmatpush1.msra.mxu0 0.0
        %2028 = vmatprep.subr.mxu0 0.0
        %2029 = vmatpush1.msra.mxu0 0.0
        %2030 = vmatprep.subr.mxu0 0.0
        %2031 = vmatpush1.msra.mxu0 0.0
        %2032 = vmatprep.subr.mxu0 0.0
        %2033 = vmatpush1.msra.mxu0 0.0
        %2034 = vmatprep.subr.mxu0 0.0
        %2035 = vmatpush1.msra.mxu0 0.0
        %2036 = vmatprep.subr.mxu0 0.0
        %2037 = vmatpush1.msra.mxu0 0.0
        %2038 = vmatprep.subr.mxu0 0.0
        %2039 = vmatpush1.msra.mxu0 0.0
        %2040 = vmatprep.subr.mxu0 0.0
        %2041 = vmatpush1.msra.mxu0 0.0
        %2042 = vmatprep.subr.mxu0 0.0
        %2043 = vmatpush1.msra.mxu0 0.0
        %2044 = vmatprep.subr.mxu0 0.0
        %2045 = vmatpush1.msra.mxu0 0.0
        %2046 = vmatprep.subr.mxu0 0.0
        %2047 = vmatpush1.msra.mxu0 0.0
        %2048 = vmatprep.subr.mxu0 0.0
        %2049 = vmatpush1.msra.mxu0 0.0
        %2050 = vmatprep.subr.mxu0 0.0
        %2051 = vmatpush1.msra.mxu0 0.0
        %2052 = vmatprep.mubr.f32.mxu0 0.0
        %2053 = vmatmul.mubr.f32.gmra.mrb[0].mxu0 %v1986
        %v2054 = vpop.f32.mrb[0].mxu0
        %v2055 = vadd.f32 0.0, %v2054
        %v2056 = vpop.f32.mrb[0].mxu0
        %2057 = vdwg.mxu0
        %v2059 = vsel %vm665, %v1983, 0
        %2061 = vmatprep.subr.mxu0 0.0
        %2062 = vmatpush1.msra.mxu0 %v485
        %2063 = vmatprep.subr.mxu0 0.0
        %2064 = vmatpush1.msra.mxu0 0.0
        %2065 = vmatprep.subr.mxu0 0.0
        %2066 = vmatpush1.msra.mxu0 0.0
        %2067 = vmatprep.subr.mxu0 0.0
        %2068 = vmatpush1.msra.mxu0 0.0
        %2069 = vmatprep.subr.mxu0 0.0
        %2070 = vmatpush1.msra.mxu0 0.0
        %2071 = vmatprep.subr.mxu0 0.0
        %2072 = vmatpush1.msra.mxu0 0.0
        %2073 = vmatprep.subr.mxu0 0.0
        %2074 = vmatpush1.msra.mxu0 0.0
        %2075 = vmatprep.subr.mxu0 0.0
        %2076 = vmatpush1.msra.mxu0 0.0
        %2077 = vmatprep.subr.mxu0 0.0
        %2078 = vmatpush1.msra.mxu0 0.0
        %2079 = vmatprep.subr.mxu0 0.0
        %2080 = vmatpush1.msra.mxu0 0.0
        %2081 = vmatprep.subr.mxu0 0.0
        %2082 = vmatpush1.msra.mxu0 0.0
        %2083 = vmatprep.subr.mxu0 0.0
        %2084 = vmatpush1.msra.mxu0 0.0
        %2085 = vmatprep.subr.mxu0 0.0
        %2086 = vmatpush1.msra.mxu0 0.0
        %2087 = vmatprep.subr.mxu0 0.0
        %2088 = vmatpush1.msra.mxu0 0.0
        %2089 = vmatprep.subr.mxu0 0.0
        %2090 = vmatpush1.msra.mxu0 0.0
        %2091 = vmatprep.subr.mxu0 0.0
        %2092 = vmatpush1.msra.mxu0 0.0
        %2093 = vmatprep.subr.mxu0 0.0
        %2094 = vmatpush1.msra.mxu0 0.0
        %2095 = vmatprep.subr.mxu0 0.0
        %2096 = vmatpush1.msra.mxu0 0.0
        %2097 = vmatprep.subr.mxu0 0.0
        %2098 = vmatpush1.msra.mxu0 0.0
        %2099 = vmatprep.subr.mxu0 0.0
        %2100 = vmatpush1.msra.mxu0 0.0
        %2101 = vmatprep.subr.mxu0 0.0
        %2102 = vmatpush1.msra.mxu0 0.0
        %2103 = vmatprep.subr.mxu0 0.0
        %2104 = vmatpush1.msra.mxu0 0.0
        %2105 = vmatprep.subr.mxu0 0.0
        %2106 = vmatpush1.msra.mxu0 0.0
        %2107 = vmatprep.subr.mxu0 0.0
        %2108 = vmatpush1.msra.mxu0 0.0
        %2109 = vmatprep.subr.mxu0 0.0
        %2110 = vmatpush1.msra.mxu0 0.0
        %2111 = vmatprep.subr.mxu0 0.0
        %2112 = vmatpush1.msra.mxu0 0.0
        %2113 = vmatprep.subr.mxu0 0.0
        %2114 = vmatpush1.msra.mxu0 0.0
        %2115 = vmatprep.subr.mxu0 0.0
        %2116 = vmatpush1.msra.mxu0 0.0
        %2117 = vmatprep.subr.mxu0 0.0
        %2118 = vmatpush1.msra.mxu0 0.0
        %2119 = vmatprep.subr.mxu0 0.0
        %2120 = vmatpush1.msra.mxu0 0.0
        %2121 = vmatprep.subr.mxu0 0.0
        %2122 = vmatpush1.msra.mxu0 0.0
        %2123 = vmatprep.subr.mxu0 0.0
        %2124 = vmatpush1.msra.mxu0 0.0
        %2125 = vmatprep.mubr.f32.mxu0 0.0
        %2126 = vmatmul.mubr.f32.gmra.mrb[0].mxu0 %v2059
        %v2127 = vpop.f32.mrb[0].mxu0
        %v2128 = vadd.f32 %v2055, %v2127
        %v2129 = vpop.f32.mrb[0].mxu0
        %2130 = vdwg.mxu0
        %v2131 = vld [vmem:[%s415 + $0x2] sm:$0x1]
        %v2132 = vld [vmem:[%s415 + $0x6] sm:$0x1]
        %v2133 = vld [vmem:[%s415 + $0xa] sm:$0x1]
        %v2134 = vld [vmem:[%s415 + $0xe] sm:$0x1]
        %v2135 = vmax.f32 %v2131, 0.0
        %v2136 = vmax.f32 %v2132, 0.0
        %v2137 = vmax.f32 %v2133, 0.0
        %v2138 = vmax.f32 %v2134, 0.0
        %v2143 = vrot.slane %v2136, 7
        %v2144 = vsel %vm500, %v2143, %v2135
        %v2145 = vrot.slane %v2137, 6
        %v2146 = vsel %vm503, %v2145, %v2144
        %v2147 = vrot.slane %v2138, 5
        %v2148 = vsel %vm506, %v2147, %v2146
        %v2149 = vsel %vm512, %v2148, 0
        %2151 = vmatprep.subr.mxu0 0.0
        %2152 = vmatpush1.msra.mxu0 %v2149
        %2153 = vmatprep.subr.mxu0 0.0
        %2154 = vmatpush1.msra.mxu0 0.0
        %2155 = vmatprep.subr.mxu0 0.0
        %2156 = vmatpush1.msra.mxu0 0.0
        %2157 = vmatprep.subr.mxu0 0.0
        %2158 = vmatpush1.msra.mxu0 0.0
        %2159 = vmatprep.subr.mxu0 0.0
        %2160 = vmatpush1.msra.mxu0 0.0
        %2161 = vmatprep.subr.mxu0 0.0
        %2162 = vmatpush1.msra.mxu0 0.0
        %2163 = vmatprep.subr.mxu0 0.0
        %2164 = vmatpush1.msra.mxu0 0.0
        %2165 = vmatprep.subr.mxu0 0.0
        %2166 = vmatpush1.msra.mxu0 0.0
        %2167 = vmatprep.subr.mxu0 0.0
        %2168 = vmatpush1.msra.mxu0 0.0
        %2169 = vmatprep.subr.mxu0 0.0
        %2170 = vmatpush1.msra.mxu0 0.0
        %2171 = vmatprep.subr.mxu0 0.0
        %2172 = vmatpush1.msra.mxu0 0.0
        %2173 = vmatprep.subr.mxu0 0.0
        %2174 = vmatpush1.msra.mxu0 0.0
        %2175 = vmatprep.subr.mxu0 0.0
        %2176 = vmatpush1.msra.mxu0 0.0
        %2177 = vmatprep.subr.mxu0 0.0
        %2178 = vmatpush1.msra.mxu0 0.0
        %2179 = vmatprep.subr.mxu0 0.0
        %2180 = vmatpush1.msra.mxu0 0.0
        %2181 = vmatprep.subr.mxu0 0.0
        %2182 = vmatpush1.msra.mxu0 0.0
        %2183 = vmatprep.subr.mxu0 0.0
        %2184 = vmatpush1.msra.mxu0 0.0
        %2185 = vmatprep.subr.mxu0 0.0
        %2186 = vmatpush1.msra.mxu0 0.0
        %2187 = vmatprep.subr.mxu0 0.0
        %2188 = vmatpush1.msra.mxu0 0.0
        %2189 = vmatprep.subr.mxu0 0.0
        %2190 = vmatpush1.msra.mxu0 0.0
        %2191 = vmatprep.subr.mxu0 0.0
        %2192 = vmatpush1.msra.mxu0 0.0
        %2193 = vmatprep.subr.mxu0 0.0
        %2194 = vmatpush1.msra.mxu0 0.0
        %2195 = vmatprep.subr.mxu0 0.0
        %2196 = vmatpush1.msra.mxu0 0.0
        %2197 = vmatprep.subr.mxu0 0.0
        %2198 = vmatpush1.msra.mxu0 0.0
        %2199 = vmatprep.subr.mxu0 0.0
        %2200 = vmatpush1.msra.mxu0 0.0
        %2201 = vmatprep.subr.mxu0 0.0
        %2202 = vmatpush1.msra.mxu0 0.0
        %2203 = vmatprep.subr.mxu0 0.0
        %2204 = vmatpush1.msra.mxu0 0.0
        %2205 = vmatprep.subr.mxu0 0.0
        %2206 = vmatpush1.msra.mxu0 0.0
        %2207 = vmatprep.subr.mxu0 0.0
        %2208 = vmatpush1.msra.mxu0 0.0
        %2209 = vmatprep.subr.mxu0 0.0
        %2210 = vmatpush1.msra.mxu0 0.0
        %2211 = vmatprep.subr.mxu0 0.0
        %2212 = vmatpush1.msra.mxu0 0.0
        %2213 = vmatprep.subr.mxu0 0.0
        %2214 = vmatpush1.msra.mxu0 0.0
        %2215 = vmatprep.mubr.f32.mxu0 0.0
        %2216 = vmatmul.mubr.f32.gmra.mrb[0].mxu0 %v908
        %v2217 = vpop.f32.mrb[0].mxu0
        %v2218 = vadd.f32 0.0, %v2217
        %v2219 = vpop.f32.mrb[0].mxu0
        %2220 = vdwg.mxu0
        %v2222 = vsel %vm512, %v2128, 0
        %2224 = vmatprep.subr.mxu0 0.0
        %2225 = vmatpush1.msra.mxu0 %v2222
        %2226 = vmatprep.subr.mxu0 0.0
        %2227 = vmatpush1.msra.mxu0 0.0
        %2228 = vmatprep.subr.mxu0 0.0
        %2229 = vmatpush1.msra.mxu0 0.0
        %2230 = vmatprep.subr.mxu0 0.0
        %2231 = vmatpush1.msra.mxu0 0.0
        %2232 = vmatprep.subr.mxu0 0.0
        %2233 = vmatpush1.msra.mxu0 0.0
        %2234 = vmatprep.subr.mxu0 0.0
        %2235 = vmatpush1.msra.mxu0 0.0
        %2236 = vmatprep.subr.mxu0 0.0
        %2237 = vmatpush1.msra.mxu0 0.0
        %2238 = vmatprep.subr.mxu0 0.0
        %2239 = vmatpush1.msra.mxu0 0.0
        %2240 = vmatprep.subr.mxu0 0.0
        %2241 = vmatpush1.msra.mxu0 0.0
        %2242 = vmatprep.subr.mxu0 0.0
        %2243 = vmatpush1.msra.mxu0 0.0
        %2244 = vmatprep.subr.mxu0 0.0
        %2245 = vmatpush1.msra.mxu0 0.0
        %2246 = vmatprep.subr.mxu0 0.0
        %2247 = vmatpush1.msra.mxu0 0.0
        %2248 = vmatprep.subr.mxu0 0.0
        %2249 = vmatpush1.msra.mxu0 0.0
        %2250 = vmatprep.subr.mxu0 0.0
        %2251 = vmatpush1.msra.mxu0 0.0
        %2252 = vmatprep.subr.mxu0 0.0
        %2253 = vmatpush1.msra.mxu0 0.0
        %2254 = vmatprep.subr.mxu0 0.0
        %2255 = vmatpush1.msra.mxu0 0.0
        %2256 = vmatprep.subr.mxu0 0.0
        %2257 = vmatpush1.msra.mxu0 0.0
        %2258 = vmatprep.subr.mxu0 0.0
        %2259 = vmatpush1.msra.mxu0 0.0
        %2260 = vmatprep.subr.mxu0 0.0
        %2261 = vmatpush1.msra.mxu0 0.0
        %2262 = vmatprep.subr.mxu0 0.0
        %2263 = vmatpush1.msra.mxu0 0.0
        %2264 = vmatprep.subr.mxu0 0.0
        %2265 = vmatpush1.msra.mxu0 0.0
        %2266 = vmatprep.subr.mxu0 0.0
        %2267 = vmatpush1.msra.mxu0 0.0
        %2268 = vmatprep.subr.mxu0 0.0
        %2269 = vmatpush1.msra.mxu0 0.0
        %2270 = vmatprep.subr.mxu0 0.0
        %2271 = vmatpush1.msra.mxu0 0.0
        %2272 = vmatprep.subr.mxu0 0.0
        %2273 = vmatpush1.msra.mxu0 0.0
        %2274 = vmatprep.subr.mxu0 0.0
        %2275 = vmatpush1.msra.mxu0 0.0
        %2276 = vmatprep.subr.mxu0 0.0
        %2277 = vmatpush1.msra.mxu0 0.0
        %2278 = vmatprep.subr.mxu0 0.0
        %2279 = vmatpush1.msra.mxu0 0.0
        %2280 = vmatprep.subr.mxu0 0.0
        %2281 = vmatpush1.msra.mxu0 0.0
        %2282 = vmatprep.subr.mxu0 0.0
        %2283 = vmatpush1.msra.mxu0 0.0
        %2284 = vmatprep.subr.mxu0 0.0
        %2285 = vmatpush1.msra.mxu0 0.0
        %2286 = vmatprep.subr.mxu0 0.0
        %2287 = vmatpush1.msra.mxu0 0.0
        %2288 = vmatprep.mubr.f32.mxu0 0.0
        %2289 = vmatmul.mubr.f32.gmra.mrb[0].mxu0 %v983
        %v2290 = vpop.f32.mrb[0].mxu0
        %v2291 = vadd.f32 %v2218, %v2290
        %v2292 = vpop.f32.mrb[0].mxu0
        %2293 = vdwg.mxu0
        %v2294 = vadd.f32 %v2291, %v1061
        %v2296 = vcombine.high %v2294, %v2294
        %v2298 = vunpack.c.l.s4 1966171168
        %v2299 = vunpack.c.0.s8 %v2298
        %v2300 = vlaneseq
        %v2301 = vshrl.u32 %v2300, 7
        %v2302 = vsub.s32 %v2299, %v2301
        %v2303 = vrot.slane %v2294, %v2302
        %v2305 = vunpack.c.l.s4 1966171168
        %v2306 = vunpack.c.0.s8 %v2305
        %v2307 = vlaneseq
        %v2308 = vshrl.u32 %v2307, 7
        %v2309 = vsub.s32 %v2306, %v2308
        %v2310 = vrot.slane %v2296, %v2309
        %v2311 = vcombine.high %v2303, %v2303
        %v2312 = vcombine.high %v2310, %v2310
        %v2314 = vunpack.c.l.s4 1966171168
        %v2315 = vunpack.c.0.s8 %v2314
        %v2316 = vlaneseq
        %v2317 = vshrl.u32 %v2316, 7
        %v2318 = vsub.s32 %v2315, %v2317
        %v2319 = vrot.slane %v2303, %v2318
        %v2321 = vunpack.c.l.s4 1966171168
        %v2322 = vunpack.c.0.s8 %v2321
        %v2323 = vlaneseq
        %v2324 = vshrl.u32 %v2323, 7
        %v2325 = vsub.s32 %v2322, %v2324
        %v2326 = vrot.slane %v2310, %v2325
        %v2328 = vunpack.c.l.s4 1966171168
        %v2329 = vunpack.c.0.s8 %v2328
        %v2330 = vlaneseq
        %v2331 = vshrl.u32 %v2330, 7
        %v2332 = vsub.s32 %v2329, %v2331
        %v2333 = vrot.slane %v2311, %v2332
        %v2335 = vunpack.c.l.s4 1966171168
        %v2336 = vunpack.c.0.s8 %v2335
        %v2337 = vlaneseq
        %v2338 = vshrl.u32 %v2337, 7
        %v2339 = vsub.s32 %v2336, %v2338
        %v2340 = vrot.slane %v2312, %v2339
        %v2341 = vcombine.high %v2319, %v2319
        %v2342 = vcombine.high %v2326, %v2326
        %v2343 = vcombine.high %v2333, %v2333
        %v2344 = vcombine.high %v2340, %v2340
        %2353 = vst.msk [vmem:[%s469 + $0x2] sm:$0x1] %vm1122, %v2319
        %2354 = vst.msk [vmem:[%s469 + $0x6] sm:$0x1] %vm1122, %v2333
        %2355 = vst.msk [vmem:[%s469 + $0xa] sm:$0x1] %vm1122, %v2341
        %2356 = vst.msk [vmem:[%s469 + $0xe] sm:$0x1] %vm1122, %v2343
        %2357 = vst.msk [vmem:[%s469 + $0x12] sm:$0x1] %vm1122, %v2326
        %2358 = vst.msk [vmem:[%s469 + $0x16] sm:$0x1] %vm1122, %v2340
        %2359 = vst.msk [vmem:[%s469 + $0x1a] sm:$0x1] %vm1122, %v2342
        %2360 = vst.msk [vmem:[%s469 + $0x1e] sm:$0x1] %vm1122, %v2344
        %v2361 = vld [vmem:[%s477 + $0x3] sm:$0x1]
        %v2362 = vld [vmem:[%s477 + $0x7] sm:$0x1]
        %v2363 = vld [vmem:[%s477 + $0xb] sm:$0x1]
        %v2364 = vld [vmem:[%s477 + $0xf] sm:$0x1]
        %v2365 = vmax.f32 %v2361, 0.0
        %v2366 = vmax.f32 %v2362, 0.0
        %v2367 = vmax.f32 %v2363, 0.0
        %v2368 = vmax.f32 %v2364, 0.0
        %v2373 = vrot.slane %v2366, 7
        %v2374 = vsel %vm500, %v2373, %v2365
        %v2375 = vrot.slane %v2367, 6
        %v2376 = vsel %vm503, %v2375, %v2374
        %v2377 = vrot.slane %v2368, 5
        %v2378 = vsel %vm506, %v2377, %v2376
        %v2379 = vsel %vm512, %v2378, 0
        %2381 = vmatprep.subr.mxu0 0.0
        %2382 = vmatpush1.msra.mxu0 %v2379
        %2383 = vmatprep.subr.mxu0 0.0
        %2384 = vmatpush1.msra.mxu0 0.0
        %2385 = vmatprep.subr.mxu0 0.0
        %2386 = vmatpush1.msra.mxu0 0.0
        %2387 = vmatprep.subr.mxu0 0.0
        %2388 = vmatpush1.msra.mxu0 0.0
        %2389 = vmatprep.subr.mxu0 0.0
        %2390 = vmatpush1.msra.mxu0 0.0
        %2391 = vmatprep.subr.mxu0 0.0
        %2392 = vmatpush1.msra.mxu0 0.0
        %2393 = vmatprep.subr.mxu0 0.0
        %2394 = vmatpush1.msra.mxu0 0.0
        %2395 = vmatprep.subr.mxu0 0.0
        %2396 = vmatpush1.msra.mxu0 0.0
        %2397 = vmatprep.subr.mxu0 0.0
        %2398 = vmatpush1.msra.mxu0 0.0
        %2399 = vmatprep.subr.mxu0 0.0
        %2400 = vmatpush1.msra.mxu0 0.0
        %2401 = vmatprep.subr.mxu0 0.0
        %2402 = vmatpush1.msra.mxu0 0.0
        %2403 = vmatprep.subr.mxu0 0.0
        %2404 = vmatpush1.msra.mxu0 0.0
        %2405 = vmatprep.subr.mxu0 0.0
        %2406 = vmatpush1.msra.mxu0 0.0
        %2407 = vmatprep.subr.mxu0 0.0
        %2408 = vmatpush1.msra.mxu0 0.0
        %2409 = vmatprep.subr.mxu0 0.0
        %2410 = vmatpush1.msra.mxu0 0.0
        %2411 = vmatprep.subr.mxu0 0.0
        %2412 = vmatpush1.msra.mxu0 0.0
        %2413 = vmatprep.subr.mxu0 0.0
        %2414 = vmatpush1.msra.mxu0 0.0
        %2415 = vmatprep.subr.mxu0 0.0
        %2416 = vmatpush1.msra.mxu0 0.0
        %2417 = vmatprep.subr.mxu0 0.0
        %2418 = vmatpush1.msra.mxu0 0.0
        %2419 = vmatprep.subr.mxu0 0.0
        %2420 = vmatpush1.msra.mxu0 0.0
        %2421 = vmatprep.subr.mxu0 0.0
        %2422 = vmatpush1.msra.mxu0 0.0
        %2423 = vmatprep.subr.mxu0 0.0
        %2424 = vmatpush1.msra.mxu0 0.0
        %2425 = vmatprep.subr.mxu0 0.0
        %2426 = vmatpush1.msra.mxu0 0.0
        %2427 = vmatprep.subr.mxu0 0.0
        %2428 = vmatpush1.msra.mxu0 0.0
        %2429 = vmatprep.subr.mxu0 0.0
        %2430 = vmatpush1.msra.mxu0 0.0
        %2431 = vmatprep.subr.mxu0 0.0
        %2432 = vmatpush1.msra.mxu0 0.0
        %2433 = vmatprep.subr.mxu0 0.0
        %2434 = vmatpush1.msra.mxu0 0.0
        %2435 = vmatprep.subr.mxu0 0.0
        %2436 = vmatpush1.msra.mxu0 0.0
        %2437 = vmatprep.subr.mxu0 0.0
        %2438 = vmatpush1.msra.mxu0 0.0
        %2439 = vmatprep.subr.mxu0 0.0
        %2440 = vmatpush1.msra.mxu0 0.0
        %2441 = vmatprep.subr.mxu0 0.0
        %2442 = vmatpush1.msra.mxu0 0.0
        %2443 = vmatprep.subr.mxu0 0.0
        %2444 = vmatpush1.msra.mxu0 0.0
        %2445 = vmatprep.mubr.f32.mxu0 0.0
        %2446 = vmatmul.mubr.f32.gmra.mrb[0].mxu0 %v510
        %v2447 = vpop.f32.mrb[0].mxu0
        %v2448 = vadd.f32 0.0, %v2447
        %v2449 = vpop.f32.mrb[0].mxu0
        %2450 = vdwg.mxu0
        %2451 = vmatprep.subr.mxu0 0.0
        %2452 = vmatpush1.msra.mxu0 %v2379
        %2453 = vmatprep.subr.mxu0 0.0
        %2454 = vmatpush1.msra.mxu0 0.0
        %2455 = vmatprep.subr.mxu0 0.0
        %2456 = vmatpush1.msra.mxu0 0.0
        %2457 = vmatprep.subr.mxu0 0.0
        %2458 = vmatpush1.msra.mxu0 0.0
        %2459 = vmatprep.subr.mxu0 0.0
        %2460 = vmatpush1.msra.mxu0 0.0
        %2461 = vmatprep.subr.mxu0 0.0
        %2462 = vmatpush1.msra.mxu0 0.0
        %2463 = vmatprep.subr.mxu0 0.0
        %2464 = vmatpush1.msra.mxu0 0.0
        %2465 = vmatprep.subr.mxu0 0.0
        %2466 = vmatpush1.msra.mxu0 0.0
        %2467 = vmatprep.subr.mxu0 0.0
        %2468 = vmatpush1.msra.mxu0 0.0
        %2469 = vmatprep.subr.mxu0 0.0
        %2470 = vmatpush1.msra.mxu0 0.0
        %2471 = vmatprep.subr.mxu0 0.0
        %2472 = vmatpush1.msra.mxu0 0.0
        %2473 = vmatprep.subr.mxu0 0.0
        %2474 = vmatpush1.msra.mxu0 0.0
        %2475 = vmatprep.subr.mxu0 0.0
        %2476 = vmatpush1.msra.mxu0 0.0
        %2477 = vmatprep.subr.mxu0 0.0
        %2478 = vmatpush1.msra.mxu0 0.0
        %2479 = vmatprep.subr.mxu0 0.0
        %2480 = vmatpush1.msra.mxu0 0.0
        %2481 = vmatprep.subr.mxu0 0.0
        %2482 = vmatpush1.msra.mxu0 0.0
        %2483 = vmatprep.subr.mxu0 0.0
        %2484 = vmatpush1.msra.mxu0 0.0
        %2485 = vmatprep.subr.mxu0 0.0
        %2486 = vmatpush1.msra.mxu0 0.0
        %2487 = vmatprep.subr.mxu0 0.0
        %2488 = vmatpush1.msra.mxu0 0.0
        %2489 = vmatprep.subr.mxu0 0.0
        %2490 = vmatpush1.msra.mxu0 0.0
        %2491 = vmatprep.subr.mxu0 0.0
        %2492 = vmatpush1.msra.mxu0 0.0
        %2493 = vmatprep.subr.mxu0 0.0
        %2494 = vmatpush1.msra.mxu0 0.0
        %2495 = vmatprep.subr.mxu0 0.0
        %2496 = vmatpush1.msra.mxu0 0.0
        %2497 = vmatprep.subr.mxu0 0.0
        %2498 = vmatpush1.msra.mxu0 0.0
        %2499 = vmatprep.subr.mxu0 0.0
        %2500 = vmatpush1.msra.mxu0 0.0
        %2501 = vmatprep.subr.mxu0 0.0
        %2502 = vmatpush1.msra.mxu0 0.0
        %2503 = vmatprep.subr.mxu0 0.0
        %2504 = vmatpush1.msra.mxu0 0.0
        %2505 = vmatprep.subr.mxu0 0.0
        %2506 = vmatpush1.msra.mxu0 0.0
        %2507 = vmatprep.subr.mxu0 0.0
        %2508 = vmatpush1.msra.mxu0 0.0
        %2509 = vmatprep.subr.mxu0 0.0
        %2510 = vmatpush1.msra.mxu0 0.0
        %2511 = vmatprep.subr.mxu0 0.0
        %2512 = vmatpush1.msra.mxu0 0.0
        %2513 = vmatprep.subr.mxu0 0.0
        %2514 = vmatpush1.msra.mxu0 0.0
        %2515 = vmatprep.mubr.f32.mxu0 0.0
        %2516 = vmatmul.mubr.f32.gmra.mrb[0].mxu0 %v586
        %v2517 = vpop.f32.mrb[0].mxu0
        %v2518 = vadd.f32 0.0, %v2517
        %v2519 = vpop.f32.mrb[0].mxu0
        %2520 = vdwg.mxu0
        %v2521 = vadd.f32 %v2448, %v2518
        %v2522 = vadd.f32 %v2521, %v662
        %v2524 = vsel %vm665, %v2518, 0
        %2526 = vmatprep.subr.mxu0 0.0
        %2527 = vmatpush1.msra.mxu0 %v484
        %2528 = vmatprep.subr.mxu0 0.0
        %2529 = vmatpush1.msra.mxu0 0.0
        %2530 = vmatprep.subr.mxu0 0.0
        %2531 = vmatpush1.msra.mxu0 0.0
        %2532 = vmatprep.subr.mxu0 0.0
        %2533 = vmatpush1.msra.mxu0 0.0
        %2534 = vmatprep.subr.mxu0 0.0
        %2535 = vmatpush1.msra.mxu0 0.0
        %2536 = vmatprep.subr.mxu0 0.0
        %2537 = vmatpush1.msra.mxu0 0.0
        %2538 = vmatprep.subr.mxu0 0.0
        %2539 = vmatpush1.msra.mxu0 0.0
        %2540 = vmatprep.subr.mxu0 0.0
        %2541 = vmatpush1.msra.mxu0 0.0
        %2542 = vmatprep.subr.mxu0 0.0
        %2543 = vmatpush1.msra.mxu0 0.0
        %2544 = vmatprep.subr.mxu0 0.0
        %2545 = vmatpush1.msra.mxu0 0.0
        %2546 = vmatprep.subr.mxu0 0.0
        %2547 = vmatpush1.msra.mxu0 0.0
        %2548 = vmatprep.subr.mxu0 0.0
        %2549 = vmatpush1.msra.mxu0 0.0
        %2550 = vmatprep.subr.mxu0 0.0
        %2551 = vmatpush1.msra.mxu0 0.0
        %2552 = vmatprep.subr.mxu0 0.0
        %2553 = vmatpush1.msra.mxu0 0.0
        %2554 = vmatprep.subr.mxu0 0.0
        %2555 = vmatpush1.msra.mxu0 0.0
        %2556 = vmatprep.subr.mxu0 0.0
        %2557 = vmatpush1.msra.mxu0 0.0
        %2558 = vmatprep.subr.mxu0 0.0
        %2559 = vmatpush1.msra.mxu0 0.0
        %2560 = vmatprep.subr.mxu0 0.0
        %2561 = vmatpush1.msra.mxu0 0.0
        %2562 = vmatprep.subr.mxu0 0.0
        %2563 = vmatpush1.msra.mxu0 0.0
        %2564 = vmatprep.subr.mxu0 0.0
        %2565 = vmatpush1.msra.mxu0 0.0
        %2566 = vmatprep.subr.mxu0 0.0
        %2567 = vmatpush1.msra.mxu0 0.0
        %2568 = vmatprep.subr.mxu0 0.0
        %2569 = vmatpush1.msra.mxu0 0.0
        %2570 = vmatprep.subr.mxu0 0.0
        %2571 = vmatpush1.msra.mxu0 0.0
        %2572 = vmatprep.subr.mxu0 0.0
        %2573 = vmatpush1.msra.mxu0 0.0
        %2574 = vmatprep.subr.mxu0 0.0
        %2575 = vmatpush1.msra.mxu0 0.0
        %2576 = vmatprep.subr.mxu0 0.0
        %2577 = vmatpush1.msra.mxu0 0.0
        %2578 = vmatprep.subr.mxu0 0.0
        %2579 = vmatpush1.msra.mxu0 0.0
        %2580 = vmatprep.subr.mxu0 0.0
        %2581 = vmatpush1.msra.mxu0 0.0
        %2582 = vmatprep.subr.mxu0 0.0
        %2583 = vmatpush1.msra.mxu0 0.0
        %2584 = vmatprep.subr.mxu0 0.0
        %2585 = vmatpush1.msra.mxu0 0.0
        %2586 = vmatprep.subr.mxu0 0.0
        %2587 = vmatpush1.msra.mxu0 0.0
        %2588 = vmatprep.subr.mxu0 0.0
        %2589 = vmatpush1.msra.mxu0 0.0
        %2590 = vmatprep.mubr.f32.mxu0 0.0
        %2591 = vmatmul.mubr.f32.gmra.mrb[0].mxu0 %v2524
        %v2592 = vpop.f32.mrb[0].mxu0
        %v2593 = vadd.f32 0.0, %v2592
        %v2594 = vpop.f32.mrb[0].mxu0
        %2595 = vdwg.mxu0
        %v2596 = vadd.f32 %v2448, %v2593
        %v2597 = vadd.f32 %v2596, %v662
        %v2598 = vmax.f32 %v2522, 0.0
        %v2599 = vmax.f32 %v2597, 0.0
        %v2601 = vsel %vm665, %v2599, 0
        %2603 = vmatprep.subr.mxu0 0.0
        %2604 = vmatpush1.msra.mxu0 %v486
        %2605 = vmatprep.subr.mxu0 0.0
        %2606 = vmatpush1.msra.mxu0 0.0
        %2607 = vmatprep.subr.mxu0 0.0
        %2608 = vmatpush1.msra.mxu0 0.0
        %2609 = vmatprep.subr.mxu0 0.0
        %2610 = vmatpush1.msra.mxu0 0.0
        %2611 = vmatprep.subr.mxu0 0.0
        %2612 = vmatpush1.msra.mxu0 0.0
        %2613 = vmatprep.subr.mxu0 0.0
        %2614 = vmatpush1.msra.mxu0 0.0
        %2615 = vmatprep.subr.mxu0 0.0
        %2616 = vmatpush1.msra.mxu0 0.0
        %2617 = vmatprep.subr.mxu0 0.0
        %2618 = vmatpush1.msra.mxu0 0.0
        %2619 = vmatprep.subr.mxu0 0.0
        %2620 = vmatpush1.msra.mxu0 0.0
        %2621 = vmatprep.subr.mxu0 0.0
        %2622 = vmatpush1.msra.mxu0 0.0
        %2623 = vmatprep.subr.mxu0 0.0
        %2624 = vmatpush1.msra.mxu0 0.0
        %2625 = vmatprep.subr.mxu0 0.0
        %2626 = vmatpush1.msra.mxu0 0.0
        %2627 = vmatprep.subr.mxu0 0.0
        %2628 = vmatpush1.msra.mxu0 0.0
        %2629 = vmatprep.subr.mxu0 0.0
        %2630 = vmatpush1.msra.mxu0 0.0
        %2631 = vmatprep.subr.mxu0 0.0
        %2632 = vmatpush1.msra.mxu0 0.0
        %2633 = vmatprep.subr.mxu0 0.0
        %2634 = vmatpush1.msra.mxu0 0.0
        %2635 = vmatprep.subr.mxu0 0.0
        %2636 = vmatpush1.msra.mxu0 0.0
        %2637 = vmatprep.subr.mxu0 0.0
        %2638 = vmatpush1.msra.mxu0 0.0
        %2639 = vmatprep.subr.mxu0 0.0
        %2640 = vmatpush1.msra.mxu0 0.0
        %2641 = vmatprep.subr.mxu0 0.0
        %2642 = vmatpush1.msra.mxu0 0.0
        %2643 = vmatprep.subr.mxu0 0.0
        %2644 = vmatpush1.msra.mxu0 0.0
        %2645 = vmatprep.subr.mxu0 0.0
        %2646 = vmatpush1.msra.mxu0 0.0
        %2647 = vmatprep.subr.mxu0 0.0
        %2648 = vmatpush1.msra.mxu0 0.0
        %2649 = vmatprep.subr.mxu0 0.0
        %2650 = vmatpush1.msra.mxu0 0.0
        %2651 = vmatprep.subr.mxu0 0.0
        %2652 = vmatpush1.msra.mxu0 0.0
        %2653 = vmatprep.subr.mxu0 0.0
        %2654 = vmatpush1.msra.mxu0 0.0
        %2655 = vmatprep.subr.mxu0 0.0
        %2656 = vmatpush1.msra.mxu0 0.0
        %2657 = vmatprep.subr.mxu0 0.0
        %2658 = vmatpush1.msra.mxu0 0.0
        %2659 = vmatprep.subr.mxu0 0.0
        %2660 = vmatpush1.msra.mxu0 0.0
        %2661 = vmatprep.subr.mxu0 0.0
        %2662 = vmatpush1.msra.mxu0 0.0
        %2663 = vmatprep.subr.mxu0 0.0
        %2664 = vmatpush1.msra.mxu0 0.0
        %2665 = vmatprep.subr.mxu0 0.0
        %2666 = vmatpush1.msra.mxu0 0.0
        %2667 = vmatprep.mubr.f32.mxu0 0.0
        %2668 = vmatmul.mubr.f32.gmra.mrb[0].mxu0 %v2601
        %v2669 = vpop.f32.mrb[0].mxu0
        %v2670 = vadd.f32 0.0, %v2669
        %v2671 = vpop.f32.mrb[0].mxu0
        %2672 = vdwg.mxu0
        %v2674 = vsel %vm665, %v2598, 0
        %2676 = vmatprep.subr.mxu0 0.0
        %2677 = vmatpush1.msra.mxu0 %v485
        %2678 = vmatprep.subr.mxu0 0.0
        %2679 = vmatpush1.msra.mxu0 0.0
        %2680 = vmatprep.subr.mxu0 0.0
        %2681 = vmatpush1.msra.mxu0 0.0
        %2682 = vmatprep.subr.mxu0 0.0
        %2683 = vmatpush1.msra.mxu0 0.0
        %2684 = vmatprep.subr.mxu0 0.0
        %2685 = vmatpush1.msra.mxu0 0.0
        %2686 = vmatprep.subr.mxu0 0.0
        %2687 = vmatpush1.msra.mxu0 0.0
        %2688 = vmatprep.subr.mxu0 0.0
        %2689 = vmatpush1.msra.mxu0 0.0
        %2690 = vmatprep.subr.mxu0 0.0
        %2691 = vmatpush1.msra.mxu0 0.0
        %2692 = vmatprep.subr.mxu0 0.0
        %2693 = vmatpush1.msra.mxu0 0.0
        %2694 = vmatprep.subr.mxu0 0.0
        %2695 = vmatpush1.msra.mxu0 0.0
        %2696 = vmatprep.subr.mxu0 0.0
        %2697 = vmatpush1.msra.mxu0 0.0
        %2698 = vmatprep.subr.mxu0 0.0
        %2699 = vmatpush1.msra.mxu0 0.0
        %2700 = vmatprep.subr.mxu0 0.0
        %2701 = vmatpush1.msra.mxu0 0.0
        %2702 = vmatprep.subr.mxu0 0.0
        %2703 = vmatpush1.msra.mxu0 0.0
        %2704 = vmatprep.subr.mxu0 0.0
        %2705 = vmatpush1.msra.mxu0 0.0
        %2706 = vmatprep.subr.mxu0 0.0
        %2707 = vmatpush1.msra.mxu0 0.0
        %2708 = vmatprep.subr.mxu0 0.0
        %2709 = vmatpush1.msra.mxu0 0.0
        %2710 = vmatprep.subr.mxu0 0.0
        %2711 = vmatpush1.msra.mxu0 0.0
        %2712 = vmatprep.subr.mxu0 0.0
        %2713 = vmatpush1.msra.mxu0 0.0
        %2714 = vmatprep.subr.mxu0 0.0
        %2715 = vmatpush1.msra.mxu0 0.0
        %2716 = vmatprep.subr.mxu0 0.0
        %2717 = vmatpush1.msra.mxu0 0.0
        %2718 = vmatprep.subr.mxu0 0.0
        %2719 = vmatpush1.msra.mxu0 0.0
        %2720 = vmatprep.subr.mxu0 0.0
        %2721 = vmatpush1.msra.mxu0 0.0
        %2722 = vmatprep.subr.mxu0 0.0
        %2723 = vmatpush1.msra.mxu0 0.0
        %2724 = vmatprep.subr.mxu0 0.0
        %2725 = vmatpush1.msra.mxu0 0.0
        %2726 = vmatprep.subr.mxu0 0.0
        %2727 = vmatpush1.msra.mxu0 0.0
        %2728 = vmatprep.subr.mxu0 0.0
        %2729 = vmatpush1.msra.mxu0 0.0
        %2730 = vmatprep.subr.mxu0 0.0
        %2731 = vmatpush1.msra.mxu0 0.0
        %2732 = vmatprep.subr.mxu0 0.0
        %2733 = vmatpush1.msra.mxu0 0.0
        %2734 = vmatprep.subr.mxu0 0.0
        %2735 = vmatpush1.msra.mxu0 0.0
        %2736 = vmatprep.subr.mxu0 0.0
        %2737 = vmatpush1.msra.mxu0 0.0
        %2738 = vmatprep.subr.mxu0 0.0
        %2739 = vmatpush1.msra.mxu0 0.0
        %2740 = vmatprep.mubr.f32.mxu0 0.0
        %2741 = vmatmul.mubr.f32.gmra.mrb[0].mxu0 %v2674
        %v2742 = vpop.f32.mrb[0].mxu0
        %v2743 = vadd.f32 %v2670, %v2742
        %v2744 = vpop.f32.mrb[0].mxu0
        %2745 = vdwg.mxu0
        %v2746 = vld [vmem:[%s415 + $0x3] sm:$0x1]
        %v2747 = vld [vmem:[%s415 + $0x7] sm:$0x1]
        %v2748 = vld [vmem:[%s415 + $0xb] sm:$0x1]
        %v2749 = vld [vmem:[%s415 + $0xf] sm:$0x1]
        %v2750 = vmax.f32 %v2746, 0.0
        %v2751 = vmax.f32 %v2747, 0.0
        %v2752 = vmax.f32 %v2748, 0.0
        %v2753 = vmax.f32 %v2749, 0.0
        %v2758 = vrot.slane %v2751, 7
        %v2759 = vsel %vm500, %v2758, %v2750
        %v2760 = vrot.slane %v2752, 6
        %v2761 = vsel %vm503, %v2760, %v2759
        %v2762 = vrot.slane %v2753, 5
        %v2763 = vsel %vm506, %v2762, %v2761
        %v2764 = vsel %vm512, %v2763, 0
        %2766 = vmatprep.subr.mxu0 0.0
        %2767 = vmatpush1.msra.mxu0 %v2764
        %2768 = vmatprep.subr.mxu0 0.0
        %2769 = vmatpush1.msra.mxu0 0.0
        %2770 = vmatprep.subr.mxu0 0.0
        %2771 = vmatpush1.msra.mxu0 0.0
        %2772 = vmatprep.subr.mxu0 0.0
        %2773 = vmatpush1.msra.mxu0 0.0
        %2774 = vmatprep.subr.mxu0 0.0
        %2775 = vmatpush1.msra.mxu0 0.0
        %2776 = vmatprep.subr.mxu0 0.0
        %2777 = vmatpush1.msra.mxu0 0.0
        %2778 = vmatprep.subr.mxu0 0.0
        %2779 = vmatpush1.msra.mxu0 0.0
        %2780 = vmatprep.subr.mxu0 0.0
        %2781 = vmatpush1.msra.mxu0 0.0
        %2782 = vmatprep.subr.mxu0 0.0
        %2783 = vmatpush1.msra.mxu0 0.0
        %2784 = vmatprep.subr.mxu0 0.0
        %2785 = vmatpush1.msra.mxu0 0.0
        %2786 = vmatprep.subr.mxu0 0.0
        %2787 = vmatpush1.msra.mxu0 0.0
        %2788 = vmatprep.subr.mxu0 0.0
        %2789 = vmatpush1.msra.mxu0 0.0
        %2790 = vmatprep.subr.mxu0 0.0
        %2791 = vmatpush1.msra.mxu0 0.0
        %2792 = vmatprep.subr.mxu0 0.0
        %2793 = vmatpush1.msra.mxu0 0.0
        %2794 = vmatprep.subr.mxu0 0.0
        %2795 = vmatpush1.msra.mxu0 0.0
        %2796 = vmatprep.subr.mxu0 0.0
        %2797 = vmatpush1.msra.mxu0 0.0
        %2798 = vmatprep.subr.mxu0 0.0
        %2799 = vmatpush1.msra.mxu0 0.0
        %2800 = vmatprep.subr.mxu0 0.0
        %2801 = vmatpush1.msra.mxu0 0.0
        %2802 = vmatprep.subr.mxu0 0.0
        %2803 = vmatpush1.msra.mxu0 0.0
        %2804 = vmatprep.subr.mxu0 0.0
        %2805 = vmatpush1.msra.mxu0 0.0
        %2806 = vmatprep.subr.mxu0 0.0
        %2807 = vmatpush1.msra.mxu0 0.0
        %2808 = vmatprep.subr.mxu0 0.0
        %2809 = vmatpush1.msra.mxu0 0.0
        %2810 = vmatprep.subr.mxu0 0.0
        %2811 = vmatpush1.msra.mxu0 0.0
        %2812 = vmatprep.subr.mxu0 0.0
        %2813 = vmatpush1.msra.mxu0 0.0
        %2814 = vmatprep.subr.mxu0 0.0
        %2815 = vmatpush1.msra.mxu0 0.0
        %2816 = vmatprep.subr.mxu0 0.0
        %2817 = vmatpush1.msra.mxu0 0.0
        %2818 = vmatprep.subr.mxu0 0.0
        %2819 = vmatpush1.msra.mxu0 0.0
        %2820 = vmatprep.subr.mxu0 0.0
        %2821 = vmatpush1.msra.mxu0 0.0
        %2822 = vmatprep.subr.mxu0 0.0
        %2823 = vmatpush1.msra.mxu0 0.0
        %2824 = vmatprep.subr.mxu0 0.0
        %2825 = vmatpush1.msra.mxu0 0.0
        %2826 = vmatprep.subr.mxu0 0.0
        %2827 = vmatpush1.msra.mxu0 0.0
        %2828 = vmatprep.subr.mxu0 0.0
        %2829 = vmatpush1.msra.mxu0 0.0
        %2830 = vmatprep.mubr.f32.mxu0 0.0
        %2831 = vmatmul.mubr.f32.gmra.mrb[0].mxu0 %v908
        %v2832 = vpop.f32.mrb[0].mxu0
        %v2833 = vadd.f32 0.0, %v2832
        %v2834 = vpop.f32.mrb[0].mxu0
        %2835 = vdwg.mxu0
        %v2837 = vsel %vm512, %v2743, 0
        %2839 = vmatprep.subr.mxu0 0.0
        %2840 = vmatpush1.msra.mxu0 %v2837
        %2841 = vmatprep.subr.mxu0 0.0
        %2842 = vmatpush1.msra.mxu0 0.0
        %2843 = vmatprep.subr.mxu0 0.0
        %2844 = vmatpush1.msra.mxu0 0.0
        %2845 = vmatprep.subr.mxu0 0.0
        %2846 = vmatpush1.msra.mxu0 0.0
        %2847 = vmatprep.subr.mxu0 0.0
        %2848 = vmatpush1.msra.mxu0 0.0
        %2849 = vmatprep.subr.mxu0 0.0
        %2850 = vmatpush1.msra.mxu0 0.0
        %2851 = vmatprep.subr.mxu0 0.0
        %2852 = vmatpush1.msra.mxu0 0.0
        %2853 = vmatprep.subr.mxu0 0.0
        %2854 = vmatpush1.msra.mxu0 0.0
        %2855 = vmatprep.subr.mxu0 0.0
        %2856 = vmatpush1.msra.mxu0 0.0
        %2857 = vmatprep.subr.mxu0 0.0
        %2858 = vmatpush1.msra.mxu0 0.0
        %2859 = vmatprep.subr.mxu0 0.0
        %2860 = vmatpush1.msra.mxu0 0.0
        %2861 = vmatprep.subr.mxu0 0.0
        %2862 = vmatpush1.msra.mxu0 0.0
        %2863 = vmatprep.subr.mxu0 0.0
        %2864 = vmatpush1.msra.mxu0 0.0
        %2865 = vmatprep.subr.mxu0 0.0
        %2866 = vmatpush1.msra.mxu0 0.0
        %2867 = vmatprep.subr.mxu0 0.0
        %2868 = vmatpush1.msra.mxu0 0.0
        %2869 = vmatprep.subr.mxu0 0.0
        %2870 = vmatpush1.msra.mxu0 0.0
        %2871 = vmatprep.subr.mxu0 0.0
        %2872 = vmatpush1.msra.mxu0 0.0
        %2873 = vmatprep.subr.mxu0 0.0
        %2874 = vmatpush1.msra.mxu0 0.0
        %2875 = vmatprep.subr.mxu0 0.0
        %2876 = vmatpush1.msra.mxu0 0.0
        %2877 = vmatprep.subr.mxu0 0.0
        %2878 = vmatpush1.msra.mxu0 0.0
        %2879 = vmatprep.subr.mxu0 0.0
        %2880 = vmatpush1.msra.mxu0 0.0
        %2881 = vmatprep.subr.mxu0 0.0
        %2882 = vmatpush1.msra.mxu0 0.0
        %2883 = vmatprep.subr.mxu0 0.0
        %2884 = vmatpush1.msra.mxu0 0.0
        %2885 = vmatprep.subr.mxu0 0.0
        %2886 = vmatpush1.msra.mxu0 0.0
        %2887 = vmatprep.subr.mxu0 0.0
        %2888 = vmatpush1.msra.mxu0 0.0
        %2889 = vmatprep.subr.mxu0 0.0
        %2890 = vmatpush1.msra.mxu0 0.0
        %2891 = vmatprep.subr.mxu0 0.0
        %2892 = vmatpush1.msra.mxu0 0.0
        %2893 = vmatprep.subr.mxu0 0.0
        %2894 = vmatpush1.msra.mxu0 0.0
        %2895 = vmatprep.subr.mxu0 0.0
        %2896 = vmatpush1.msra.mxu0 0.0
        %2897 = vmatprep.subr.mxu0 0.0
        %2898 = vmatpush1.msra.mxu0 0.0
        %2899 = vmatprep.subr.mxu0 0.0
        %2900 = vmatpush1.msra.mxu0 0.0
        %2901 = vmatprep.subr.mxu0 0.0
        %2902 = vmatpush1.msra.mxu0 0.0
        %2903 = vmatprep.mubr.f32.mxu0 0.0
        %2904 = vmatmul.mubr.f32.gmra.mrb[0].mxu0 %v983
        %v2905 = vpop.f32.mrb[0].mxu0
        %v2906 = vadd.f32 %v2833, %v2905
        %v2907 = vpop.f32.mrb[0].mxu0
        %2908 = vdwg.mxu0
        %v2909 = vadd.f32 %v2906, %v1061
        %v2911 = vcombine.high %v2909, %v2909
        %v2913 = vunpack.c.l.s4 1966171168
        %v2914 = vunpack.c.0.s8 %v2913
        %v2915 = vlaneseq
        %v2916 = vshrl.u32 %v2915, 7
        %v2917 = vsub.s32 %v2914, %v2916
        %v2918 = vrot.slane %v2909, %v2917
        %v2920 = vunpack.c.l.s4 1966171168
        %v2921 = vunpack.c.0.s8 %v2920
        %v2922 = vlaneseq
        %v2923 = vshrl.u32 %v2922, 7
        %v2924 = vsub.s32 %v2921, %v2923
        %v2925 = vrot.slane %v2911, %v2924
        %v2926 = vcombine.high %v2918, %v2918
        %v2927 = vcombine.high %v2925, %v2925
        %v2929 = vunpack.c.l.s4 1966171168
        %v2930 = vunpack.c.0.s8 %v2929
        %v2931 = vlaneseq
        %v2932 = vshrl.u32 %v2931, 7
        %v2933 = vsub.s32 %v2930, %v2932
        %v2934 = vrot.slane %v2918, %v2933
        %v2936 = vunpack.c.l.s4 1966171168
        %v2937 = vunpack.c.0.s8 %v2936
        %v2938 = vlaneseq
        %v2939 = vshrl.u32 %v2938, 7
        %v2940 = vsub.s32 %v2937, %v2939
        %v2941 = vrot.slane %v2925, %v2940
        %v2943 = vunpack.c.l.s4 1966171168
        %v2944 = vunpack.c.0.s8 %v2943
        %v2945 = vlaneseq
        %v2946 = vshrl.u32 %v2945, 7
        %v2947 = vsub.s32 %v2944, %v2946
        %v2948 = vrot.slane %v2926, %v2947
        %v2950 = vunpack.c.l.s4 1966171168
        %v2951 = vunpack.c.0.s8 %v2950
        %v2952 = vlaneseq
        %v2953 = vshrl.u32 %v2952, 7
        %v2954 = vsub.s32 %v2951, %v2953
        %v2955 = vrot.slane %v2927, %v2954
        %v2956 = vcombine.high %v2934, %v2934
        %v2957 = vcombine.high %v2941, %v2941
        %v2958 = vcombine.high %v2948, %v2948
        %v2959 = vcombine.high %v2955, %v2955
        %2968 = vst.msk [vmem:[%s469 + $0x3] sm:$0x1] %vm1122, %v2934
        %2969 = vst.msk [vmem:[%s469 + $0x7] sm:$0x1] %vm1122, %v2948
        %2970 = vst.msk [vmem:[%s469 + $0xb] sm:$0x1] %vm1122, %v2956
        %2971 = vst.msk [vmem:[%s469 + $0xf] sm:$0x1] %vm1122, %v2958
        %2972 = vst.msk [vmem:[%s469 + $0x13] sm:$0x1] %vm1122, %v2941
        %2973 = vst.msk [vmem:[%s469 + $0x17] sm:$0x1] %vm1122, %v2955
        %2974 = vst.msk [vmem:[%s469 + $0x1b] sm:$0x1] %vm1122, %v2957
        %2975 = vst.msk [vmem:[%s469 + $0x1f] sm:$0x1] %vm1122, %v2959
        %s2976 = sand.u32 %s296, 1
        %s2977 = scalar_lea.sflag [#allocation4], %s2976
        %s2978 = sand.u32 %s296, 1
        %s2979 = smul.addr %s2978, 32
        %s2980 = scalar_lea.vmem [#allocation8], %s2979
        // Predicated region
        $region77: #{tpu_custom_call.1} parent=63 // pred_check
          %p2981 = pneg %p306
        $region78: #{tpu_custom_call.1} parent=63 // pred_check_branch
          %2983 = sbr.rel (%p2981) target = $region80
        $region79: #{tpu_custom_call.1} parent=63 // pred_region
          %s2985 = ssub.s32 512, 512
          %2986 = vsyncadd %s2977, %s2985
          %s2987 = smul.addr %s33, 8
          %s2988 = sadd.s32 %s34, %s2987
          %s2989 = smul.addr %s2988, 64
          %s2990 = scalar_lea.hbm %s11, %s2989
          %s2991 = sshll.u32 %s2980, 4
          %s2992 = int_to_ptr.vmem [resolvable:$true] %s2991
          %2997 = dma.vmem_to_hbm [thread:$0]  %s2992, 512, %s2990, %s2977, 64, 64, 4
        $region80: #{tpu_custom_call.1} parent=63 // pred_fallthru
          _
      $region64: #{tpu_custom_call.1} parent=5 // pred_fallthru
        _
      %p2998 = scmp.le.s32.totalorder 2, %s24
      // Predicated region
      $region81: #{tpu_custom_call.1} parent=5 // pred_check
        %p2999 = pneg %p2998
      $region82: #{tpu_custom_call.1} parent=5 // pred_check_branch
        %3001 = sbr.rel (%p2999) target = $region84
      $region83: #{tpu_custom_call.1} parent=5 // pred_region
        %s3002 = ssub.s32 %s24, 2
        // Predicated region
        $region85: #{tpu_custom_call.1} parent=83 // pred_check
          %p3003 = pneg %p312
        $region86: #{tpu_custom_call.1} parent=83 // pred_check_branch
          %3005 = sbr.rel (%p3003) target = $region88
        $region87: #{tpu_custom_call.1} parent=83 // pred_region
          %s3006 = sand.u32 %s297, 1
          %s3007 = scalar_lea.sflag [#allocation4], %s3006
          %s3008 = sand.u32 %s297, 1
          %s3009 = smul.addr %s3008, 32
          %s3010 = scalar_lea.vmem [#allocation8], %s3009
          %3011 = dma.done %s3007, 512
        $region88: #{tpu_custom_call.1} parent=83 // pred_fallthru
          _
      $region84: #{tpu_custom_call.1} parent=5 // pred_fallthru
        _
    $region6: #{tpu_custom_call.1} parent=1 // loop_footer
      %s28 = sadd.s32 1, %s24
    $region7: #{tpu_custom_call.1} parent=1 // loop_footer_branch
      %23 = sbr.rel target = $region3
    $region8: #{tpu_custom_call.1} parent=1 // loop_exit
      _
    %3012 = vsyncpa [#allocation3], 1
    %s3013 = scalar_lea.sflag [#allocation3], 1
    %3014 = vsyncpa %s3013, 1
    %3015 = vsyncpa [#allocation6], 1
    %3016 = vsyncpa [#allocation4], 1
    %s3017 = scalar_lea.sflag [#allocation4], 1
    %3018 = vsyncpa %s3017, 1

</llo_original>
